<compile_context>
chip_gen: v7x
topology: tpu7x:2x2x1
jax: 0.10.0
libtpu: 0.0.40
codegen_flags: <defaults>
</compile_context>

<pallas_src>
import math

import jax
import jax.numpy as jnp
from jax.experimental import pallas as pl
from jax.experimental.pallas import tpu as pltpu

KERNEL_SIZE = 5
PADDING = KERNEL_SIZE // 2
POOLING_KERNEL_SIZE = 2

C_IN = 1          # input channels per branch
C1 = 8            # out_channels_1 (free choice)
C2 = 32           # out_channels_2 (fixed by view(-1, 32*5*5))
HD = 64           # hd_features   (free choice)
F_OUT = 10        # out_features_b (fixed by fcn_final = Linear(20, 2))

H_IN = 14         # input spatial
HPAD = H_IN + 2 * PADDING   # 18 (padded input for conv1)
H1 = 14           # conv1 output spatial (padding=2)
H2 = 10           # conv2 output spatial (no padding)
HP = 5            # pooled spatial
F_IN = C2 * HP * HP         # 800
PAD_OUT = 128     # lane-dense per-branch output width (first F_OUT cols used)

_VMEM = pl.BlockSpec(memory_space=pltpu.MemorySpace.VMEM)


# --------------------------------------------------------------------------
# Pallas kernels
# --------------------------------------------------------------------------
def branch_kernel(xp_ref, w1_ref, w2_ref, wfc1_ref, wfc2_ref, wfc3_ref,
                  wfc4_ref, bias_ref, out_ref):
    """One Siamese branch: conv1+ReLU, conv2+ReLU, 2x2 maxpool, fc1..fc4.

    In-VMEM layouts (batch folded into the sublane/row axis):
      conv1 act h1: (N*14, 14*8)   row = n*14 + i, col = j*8  + c_out
      conv2 act h2: (N*10, 10*32)  row = n*10 + i, col = j*32 + c_out
      pooled feat : (N, 800)       col = ii*160 + jj*32 + c_out
                                   (fc1 weight rows were permuted to match)
    """
    N = xp_ref.shape[1]

    bias = bias_ref[0]                        # (6, 320) f32, packed biases
    b1t = bias[0:1, :H1 * C1]                 # (1, 112) conv1 bias tiled over j
    b2t = bias[1:2, :H2 * C2]                 # (1, 320) conv2 bias tiled over j
    bf1 = bias[2:3, :HD]
    bf2 = bias[3:4, :HD // 2]
    bf3 = bias[4:5, :HD // 4]
    bf4 = bias[5:6, :PAD_OUT]

    x_all = xp_ref[0].astype(jnp.bfloat16)    # (N, 18, 18)

    # ---- conv1: 5 row-shifted GEMMs, batch folded into the LHS rows ---------
    acc1 = None
    for dr in range(KERNEL_SIZE):
        xs = jnp.concatenate([x_all[n, dr:dr + H1, :] for n in range(N)],
                             axis=0)                       # (N*14, 18) bf16
        c = jnp.dot(xs, w1_ref[0, dr], preferred_element_type=jnp.float32)
        acc1 = c if acc1 is None else acc1 + c
    h1 = jnp.maximum(acc1 + b1t, 0.0).astype(jnp.bfloat16)  # (N*14, 112)

    # ---- conv2: 5 row-shifted GEMMs against the expanded (112, 320) weights -
    acc2 = None
    for dr in range(KERNEL_SIZE):
        hs = jnp.concatenate(
            [h1[n * H1 + dr:n * H1 + dr + H2, :] for n in range(N)],
            axis=0)                                        # (N*10, 112) bf16
        c = jnp.dot(hs, w2_ref[0, dr], preferred_element_type=jnp.float32)
        acc2 = c if acc2 is None else acc2 + c
    h2 = jnp.maximum(acc2 + b2t, 0.0)                       # (N*10, 320) f32

    # ---- fused 2x2 maxpool + NCHW-compatible flatten -------------------------
    rows = []
    for n in range(N):
        base = n * H2
        pieces = []
        for ii in range(HP):
            rmax = jnp.maximum(h2[base + 2 * ii:base + 2 * ii + 1, :],
                               h2[base + 2 * ii + 1:base + 2 * ii + 2, :])
            for jj in range(HP):
                lo = (2 * jj) * C2
                pieces.append(jnp.maximum(rmax[:, lo:lo + C2],
                                          rmax[:, lo + C2:lo + 2 * C2]))
        rows.append(jnp.concatenate(pieces, axis=-1))              # (1, 800)
    feat = jnp.concatenate(rows, axis=0).astype(jnp.bfloat16)      # (N, 800)

    # ---- fused FC chain (all intermediates stay in VMEM/vregs) ---------------
    z = jnp.maximum(
        jnp.dot(feat, wfc1_ref[0], preferred_element_type=jnp.float32) + bf1, 0.0)
    z = jnp.maximum(
        jnp.dot(z.astype(jnp.bfloat16), wfc2_ref[0],
                preferred_element_type=jnp.float32) + bf2, 0.0)
    z = jnp.maximum(
        jnp.dot(z.astype(jnp.bfloat16), wfc3_ref[0],
                preferred_element_type=jnp.float32) + bf3, 0.0)
    z = jnp.dot(z.astype(jnp.bfloat16), wfc4_ref[0],
                preferred_element_type=jnp.float32) + bf4          # (N, 128)

    out_ref[0] = z                                                 # lane-dense


def head_kernel(bo_ref, wf_ref, bf_ref, out_ref):
    """fcn_final: Linear(20, 2) on the concatenated (padded) branch outputs."""
    b0 = bo_ref[0].astype(jnp.bfloat16)
    b1 = bo_ref[1].astype(jnp.bfloat16)
    y = jnp.dot(b0, wf_ref[0], preferred_element_type=jnp.float32)
    y = y + jnp.dot(b1, wf_ref[1], preferred_element_type=jnp.float32)
    out_ref[...] = y + bf_ref[...]


# --------------------------------------------------------------------------
# pallas_call wrappers
# --------------------------------------------------------------------------
def _branch_call(xp, prep):
    N = xp.shape[1]
    return pl.pallas_call(
        branch_kernel,
        out_shape=jax.ShapeDtypeStruct((2, N, PAD_OUT), jnp.float32),
        grid=(2,),
        in_specs=[
            pl.BlockSpec((1, N, HPAD, HPAD), lambda b: (b, 0, 0, 0)),
            pl.BlockSpec((1, KERNEL_SIZE, HPAD, H1 * C1), lambda b: (b, 0, 0, 0)),
            pl.BlockSpec((1, KERNEL_SIZE, H1 * C1, H2 * C2), lambda b: (b, 0, 0, 0)),
            pl.BlockSpec((1, F_IN, HD), lambda b: (b, 0, 0)),
            pl.BlockSpec((1, HD, HD // 2), lambda b: (b, 0, 0)),
            pl.BlockSpec((1, HD // 2, HD // 4), lambda b: (b, 0, 0)),
            pl.BlockSpec((1, HD // 4, PAD_OUT), lambda b: (b, 0, 0)),
            pl.BlockSpec((1, 6, H2 * C2), lambda b: (b, 0, 0)),
        ],
        out_specs=pl.BlockSpec((1, N, PAD_OUT), lambda b: (b, 0, 0)),
        compiler_params=pltpu.CompilerParams(
            dimension_semantics=("parallel",)),   # both branches on v7x's 2 TCs
    )(xp, prep["w1big"], prep["w2big"], prep["wfc1"], prep["wfc2"],
      prep["wfc3"], prep["wfc4"], prep["biases"])


def _head_call(branch_out, prep):
    N = branch_out.shape[1]
    return pl.pallas_call(
        head_kernel,
        out_shape=jax.ShapeDtypeStruct((N, 2), jnp.float32),
        in_specs=[_VMEM, _VMEM, _VMEM],
        out_specs=_VMEM,
    )(branch_out, prep["wf_final"], prep["bf_final"])


@jax.jit
def two_lenet5_forward(x, prep):
    # x: (N, 2, 14, 14) NCHW float32, same as the PyTorch module.
    xp = jnp.stack([x[:, 0], x[:, 1]], axis=0)                     # (2, N, 14, 14)
    xp = jnp.pad(xp, ((0, 0), (0, 0), (PADDING, PADDING), (PADDING, PADDING)))
    branch_out = _branch_call(xp, prep)                            # (2, N, 128)
    return _head_call(branch_out, prep)                            # (N, 2)


# --------------------------------------------------------------------------
# Parameter construction (PyTorch-style uniform fan-in init, deterministic)
# --------------------------------------------------------------------------
def _init_linear(key, fan_in, fan_out):
    k1, k2 = jax.random.split(key)
    bound = 1.0 / math.sqrt(fan_in)
    w = jax.random.uniform(k1, (fan_in, fan_out), jnp.float32, -bound, bound)
    b = jax.random.uniform(k2, (fan_out,), jnp.float32, -bound, bound)
    return w, b


def _init_conv(key, cin, cout, k):
    k1, k2 = jax.random.split(key)
    fan_in = cin * k * k
    bound = 1.0 / math.sqrt(fan_in)
    w = jax.random.uniform(k1, (cout, cin, k, k), jnp.float32, -bound, bound)
    b = jax.random.uniform(k2, (cout,), jnp.float32, -bound, bound)
    return w, b


def init_params(key):
    keys = jax.random.split(key, 13)

    def conv_block(k0, k1):
        return (_init_conv(k0, C_IN, C1, KERNEL_SIZE),
                _init_conv(k1, C1, C2, KERNEL_SIZE))

    def fcn_block(ka, kb, kc, kd):
        return (_init_linear(ka, F_IN, HD),
                _init_linear(kb, HD, HD // 2),
                _init_linear(kc, HD // 2, HD // 4),
                _init_linear(kd, HD // 4, F_OUT))

    return {
        "conv1": conv_block(keys[0], keys[1]),
        "conv2": conv_block(keys[2], keys[3]),
        "fcn1": fcn_block(keys[4], keys[5], keys[6], keys[7]),
        "fcn2": fcn_block(keys[8], keys[9], keys[10], keys[11]),
        "fcn_final": _init_linear(keys[12], 2 * F_OUT, 2),
    }


# --------------------------------------------------------------------------
# One-time parameter preprocessing (expanded conv GEMM weights, permuted fc1
# weight, packed biases, lane-padded fc4/final weights).  Done once, outside
# the jitted forward, so no per-call XLA glue on weights.
# --------------------------------------------------------------------------
def _prep_branch(conv_p, fcn_p):
    (cw1, cb1), (cw2, cb2) = conv_p                 # (8,1,5,5), (32,8,5,5)
    (fw1, fb1), (fw2, fb2), (fw3, fb3), (fw4, fb4) = fcn_p
    k = KERNEL_SIZE

    # conv1 expanded weight: (k, 18, 14*C1), col = j*C1 + c_out,
    # nonzero only where input column cc lies in [j, j+4].
    tap1 = jnp.transpose(cw1[:, 0], (1, 2, 0))      # (dr, dc, c_out)
    w1big = jnp.zeros((k, HPAD, H1, C1), jnp.float32)
    for j in range(H1):
        w1big = w1big.at[:, j:j + k, j, :].set(tap1)
    w1big = w1big.reshape(k, HPAD, H1 * C1)

    # conv2 expanded weight: (k, 14*C1, 10*C2), row = jj*C1 + c_in, col = j*C2 + c_out.
    tap2 = jnp.transpose(cw2, (2, 3, 1, 0))         # (dr, dc, c_in, c_out)
    w2big = jnp.zeros((k, H1, C1, H2, C2), jnp.float32)
    for j in range(H2):
        w2big = w2big.at[:, j:j + k, :, j, :].set(tap2)
    w2big = w2big.reshape(k, H1 * C1, H2 * C2)

    # fc1 weight rows permuted: PyTorch flatten f = c*25 + ii*5 + jj
    # -> in-kernel feature index g = ii*160 + jj*32 + c.
    wfc1 = fw1.reshape(C2, HP, HP, HD).transpose(1, 2, 0, 3).reshape(F_IN, HD)

    # fc4 padded to a lane-dense 128-wide output.
    wfc4 = jnp.zeros((HD // 4, PAD_OUT), jnp.float32).at[:, :F_OUT].set(fw4)
    bf4 = jnp.zeros((PAD_OUT,), jnp.float32).at[:F_OUT].set(fb4)

    # all biases packed into one (6, 320) array (single DMA per branch).
    biases = jnp.zeros((6, H2 * C2), jnp.float32)
    biases = biases.at[0, :H1 * C1].set(jnp.tile(cb1, H1))
    biases = biases.at[1, :H2 * C2].set(jnp.tile(cb2, H2))
    biases = biases.at[2, :HD].set(fb1)
    biases = biases.at[3, :HD // 2].set(fb2)
    biases = biases.at[4, :HD // 4].set(fb3)
    biases = biases.at[5, :PAD_OUT].set(bf4)

    return w1big, w2big, wfc1, fw2, fw3, wfc4, biases


def prepare_params(params):
    br1 = _prep_branch(params["conv1"], params["fcn1"])
    br2 = _prep_branch(params["conv2"], params["fcn2"])
    names = ("w1big", "w2big", "wfc1", "wfc2", "wfc3", "wfc4", "biases")
    prep = {}
    for name, a, b in zip(names, br1, br2):
        stacked = jnp.stack([a, b], axis=0)
        if name != "biases":                        # matmul operands in bf16,
            stacked = stacked.astype(jnp.bfloat16)  # f32 accumulate + f32 epilogue
        prep[name] = stacked

    wf, bf = params["fcn_final"]                   # (20, 2), (2,)
    wf_pad = jnp.zeros((2, PAD_OUT, 2), jnp.float32)
    wf_pad = wf_pad.at[0, :F_OUT, :].set(wf[:F_OUT])
    wf_pad = wf_pad.at[1, :F_OUT, :].set(wf[F_OUT:])
    prep["wf_final"] = wf_pad.astype(jnp.bfloat16)
    prep["bf_final"] = bf.reshape(1, 2)
    return prep


# --------------------------------------------------------------------------
# Pure-JAX (XLA) reference with the same bf16-operand / f32-accumulate policy,
# used as an in-script correctness check of the Pallas mapping.
# --------------------------------------------------------------------------
def _branch_ref(xb, conv_p, fcn_p):
    (cw1, cb1), (cw2, cb2) = conv_p
    (fw1, fb1), (fw2, fb2), (fw3, fb3), (fw4, fb4) = fcn_p
    dn = ("NCHW", "OIHW", "NCHW")
    h = jax.lax.conv_general_dilated(
        xb[:, None, :, :].astype(jnp.bfloat16), cw1.astype(jnp.bfloat16),
        (1, 1), ((PADDING, PADDING), (PADDING, PADDING)),
        dimension_numbers=dn, preferred_element_type=jnp.float32)
    h = jnp.maximum(h + cb1[None, :, None, None], 0.0).astype(jnp.bfloat16)
    h = jax.lax.conv_general_dilated(
        h, cw2.astype(jnp.bfloat16), (1, 1), "VALID",
        dimension_numbers=dn, preferred_element_type=jnp.float32)
    h = jnp.maximum(h + cb2[None, :, None, None], 0.0)          # (N,32,10,10)
    h = h.reshape(h.shape[0], C2, HP, 2, HP, 2).max(axis=(3, 5))  # 2x2 maxpool
    feat = h.reshape(h.shape[0], F_IN)                            # PyTorch flatten
    z = jnp.maximum(jnp.dot(feat.astype(jnp.bfloat16), fw1.astype(jnp.bfloat16),
                            preferred_element_type=jnp.float32) + fb1, 0.0)
    z = jnp.maximum(jnp.dot(z.astype(jnp.bfloat16), fw2.astype(jnp.bfloat16),
                            preferred_element_type=jnp.float32) + fb2, 0.0)
    z = jnp.maximum(jnp.dot(z.astype(jnp.bfloat16), fw3.astype(jnp.bfloat16),
                            preferred_element_type=jnp.float32) + fb3, 0.0)
    z = jnp.dot(z.astype(jnp.bfloat16), fw4.astype(jnp.bfloat16),
                preferred_element_type=jnp.float32) + fb4
    return z


def two_lenet5_reference(x, params):
    z1 = _branch_ref(x[:, 0], params["conv1"], params["fcn1"])
    z2 = _branch_ref(x[:, 1], params["conv2"], params["fcn2"])
    cat = jnp.concatenate([z1, z2], axis=1)                       # (N, 20)
    wf, bf = params["fcn_final"]
    return jnp.dot(cat.astype(jnp.bfloat16), wf.astype(jnp.bfloat16),
                   preferred_element_type=jnp.float32) + bf


# --------------------------------------------------------------------------
if __name__ == "__main__":
    key = jax.random.PRNGKey(0)
    k_params, k_x = jax.random.split(key)
    params = init_params(k_params)
    prep = prepare_params(params)

    x = jax.random.normal(k_x, (2, 2, 14, 14), dtype=jnp.float32)

    out = two_lenet5_forward(x, prep)
    out = jax.block_until_ready(out)
    assert out.shape == (2, 2) and out.dtype == jnp.float32

    ref = jax.block_until_ready(jax.jit(two_lenet5_reference)(x, params))
    err = float(jnp.max(jnp.abs(out - ref)))
    assert err < 2e-2, f"Pallas output mismatch vs XLA reference, max|diff|={err}"

    print("KERNEL_OK")
</pallas_src>

<mosaic_0001>
module attributes {stable_mosaic.version = 11 : i64} {
  func.func @branch_kernel(%arg0: i32, %arg1: memref<1x2x18x18xf32, #tpu.memory_space<vmem>>, %arg2: memref<1x5x18x112xbf16, #tpu.memory_space<vmem>>, %arg3: memref<1x5x112x320xbf16, #tpu.memory_space<vmem>>, %arg4: memref<1x800x64xbf16, #tpu.memory_space<vmem>>, %arg5: memref<1x64x32xbf16, #tpu.memory_space<vmem>>, %arg6: memref<1x32x16xbf16, #tpu.memory_space<vmem>>, %arg7: memref<1x16x128xbf16, #tpu.memory_space<vmem>>, %arg8: memref<1x6x320xf32, #tpu.memory_space<vmem>>, %arg9: memref<1x2x128xf32, #tpu.memory_space<vmem>>) attributes {dimension_semantics = [#tpu.dimension_semantics<parallel>], iteration_bounds = array<i64: 2>, scalar_prefetch = 0 : i64, scratch_operands = 0 : i64, tpu.core_type = #tpu.core_type<tc>, window_params = [{transform_indices = @transform_0, window_bounds = array<i64: 1, 2, 18, 18>}, {transform_indices = @transform_1, window_bounds = array<i64: 1, 5, 18, 112>}, {transform_indices = @transform_2, window_bounds = array<i64: 1, 5, 112, 320>}, {transform_indices = @transform_3, window_bounds = array<i64: 1, 800, 64>}, {transform_indices = @transform_4, window_bounds = array<i64: 1, 64, 32>}, {transform_indices = @transform_5, window_bounds = array<i64: 1, 32, 16>}, {transform_indices = @transform_6, window_bounds = array<i64: 1, 16, 128>}, {transform_indices = @transform_7, window_bounds = array<i64: 1, 6, 320>}, {transform_indices = @transform_8, window_bounds = array<i64: 1, 2, 128>}]} {
    %c0 = arith.constant 0 : index
    %c0_0 = arith.constant 0 : index
    %c0_1 = arith.constant 0 : index
    %0 = vector.load %arg8[%c0, %c0_0, %c0_1] : memref<1x6x320xf32, #tpu.memory_space<vmem>>, vector<1x6x320xf32>
    %1 = vector.shape_cast %0 : vector<1x6x320xf32> to vector<6x320xf32>
    %2 = vector.extract_strided_slice %1 {offsets = [0, 0], sizes = [1, 112], strides = [1, 1]} : vector<6x320xf32> to vector<1x112xf32>
    %3 = vector.extract_strided_slice %1 {offsets = [1, 0], sizes = [1, 320], strides = [1, 1]} : vector<6x320xf32> to vector<1x320xf32>
    %4 = vector.extract_strided_slice %1 {offsets = [2, 0], sizes = [1, 64], strides = [1, 1]} : vector<6x320xf32> to vector<1x64xf32>
    %5 = vector.extract_strided_slice %1 {offsets = [3, 0], sizes = [1, 32], strides = [1, 1]} : vector<6x320xf32> to vector<1x32xf32>
    %6 = vector.extract_strided_slice %1 {offsets = [4, 0], sizes = [1, 16], strides = [1, 1]} : vector<6x320xf32> to vector<1x16xf32>
    %7 = vector.extract_strided_slice %1 {offsets = [5, 0], sizes = [1, 128], strides = [1, 1]} : vector<6x320xf32> to vector<1x128xf32>
    %c0_2 = arith.constant 0 : index
    %c0_3 = arith.constant 0 : index
    %c0_4 = arith.constant 0 : index
    %c0_5 = arith.constant 0 : index
    %8 = vector.load %arg1[%c0_2, %c0_3, %c0_4, %c0_5] : memref<1x2x18x18xf32, #tpu.memory_space<vmem>>, vector<1x2x18x18xf32>
    %9 = vector.shape_cast %8 : vector<1x2x18x18xf32> to vector<2x18x18xf32>
    %10 = arith.truncf %9 : vector<2x18x18xf32> to vector<2x18x18xbf16>
    %11 = vector.extract_strided_slice %10 {offsets = [0, 0, 0], sizes = [1, 14, 18], strides = [1, 1, 1]} : vector<2x18x18xbf16> to vector<1x14x18xbf16>
    %12 = vector.shape_cast %11 : vector<1x14x18xbf16> to vector<14x18xbf16>
    %13 = vector.extract_strided_slice %10 {offsets = [1, 0, 0], sizes = [1, 14, 18], strides = [1, 1, 1]} : vector<2x18x18xbf16> to vector<1x14x18xbf16>
    %14 = vector.shape_cast %13 : vector<1x14x18xbf16> to vector<14x18xbf16>
    %15 = tpu.concatenate %12, %14 in 0 : vector<14x18xbf16>, vector<14x18xbf16> -> vector<28x18xbf16>
    %c0_6 = arith.constant 0 : index
    %c0_7 = arith.constant 0 : index
    %c0_8 = arith.constant 0 : index
    %c0_9 = arith.constant 0 : index
    %16 = vector.load %arg2[%c0_6, %c0_7, %c0_8, %c0_9] : memref<1x5x18x112xbf16, #tpu.memory_space<vmem>>, vector<1x1x18x112xbf16>
    %17 = vector.shape_cast %16 : vector<1x1x18x112xbf16> to vector<18x112xbf16>
    %cst = arith.constant dense<0.000000e+00> : vector<28x112xf32>
    %18 = tpu.matmul %15, %17, %cst {dimension_numbers = #tpu.dot_dimension_numbers<[1], [0], [0], [1], [0, 0, 1, 1], [], []>} : vector<28x18xbf16>, vector<18x112xbf16>, vector<28x112xf32> -> vector<28x112xf32>
    %19 = vector.extract_strided_slice %10 {offsets = [0, 1, 0], sizes = [1, 14, 18], strides = [1, 1, 1]} : vector<2x18x18xbf16> to vector<1x14x18xbf16>
    %20 = vector.shape_cast %19 : vector<1x14x18xbf16> to vector<14x18xbf16>
    %21 = vector.extract_strided_slice %10 {offsets = [1, 1, 0], sizes = [1, 14, 18], strides = [1, 1, 1]} : vector<2x18x18xbf16> to vector<1x14x18xbf16>
    %22 = vector.shape_cast %21 : vector<1x14x18xbf16> to vector<14x18xbf16>
    %23 = tpu.concatenate %20, %22 in 0 : vector<14x18xbf16>, vector<14x18xbf16> -> vector<28x18xbf16>
    %c0_10 = arith.constant 0 : index
    %c1 = arith.constant 1 : index
    %c0_11 = arith.constant 0 : index
    %c0_12 = arith.constant 0 : index
    %24 = vector.load %arg2[%c0_10, %c1, %c0_11, %c0_12] : memref<1x5x18x112xbf16, #tpu.memory_space<vmem>>, vector<1x1x18x112xbf16>
    %25 = vector.shape_cast %24 : vector<1x1x18x112xbf16> to vector<18x112xbf16>
    %cst_13 = arith.constant dense<0.000000e+00> : vector<28x112xf32>
    %26 = tpu.matmul %23, %25, %cst_13 {dimension_numbers = #tpu.dot_dimension_numbers<[1], [0], [0], [1], [0, 0, 1, 1], [], []>} : vector<28x18xbf16>, vector<18x112xbf16>, vector<28x112xf32> -> vector<28x112xf32>
    %27 = arith.addf %18, %26 : vector<28x112xf32>
    %28 = vector.extract_strided_slice %10 {offsets = [0, 2, 0], sizes = [1, 14, 18], strides = [1, 1, 1]} : vector<2x18x18xbf16> to vector<1x14x18xbf16>
    %29 = vector.shape_cast %28 : vector<1x14x18xbf16> to vector<14x18xbf16>
    %30 = vector.extract_strided_slice %10 {offsets = [1, 2, 0], sizes = [1, 14, 18], strides = [1, 1, 1]} : vector<2x18x18xbf16> to vector<1x14x18xbf16>
    %31 = vector.shape_cast %30 : vector<1x14x18xbf16> to vector<14x18xbf16>
    %32 = tpu.concatenate %29, %31 in 0 : vector<14x18xbf16>, vector<14x18xbf16> -> vector<28x18xbf16>
    %c0_14 = arith.constant 0 : index
    %c2 = arith.constant 2 : index
    %c0_15 = arith.constant 0 : index
    %c0_16 = arith.constant 0 : index
    %33 = vector.load %arg2[%c0_14, %c2, %c0_15, %c0_16] : memref<1x5x18x112xbf16, #tpu.memory_space<vmem>>, vector<1x1x18x112xbf16>
    %34 = vector.shape_cast %33 : vector<1x1x18x112xbf16> to vector<18x112xbf16>
    %cst_17 = arith.constant dense<0.000000e+00> : vector<28x112xf32>
    %35 = tpu.matmul %32, %34, %cst_17 {dimension_numbers = #tpu.dot_dimension_numbers<[1], [0], [0], [1], [0, 0, 1, 1], [], []>} : vector<28x18xbf16>, vector<18x112xbf16>, vector<28x112xf32> -> vector<28x112xf32>
    %36 = arith.addf %27, %35 : vector<28x112xf32>
    %37 = vector.extract_strided_slice %10 {offsets = [0, 3, 0], sizes = [1, 14, 18], strides = [1, 1, 1]} : vector<2x18x18xbf16> to vector<1x14x18xbf16>
    %38 = vector.shape_cast %37 : vector<1x14x18xbf16> to vector<14x18xbf16>
    %39 = vector.extract_strided_slice %10 {offsets = [1, 3, 0], sizes = [1, 14, 18], strides = [1, 1, 1]} : vector<2x18x18xbf16> to vector<1x14x18xbf16>
    %40 = vector.shape_cast %39 : vector<1x14x18xbf16> to vector<14x18xbf16>
    %41 = tpu.concatenate %38, %40 in 0 : vector<14x18xbf16>, vector<14x18xbf16> -> vector<28x18xbf16>
    %c0_18 = arith.constant 0 : index
    %c3 = arith.constant 3 : index
    %c0_19 = arith.constant 0 : index
    %c0_20 = arith.constant 0 : index
    %42 = vector.load %arg2[%c0_18, %c3, %c0_19, %c0_20] : memref<1x5x18x112xbf16, #tpu.memory_space<vmem>>, vector<1x1x18x112xbf16>
    %43 = vector.shape_cast %42 : vector<1x1x18x112xbf16> to vector<18x112xbf16>
    %cst_21 = arith.constant dense<0.000000e+00> : vector<28x112xf32>
    %44 = tpu.matmul %41, %43, %cst_21 {dimension_numbers = #tpu.dot_dimension_numbers<[1], [0], [0], [1], [0, 0, 1, 1], [], []>} : vector<28x18xbf16>, vector<18x112xbf16>, vector<28x112xf32> -> vector<28x112xf32>
    %45 = arith.addf %36, %44 : vector<28x112xf32>
    %46 = vector.extract_strided_slice %10 {offsets = [0, 4, 0], sizes = [1, 14, 18], strides = [1, 1, 1]} : vector<2x18x18xbf16> to vector<1x14x18xbf16>
    %47 = vector.shape_cast %46 : vector<1x14x18xbf16> to vector<14x18xbf16>
    %48 = vector.extract_strided_slice %10 {offsets = [1, 4, 0], sizes = [1, 14, 18], strides = [1, 1, 1]} : vector<2x18x18xbf16> to vector<1x14x18xbf16>
    %49 = vector.shape_cast %48 : vector<1x14x18xbf16> to vector<14x18xbf16>
    %50 = tpu.concatenate %47, %49 in 0 : vector<14x18xbf16>, vector<14x18xbf16> -> vector<28x18xbf16>
    %c0_22 = arith.constant 0 : index
    %c4 = arith.constant 4 : index
    %c0_23 = arith.constant 0 : index
    %c0_24 = arith.constant 0 : index
    %51 = vector.load %arg2[%c0_22, %c4, %c0_23, %c0_24] : memref<1x5x18x112xbf16, #tpu.memory_space<vmem>>, vector<1x1x18x112xbf16>
    %52 = vector.shape_cast %51 : vector<1x1x18x112xbf16> to vector<18x112xbf16>
    %cst_25 = arith.constant dense<0.000000e+00> : vector<28x112xf32>
    %53 = tpu.matmul %50, %52, %cst_25 {dimension_numbers = #tpu.dot_dimension_numbers<[1], [0], [0], [1], [0, 0, 1, 1], [], []>} : vector<28x18xbf16>, vector<18x112xbf16>, vector<28x112xf32> -> vector<28x112xf32>
    %54 = arith.addf %45, %53 : vector<28x112xf32>
    %55 = vector.broadcast %2 : vector<1x112xf32> to vector<28x112xf32>
    %56 = arith.addf %54, %55 : vector<28x112xf32>
    %cst_26 = arith.constant 0.000000e+00 : f32
    %57 = vector.broadcast %cst_26 : f32 to vector<28x112xf32>
    %58 = arith.maximumf %56, %57 : vector<28x112xf32>
    %59 = arith.truncf %58 : vector<28x112xf32> to vector<28x112xbf16>
    %60 = vector.extract_strided_slice %59 {offsets = [0, 0], sizes = [10, 112], strides = [1, 1]} : vector<28x112xbf16> to vector<10x112xbf16>
    %61 = vector.extract_strided_slice %59 {offsets = [14, 0], sizes = [10, 112], strides = [1, 1]} : vector<28x112xbf16> to vector<10x112xbf16>
    %62 = tpu.concatenate %60, %61 in 0 : vector<10x112xbf16>, vector<10x112xbf16> -> vector<20x112xbf16>
    %c0_27 = arith.constant 0 : index
    %c0_28 = arith.constant 0 : index
    %c0_29 = arith.constant 0 : index
    %c0_30 = arith.constant 0 : index
    %63 = vector.load %arg3[%c0_27, %c0_28, %c0_29, %c0_30] : memref<1x5x112x320xbf16, #tpu.memory_space<vmem>>, vector<1x1x112x320xbf16>
    %64 = vector.shape_cast %63 : vector<1x1x112x320xbf16> to vector<112x320xbf16>
    %cst_31 = arith.constant dense<0.000000e+00> : vector<20x320xf32>
    %65 = tpu.matmul %62, %64, %cst_31 {dimension_numbers = #tpu.dot_dimension_numbers<[1], [0], [0], [1], [0, 0, 1, 1], [], []>} : vector<20x112xbf16>, vector<112x320xbf16>, vector<20x320xf32> -> vector<20x320xf32>
    %66 = vector.extract_strided_slice %59 {offsets = [1, 0], sizes = [10, 112], strides = [1, 1]} : vector<28x112xbf16> to vector<10x112xbf16>
    %67 = vector.extract_strided_slice %59 {offsets = [15, 0], sizes = [10, 112], strides = [1, 1]} : vector<28x112xbf16> to vector<10x112xbf16>
    %68 = tpu.concatenate %66, %67 in 0 : vector<10x112xbf16>, vector<10x112xbf16> -> vector<20x112xbf16>
    %c0_32 = arith.constant 0 : index
    %c1_33 = arith.constant 1 : index
    %c0_34 = arith.constant 0 : index
    %c0_35 = arith.constant 0 : index
    %69 = vector.load %arg3[%c0_32, %c1_33, %c0_34, %c0_35] : memref<1x5x112x320xbf16, #tpu.memory_space<vmem>>, vector<1x1x112x320xbf16>
    %70 = vector.shape_cast %69 : vector<1x1x112x320xbf16> to vector<112x320xbf16>
    %cst_36 = arith.constant dense<0.000000e+00> : vector<20x320xf32>
    %71 = tpu.matmul %68, %70, %cst_36 {dimension_numbers = #tpu.dot_dimension_numbers<[1], [0], [0], [1], [0, 0, 1, 1], [], []>} : vector<20x112xbf16>, vector<112x320xbf16>, vector<20x320xf32> -> vector<20x320xf32>
    %72 = arith.addf %65, %71 : vector<20x320xf32>
    %73 = vector.extract_strided_slice %59 {offsets = [2, 0], sizes = [10, 112], strides = [1, 1]} : vector<28x112xbf16> to vector<10x112xbf16>
    %74 = vector.extract_strided_slice %59 {offsets = [16, 0], sizes = [10, 112], strides = [1, 1]} : vector<28x112xbf16> to vector<10x112xbf16>
    %75 = tpu.concatenate %73, %74 in 0 : vector<10x112xbf16>, vector<10x112xbf16> -> vector<20x112xbf16>
    %c0_37 = arith.constant 0 : index
    %c2_38 = arith.constant 2 : index
    %c0_39 = arith.constant 0 : index
    %c0_40 = arith.constant 0 : index
    %76 = vector.load %arg3[%c0_37, %c2_38, %c0_39, %c0_40] : memref<1x5x112x320xbf16, #tpu.memory_space<vmem>>, vector<1x1x112x320xbf16>
    %77 = vector.shape_cast %76 : vector<1x1x112x320xbf16> to vector<112x320xbf16>
    %cst_41 = arith.constant dense<0.000000e+00> : vector<20x320xf32>
    %78 = tpu.matmul %75, %77, %cst_41 {dimension_numbers = #tpu.dot_dimension_numbers<[1], [0], [0], [1], [0, 0, 1, 1], [], []>} : vector<20x112xbf16>, vector<112x320xbf16>, vector<20x320xf32> -> vector<20x320xf32>
    %79 = arith.addf %72, %78 : vector<20x320xf32>
    %80 = vector.extract_strided_slice %59 {offsets = [3, 0], sizes = [10, 112], strides = [1, 1]} : vector<28x112xbf16> to vector<10x112xbf16>
    %81 = vector.extract_strided_slice %59 {offsets = [17, 0], sizes = [10, 112], strides = [1, 1]} : vector<28x112xbf16> to vector<10x112xbf16>
    %82 = tpu.concatenate %80, %81 in 0 : vector<10x112xbf16>, vector<10x112xbf16> -> vector<20x112xbf16>
    %c0_42 = arith.constant 0 : index
    %c3_43 = arith.constant 3 : index
    %c0_44 = arith.constant 0 : index
    %c0_45 = arith.constant 0 : index
    %83 = vector.load %arg3[%c0_42, %c3_43, %c0_44, %c0_45] : memref<1x5x112x320xbf16, #tpu.memory_space<vmem>>, vector<1x1x112x320xbf16>
    %84 = vector.shape_cast %83 : vector<1x1x112x320xbf16> to vector<112x320xbf16>
    %cst_46 = arith.constant dense<0.000000e+00> : vector<20x320xf32>
    %85 = tpu.matmul %82, %84, %cst_46 {dimension_numbers = #tpu.dot_dimension_numbers<[1], [0], [0], [1], [0, 0, 1, 1], [], []>} : vector<20x112xbf16>, vector<112x320xbf16>, vector<20x320xf32> -> vector<20x320xf32>
    %86 = arith.addf %79, %85 : vector<20x320xf32>
    %87 = vector.extract_strided_slice %59 {offsets = [4, 0], sizes = [10, 112], strides = [1, 1]} : vector<28x112xbf16> to vector<10x112xbf16>
    %88 = vector.extract_strided_slice %59 {offsets = [18, 0], sizes = [10, 112], strides = [1, 1]} : vector<28x112xbf16> to vector<10x112xbf16>
    %89 = tpu.concatenate %87, %88 in 0 : vector<10x112xbf16>, vector<10x112xbf16> -> vector<20x112xbf16>
    %c0_47 = arith.constant 0 : index
    %c4_48 = arith.constant 4 : index
    %c0_49 = arith.constant 0 : index
    %c0_50 = arith.constant 0 : index
    %90 = vector.load %arg3[%c0_47, %c4_48, %c0_49, %c0_50] : memref<1x5x112x320xbf16, #tpu.memory_space<vmem>>, vector<1x1x112x320xbf16>
    %91 = vector.shape_cast %90 : vector<1x1x112x320xbf16> to vector<112x320xbf16>
    %cst_51 = arith.constant dense<0.000000e+00> : vector<20x320xf32>
    %92 = tpu.matmul %89, %91, %cst_51 {dimension_numbers = #tpu.dot_dimension_numbers<[1], [0], [0], [1], [0, 0, 1, 1], [], []>} : vector<20x112xbf16>, vector<112x320xbf16>, vector<20x320xf32> -> vector<20x320xf32>
    %93 = arith.addf %86, %92 : vector<20x320xf32>
    %94 = vector.broadcast %3 : vector<1x320xf32> to vector<20x320xf32>
    %95 = arith.addf %93, %94 : vector<20x320xf32>
    %cst_52 = arith.constant 0.000000e+00 : f32
    %96 = vector.broadcast %cst_52 : f32 to vector<20x320xf32>
    %97 = arith.maximumf %95, %96 : vector<20x320xf32>
    %98 = vector.extract_strided_slice %97 {offsets = [0, 0], sizes = [1, 320], strides = [1, 1]} : vector<20x320xf32> to vector<1x320xf32>
    %99 = vector.extract_strided_slice %97 {offsets = [1, 0], sizes = [1, 320], strides = [1, 1]} : vector<20x320xf32> to vector<1x320xf32>
    %100 = arith.maximumf %98, %99 : vector<1x320xf32>
    %101 = vector.extract_strided_slice %100 {offsets = [0, 0], sizes = [1, 32], strides = [1, 1]} : vector<1x320xf32> to vector<1x32xf32>
    %102 = vector.extract_strided_slice %100 {offsets = [0, 32], sizes = [1, 32], strides = [1, 1]} : vector<1x320xf32> to vector<1x32xf32>
    %103 = arith.maximumf %101, %102 : vector<1x32xf32>
    %104 = vector.extract_strided_slice %100 {offsets = [0, 64], sizes = [1, 32], strides = [1, 1]} : vector<1x320xf32> to vector<1x32xf32>
    %105 = vector.extract_strided_slice %100 {offsets = [0, 96], sizes = [1, 32], strides = [1, 1]} : vector<1x320xf32> to vector<1x32xf32>
    %106 = arith.maximumf %104, %105 : vector<1x32xf32>
    %107 = vector.extract_strided_slice %100 {offsets = [0, 128], sizes = [1, 32], strides = [1, 1]} : vector<1x320xf32> to vector<1x32xf32>
    %108 = vector.extract_strided_slice %100 {offsets = [0, 160], sizes = [1, 32], strides = [1, 1]} : vector<1x320xf32> to vector<1x32xf32>
    %109 = arith.maximumf %107, %108 : vector<1x32xf32>
    %110 = vector.extract_strided_slice %100 {offsets = [0, 192], sizes = [1, 32], strides = [1, 1]} : vector<1x320xf32> to vector<1x32xf32>
    %111 = vector.extract_strided_slice %100 {offsets = [0, 224], sizes = [1, 32], strides = [1, 1]} : vector<1x320xf32> to vector<1x32xf32>
    %112 = arith.maximumf %110, %111 : vector<1x32xf32>
    %113 = vector.extract_strided_slice %100 {offsets = [0, 256], sizes = [1, 32], strides = [1, 1]} : vector<1x320xf32> to vector<1x32xf32>
    %114 = vector.extract_strided_slice %100 {offsets = [0, 288], sizes = [1, 32], strides = [1, 1]} : vector<1x320xf32> to vector<1x32xf32>
    %115 = arith.maximumf %113, %114 : vector<1x32xf32>
    %116 = vector.extract_strided_slice %97 {offsets = [2, 0], sizes = [1, 320], strides = [1, 1]} : vector<20x320xf32> to vector<1x320xf32>
    %117 = vector.extract_strided_slice %97 {offsets = [3, 0], sizes = [1, 320], strides = [1, 1]} : vector<20x320xf32> to vector<1x320xf32>
    %118 = arith.maximumf %116, %117 : vector<1x320xf32>
    %119 = vector.extract_strided_slice %118 {offsets = [0, 0], sizes = [1, 32], strides = [1, 1]} : vector<1x320xf32> to vector<1x32xf32>
    %120 = vector.extract_strided_slice %118 {offsets = [0, 32], sizes = [1, 32], strides = [1, 1]} : vector<1x320xf32> to vector<1x32xf32>
    %121 = arith.maximumf %119, %120 : vector<1x32xf32>
    %122 = vector.extract_strided_slice %118 {offsets = [0, 64], sizes = [1, 32], strides = [1, 1]} : vector<1x320xf32> to vector<1x32xf32>
    %123 = vector.extract_strided_slice %118 {offsets = [0, 96], sizes = [1, 32], strides = [1, 1]} : vector<1x320xf32> to vector<1x32xf32>
    %124 = arith.maximumf %122, %123 : vector<1x32xf32>
    %125 = vector.extract_strided_slice %118 {offsets = [0, 128], sizes = [1, 32], strides = [1, 1]} : vector<1x320xf32> to vector<1x32xf32>
    %126 = vector.extract_strided_slice %118 {offsets = [0, 160], sizes = [1, 32], strides = [1, 1]} : vector<1x320xf32> to vector<1x32xf32>
    %127 = arith.maximumf %125, %126 : vector<1x32xf32>
    %128 = vector.extract_strided_slice %118 {offsets = [0, 192], sizes = [1, 32], strides = [1, 1]} : vector<1x320xf32> to vector<1x32xf32>
    %129 = vector.extract_strided_slice %118 {offsets = [0, 224], sizes = [1, 32], strides = [1, 1]} : vector<1x320xf32> to vector<1x32xf32>
    %130 = arith.maximumf %128, %129 : vector<1x32xf32>
    %131 = vector.extract_strided_slice %118 {offsets = [0, 256], sizes = [1, 32], strides = [1, 1]} : vector<1x320xf32> to vector<1x32xf32>
    %132 = vector.extract_strided_slice %118 {offsets = [0, 288], sizes = [1, 32], strides = [1, 1]} : vector<1x320xf32> to vector<1x32xf32>
    %133 = arith.maximumf %131, %132 : vector<1x32xf32>
    %134 = vector.extract_strided_slice %97 {offsets = [4, 0], sizes = [1, 320], strides = [1, 1]} : vector<20x320xf32> to vector<1x320xf32>
    %135 = vector.extract_strided_slice %97 {offsets = [5, 0], sizes = [1, 320], strides = [1, 1]} : vector<20x320xf32> to vector<1x320xf32>
    %136 = arith.maximumf %134, %135 : vector<1x320xf32>
    %137 = vector.extract_strided_slice %136 {offsets = [0, 0], sizes = [1, 32], strides = [1, 1]} : vector<1x320xf32> to vector<1x32xf32>
    %138 = vector.extract_strided_slice %136 {offsets = [0, 32], sizes = [1, 32], strides = [1, 1]} : vector<1x320xf32> to vector<1x32xf32>
    %139 = arith.maximumf %137, %138 : vector<1x32xf32>
    %140 = vector.extract_strided_slice %136 {offsets = [0, 64], sizes = [1, 32], strides = [1, 1]} : vector<1x320xf32> to vector<1x32xf32>
    %141 = vector.extract_strided_slice %136 {offsets = [0, 96], sizes = [1, 32], strides = [1, 1]} : vector<1x320xf32> to vector<1x32xf32>
    %142 = arith.maximumf %140, %141 : vector<1x32xf32>
    %143 = vector.extract_strided_slice %136 {offsets = [0, 128], sizes = [1, 32], strides = [1, 1]} : vector<1x320xf32> to vector<1x32xf32>
    %144 = vector.extract_strided_slice %136 {offsets = [0, 160], sizes = [1, 32], strides = [1, 1]} : vector<1x320xf32> to vector<1x32xf32>
    %145 = arith.maximumf %143, %144 : vector<1x32xf32>
    %146 = vector.extract_strided_slice %136 {offsets = [0, 192], sizes = [1, 32], strides = [1, 1]} : vector<1x320xf32> to vector<1x32xf32>
    %147 = vector.extract_strided_slice %136 {offsets = [0, 224], sizes = [1, 32], strides = [1, 1]} : vector<1x320xf32> to vector<1x32xf32>
    %148 = arith.maximumf %146, %147 : vector<1x32xf32>
    %149 = vector.extract_strided_slice %136 {offsets = [0, 256], sizes = [1, 32], strides = [1, 1]} : vector<1x320xf32> to vector<1x32xf32>
    %150 = vector.extract_strided_slice %136 {offsets = [0, 288], sizes = [1, 32], strides = [1, 1]} : vector<1x320xf32> to vector<1x32xf32>
    %151 = arith.maximumf %149, %150 : vector<1x32xf32>
    %152 = vector.extract_strided_slice %97 {offsets = [6, 0], sizes = [1, 320], strides = [1, 1]} : vector<20x320xf32> to vector<1x320xf32>
    %153 = vector.extract_strided_slice %97 {offsets = [7, 0], sizes = [1, 320], strides = [1, 1]} : vector<20x320xf32> to vector<1x320xf32>
    %154 = arith.maximumf %152, %153 : vector<1x320xf32>
    %155 = vector.extract_strided_slice %154 {offsets = [0, 0], sizes = [1, 32], strides = [1, 1]} : vector<1x320xf32> to vector<1x32xf32>
    %156 = vector.extract_strided_slice %154 {offsets = [0, 32], sizes = [1, 32], strides = [1, 1]} : vector<1x320xf32> to vector<1x32xf32>
    %157 = arith.maximumf %155, %156 : vector<1x32xf32>
    %158 = vector.extract_strided_slice %154 {offsets = [0, 64], sizes = [1, 32], strides = [1, 1]} : vector<1x320xf32> to vector<1x32xf32>
    %159 = vector.extract_strided_slice %154 {offsets = [0, 96], sizes = [1, 32], strides = [1, 1]} : vector<1x320xf32> to vector<1x32xf32>
    %160 = arith.maximumf %158, %159 : vector<1x32xf32>
    %161 = vector.extract_strided_slice %154 {offsets = [0, 128], sizes = [1, 32], strides = [1, 1]} : vector<1x320xf32> to vector<1x32xf32>
    %162 = vector.extract_strided_slice %154 {offsets = [0, 160], sizes = [1, 32], strides = [1, 1]} : vector<1x320xf32> to vector<1x32xf32>
    %163 = arith.maximumf %161, %162 : vector<1x32xf32>
    %164 = vector.extract_strided_slice %154 {offsets = [0, 192], sizes = [1, 32], strides = [1, 1]} : vector<1x320xf32> to vector<1x32xf32>
    %165 = vector.extract_strided_slice %154 {offsets = [0, 224], sizes = [1, 32], strides = [1, 1]} : vector<1x320xf32> to vector<1x32xf32>
    %166 = arith.maximumf %164, %165 : vector<1x32xf32>
    %167 = vector.extract_strided_slice %154 {offsets = [0, 256], sizes = [1, 32], strides = [1, 1]} : vector<1x320xf32> to vector<1x32xf32>
    %168 = vector.extract_strided_slice %154 {offsets = [0, 288], sizes = [1, 32], strides = [1, 1]} : vector<1x320xf32> to vector<1x32xf32>
    %169 = arith.maximumf %167, %168 : vector<1x32xf32>
    %170 = vector.extract_strided_slice %97 {offsets = [8, 0], sizes = [1, 320], strides = [1, 1]} : vector<20x320xf32> to vector<1x320xf32>
    %171 = vector.extract_strided_slice %97 {offsets = [9, 0], sizes = [1, 320], strides = [1, 1]} : vector<20x320xf32> to vector<1x320xf32>
    %172 = arith.maximumf %170, %171 : vector<1x320xf32>
    %173 = vector.extract_strided_slice %172 {offsets = [0, 0], sizes = [1, 32], strides = [1, 1]} : vector<1x320xf32> to vector<1x32xf32>
    %174 = vector.extract_strided_slice %172 {offsets = [0, 32], sizes = [1, 32], strides = [1, 1]} : vector<1x320xf32> to vector<1x32xf32>
    %175 = arith.maximumf %173, %174 : vector<1x32xf32>
    %176 = vector.extract_strided_slice %172 {offsets = [0, 64], sizes = [1, 32], strides = [1, 1]} : vector<1x320xf32> to vector<1x32xf32>
    %177 = vector.extract_strided_slice %172 {offsets = [0, 96], sizes = [1, 32], strides = [1, 1]} : vector<1x320xf32> to vector<1x32xf32>
    %178 = arith.maximumf %176, %177 : vector<1x32xf32>
    %179 = vector.extract_strided_slice %172 {offsets = [0, 128], sizes = [1, 32], strides = [1, 1]} : vector<1x320xf32> to vector<1x32xf32>
    %180 = vector.extract_strided_slice %172 {offsets = [0, 160], sizes = [1, 32], strides = [1, 1]} : vector<1x320xf32> to vector<1x32xf32>
    %181 = arith.maximumf %179, %180 : vector<1x32xf32>
    %182 = vector.extract_strided_slice %172 {offsets = [0, 192], sizes = [1, 32], strides = [1, 1]} : vector<1x320xf32> to vector<1x32xf32>
    %183 = vector.extract_strided_slice %172 {offsets = [0, 224], sizes = [1, 32], strides = [1, 1]} : vector<1x320xf32> to vector<1x32xf32>
    %184 = arith.maximumf %182, %183 : vector<1x32xf32>
    %185 = vector.extract_strided_slice %172 {offsets = [0, 256], sizes = [1, 32], strides = [1, 1]} : vector<1x320xf32> to vector<1x32xf32>
    %186 = vector.extract_strided_slice %172 {offsets = [0, 288], sizes = [1, 32], strides = [1, 1]} : vector<1x320xf32> to vector<1x32xf32>
    %187 = arith.maximumf %185, %186 : vector<1x32xf32>
    %188 = tpu.concatenate %103, %106, %109, %112, %115, %121, %124, %127, %130, %133, %139, %142, %145, %148, %151, %157 in 1 : vector<1x32xf32>, vector<1x32xf32>, vector<1x32xf32>, vector<1x32xf32>, vector<1x32xf32>, vector<1x32xf32>, vector<1x32xf32>, vector<1x32xf32>, vector<1x32xf32>, vector<1x32xf32>, vector<1x32xf32>, vector<1x32xf32>, vector<1x32xf32>, vector<1x32xf32>, vector<1x32xf32>, vector<1x32xf32> -> vector<1x512xf32>
    %189 = tpu.concatenate %160, %163, %166, %169, %175, %178, %181, %184, %187 in 1 : vector<1x32xf32>, vector<1x32xf32>, vector<1x32xf32>, vector<1x32xf32>, vector<1x32xf32>, vector<1x32xf32>, vector<1x32xf32>, vector<1x32xf32>, vector<1x32xf32> -> vector<1x288xf32>
    %190 = tpu.concatenate %188, %189 in 1 : vector<1x512xf32>, vector<1x288xf32> -> vector<1x800xf32>
    %191 = vector.extract_strided_slice %97 {offsets = [10, 0], sizes = [1, 320], strides = [1, 1]} : vector<20x320xf32> to vector<1x320xf32>
    %192 = vector.extract_strided_slice %97 {offsets = [11, 0], sizes = [1, 320], strides = [1, 1]} : vector<20x320xf32> to vector<1x320xf32>
    %193 = arith.maximumf %191, %192 : vector<1x320xf32>
    %194 = vector.extract_strided_slice %193 {offsets = [0, 0], sizes = [1, 32], strides = [1, 1]} : vector<1x320xf32> to vector<1x32xf32>
    %195 = vector.extract_strided_slice %193 {offsets = [0, 32], sizes = [1, 32], strides = [1, 1]} : vector<1x320xf32> to vector<1x32xf32>
    %196 = arith.maximumf %194, %195 : vector<1x32xf32>
    %197 = vector.extract_strided_slice %193 {offsets = [0, 64], sizes = [1, 32], strides = [1, 1]} : vector<1x320xf32> to vector<1x32xf32>
    %198 = vector.extract_strided_slice %193 {offsets = [0, 96], sizes = [1, 32], strides = [1, 1]} : vector<1x320xf32> to vector<1x32xf32>
    %199 = arith.maximumf %197, %198 : vector<1x32xf32>
    %200 = vector.extract_strided_slice %193 {offsets = [0, 128], sizes = [1, 32], strides = [1, 1]} : vector<1x320xf32> to vector<1x32xf32>
    %201 = vector.extract_strided_slice %193 {offsets = [0, 160], sizes = [1, 32], strides = [1, 1]} : vector<1x320xf32> to vector<1x32xf32>
    %202 = arith.maximumf %200, %201 : vector<1x32xf32>
    %203 = vector.extract_strided_slice %193 {offsets = [0, 192], sizes = [1, 32], strides = [1, 1]} : vector<1x320xf32> to vector<1x32xf32>
    %204 = vector.extract_strided_slice %193 {offsets = [0, 224], sizes = [1, 32], strides = [1, 1]} : vector<1x320xf32> to vector<1x32xf32>
    %205 = arith.maximumf %203, %204 : vector<1x32xf32>
    %206 = vector.extract_strided_slice %193 {offsets = [0, 256], sizes = [1, 32], strides = [1, 1]} : vector<1x320xf32> to vector<1x32xf32>
    %207 = vector.extract_strided_slice %193 {offsets = [0, 288], sizes = [1, 32], strides = [1, 1]} : vector<1x320xf32> to vector<1x32xf32>
    %208 = arith.maximumf %206, %207 : vector<1x32xf32>
    %209 = vector.extract_strided_slice %97 {offsets = [12, 0], sizes = [1, 320], strides = [1, 1]} : vector<20x320xf32> to vector<1x320xf32>
    %210 = vector.extract_strided_slice %97 {offsets = [13, 0], sizes = [1, 320], strides = [1, 1]} : vector<20x320xf32> to vector<1x320xf32>
    %211 = arith.maximumf %209, %210 : vector<1x320xf32>
    %212 = vector.extract_strided_slice %211 {offsets = [0, 0], sizes = [1, 32], strides = [1, 1]} : vector<1x320xf32> to vector<1x32xf32>
    %213 = vector.extract_strided_slice %211 {offsets = [0, 32], sizes = [1, 32], strides = [1, 1]} : vector<1x320xf32> to vector<1x32xf32>
    %214 = arith.maximumf %212, %213 : vector<1x32xf32>
    %215 = vector.extract_strided_slice %211 {offsets = [0, 64], sizes = [1, 32], strides = [1, 1]} : vector<1x320xf32> to vector<1x32xf32>
    %216 = vector.extract_strided_slice %211 {offsets = [0, 96], sizes = [1, 32], strides = [1, 1]} : vector<1x320xf32> to vector<1x32xf32>
    %217 = arith.maximumf %215, %216 : vector<1x32xf32>
    %218 = vector.extract_strided_slice %211 {offsets = [0, 128], sizes = [1, 32], strides = [1, 1]} : vector<1x320xf32> to vector<1x32xf32>
    %219 = vector.extract_strided_slice %211 {offsets = [0, 160], sizes = [1, 32], strides = [1, 1]} : vector<1x320xf32> to vector<1x32xf32>
    %220 = arith.maximumf %218, %219 : vector<1x32xf32>
    %221 = vector.extract_strided_slice %211 {offsets = [0, 192], sizes = [1, 32], strides = [1, 1]} : vector<1x320xf32> to vector<1x32xf32>
    %222 = vector.extract_strided_slice %211 {offsets = [0, 224], sizes = [1, 32], strides = [1, 1]} : vector<1x320xf32> to vector<1x32xf32>
    %223 = arith.maximumf %221, %222 : vector<1x32xf32>
    %224 = vector.extract_strided_slice %211 {offsets = [0, 256], sizes = [1, 32], strides = [1, 1]} : vector<1x320xf32> to vector<1x32xf32>
    %225 = vector.extract_strided_slice %211 {offsets = [0, 288], sizes = [1, 32], strides = [1, 1]} : vector<1x320xf32> to vector<1x32xf32>
    %226 = arith.maximumf %224, %225 : vector<1x32xf32>
    %227 = vector.extract_strided_slice %97 {offsets = [14, 0], sizes = [1, 320], strides = [1, 1]} : vector<20x320xf32> to vector<1x320xf32>
    %228 = vector.extract_strided_slice %97 {offsets = [15, 0], sizes = [1, 320], strides = [1, 1]} : vector<20x320xf32> to vector<1x320xf32>
    %229 = arith.maximumf %227, %228 : vector<1x320xf32>
    %230 = vector.extract_strided_slice %229 {offsets = [0, 0], sizes = [1, 32], strides = [1, 1]} : vector<1x320xf32> to vector<1x32xf32>
    %231 = vector.extract_strided_slice %229 {offsets = [0, 32], sizes = [1, 32], strides = [1, 1]} : vector<1x320xf32> to vector<1x32xf32>
    %232 = arith.maximumf %230, %231 : vector<1x32xf32>
    %233 = vector.extract_strided_slice %229 {offsets = [0, 64], sizes = [1, 32], strides = [1, 1]} : vector<1x320xf32> to vector<1x32xf32>
    %234 = vector.extract_strided_slice %229 {offsets = [0, 96], sizes = [1, 32], strides = [1, 1]} : vector<1x320xf32> to vector<1x32xf32>
    %235 = arith.maximumf %233, %234 : vector<1x32xf32>
    %236 = vector.extract_strided_slice %229 {offsets = [0, 128], sizes = [1, 32], strides = [1, 1]} : vector<1x320xf32> to vector<1x32xf32>
    %237 = vector.extract_strided_slice %229 {offsets = [0, 160], sizes = [1, 32], strides = [1, 1]} : vector<1x320xf32> to vector<1x32xf32>
    %238 = arith.maximumf %236, %237 : vector<1x32xf32>
    %239 = vector.extract_strided_slice %229 {offsets = [0, 192], sizes = [1, 32], strides = [1, 1]} : vector<1x320xf32> to vector<1x32xf32>
    %240 = vector.extract_strided_slice %229 {offsets = [0, 224], sizes = [1, 32], strides = [1, 1]} : vector<1x320xf32> to vector<1x32xf32>
    %241 = arith.maximumf %239, %240 : vector<1x32xf32>
    %242 = vector.extract_strided_slice %229 {offsets = [0, 256], sizes = [1, 32], strides = [1, 1]} : vector<1x320xf32> to vector<1x32xf32>
    %243 = vector.extract_strided_slice %229 {offsets = [0, 288], sizes = [1, 32], strides = [1, 1]} : vector<1x320xf32> to vector<1x32xf32>
    %244 = arith.maximumf %242, %243 : vector<1x32xf32>
    %245 = vector.extract_strided_slice %97 {offsets = [16, 0], sizes = [1, 320], strides = [1, 1]} : vector<20x320xf32> to vector<1x320xf32>
    %246 = vector.extract_strided_slice %97 {offsets = [17, 0], sizes = [1, 320], strides = [1, 1]} : vector<20x320xf32> to vector<1x320xf32>
    %247 = arith.maximumf %245, %246 : vector<1x320xf32>
    %248 = vector.extract_strided_slice %247 {offsets = [0, 0], sizes = [1, 32], strides = [1, 1]} : vector<1x320xf32> to vector<1x32xf32>
    %249 = vector.extract_strided_slice %247 {offsets = [0, 32], sizes = [1, 32], strides = [1, 1]} : vector<1x320xf32> to vector<1x32xf32>
    %250 = arith.maximumf %248, %249 : vector<1x32xf32>
    %251 = vector.extract_strided_slice %247 {offsets = [0, 64], sizes = [1, 32], strides = [1, 1]} : vector<1x320xf32> to vector<1x32xf32>
    %252 = vector.extract_strided_slice %247 {offsets = [0, 96], sizes = [1, 32], strides = [1, 1]} : vector<1x320xf32> to vector<1x32xf32>
    %253 = arith.maximumf %251, %252 : vector<1x32xf32>
    %254 = vector.extract_strided_slice %247 {offsets = [0, 128], sizes = [1, 32], strides = [1, 1]} : vector<1x320xf32> to vector<1x32xf32>
    %255 = vector.extract_strided_slice %247 {offsets = [0, 160], sizes = [1, 32], strides = [1, 1]} : vector<1x320xf32> to vector<1x32xf32>
    %256 = arith.maximumf %254, %255 : vector<1x32xf32>
    %257 = vector.extract_strided_slice %247 {offsets = [0, 192], sizes = [1, 32], strides = [1, 1]} : vector<1x320xf32> to vector<1x32xf32>
    %258 = vector.extract_strided_slice %247 {offsets = [0, 224], sizes = [1, 32], strides = [1, 1]} : vector<1x320xf32> to vector<1x32xf32>
    %259 = arith.maximumf %257, %258 : vector<1x32xf32>
    %260 = vector.extract_strided_slice %247 {offsets = [0, 256], sizes = [1, 32], strides = [1, 1]} : vector<1x320xf32> to vector<1x32xf32>
    %261 = vector.extract_strided_slice %247 {offsets = [0, 288], sizes = [1, 32], strides = [1, 1]} : vector<1x320xf32> to vector<1x32xf32>
    %262 = arith.maximumf %260, %261 : vector<1x32xf32>
    %263 = vector.extract_strided_slice %97 {offsets = [18, 0], sizes = [1, 320], strides = [1, 1]} : vector<20x320xf32> to vector<1x320xf32>
    %264 = vector.extract_strided_slice %97 {offsets = [19, 0], sizes = [1, 320], strides = [1, 1]} : vector<20x320xf32> to vector<1x320xf32>
    %265 = arith.maximumf %263, %264 : vector<1x320xf32>
    %266 = vector.extract_strided_slice %265 {offsets = [0, 0], sizes = [1, 32], strides = [1, 1]} : vector<1x320xf32> to vector<1x32xf32>
    %267 = vector.extract_strided_slice %265 {offsets = [0, 32], sizes = [1, 32], strides = [1, 1]} : vector<1x320xf32> to vector<1x32xf32>
    %268 = arith.maximumf %266, %267 : vector<1x32xf32>
    %269 = vector.extract_strided_slice %265 {offsets = [0, 64], sizes = [1, 32], strides = [1, 1]} : vector<1x320xf32> to vector<1x32xf32>
    %270 = vector.extract_strided_slice %265 {offsets = [0, 96], sizes = [1, 32], strides = [1, 1]} : vector<1x320xf32> to vector<1x32xf32>
    %271 = arith.maximumf %269, %270 : vector<1x32xf32>
    %272 = vector.extract_strided_slice %265 {offsets = [0, 128], sizes = [1, 32], strides = [1, 1]} : vector<1x320xf32> to vector<1x32xf32>
    %273 = vector.extract_strided_slice %265 {offsets = [0, 160], sizes = [1, 32], strides = [1, 1]} : vector<1x320xf32> to vector<1x32xf32>
    %274 = arith.maximumf %272, %273 : vector<1x32xf32>
    %275 = vector.extract_strided_slice %265 {offsets = [0, 192], sizes = [1, 32], strides = [1, 1]} : vector<1x320xf32> to vector<1x32xf32>
    %276 = vector.extract_strided_slice %265 {offsets = [0, 224], sizes = [1, 32], strides = [1, 1]} : vector<1x320xf32> to vector<1x32xf32>
    %277 = arith.maximumf %275, %276 : vector<1x32xf32>
    %278 = vector.extract_strided_slice %265 {offsets = [0, 256], sizes = [1, 32], strides = [1, 1]} : vector<1x320xf32> to vector<1x32xf32>
    %279 = vector.extract_strided_slice %265 {offsets = [0, 288], sizes = [1, 32], strides = [1, 1]} : vector<1x320xf32> to vector<1x32xf32>
    %280 = arith.maximumf %278, %279 : vector<1x32xf32>
    %281 = tpu.concatenate %196, %199, %202, %205, %208, %214, %217, %220, %223, %226, %232, %235, %238, %241, %244, %250 in 1 : vector<1x32xf32>, vector<1x32xf32>, vector<1x32xf32>, vector<1x32xf32>, vector<1x32xf32>, vector<1x32xf32>, vector<1x32xf32>, vector<1x32xf32>, vector<1x32xf32>, vector<1x32xf32>, vector<1x32xf32>, vector<1x32xf32>, vector<1x32xf32>, vector<1x32xf32>, vector<1x32xf32>, vector<1x32xf32> -> vector<1x512xf32>
    %282 = tpu.concatenate %253, %256, %259, %262, %268, %271, %274, %277, %280 in 1 : vector<1x32xf32>, vector<1x32xf32>, vector<1x32xf32>, vector<1x32xf32>, vector<1x32xf32>, vector<1x32xf32>, vector<1x32xf32>, vector<1x32xf32>, vector<1x32xf32> -> vector<1x288xf32>
    %283 = tpu.concatenate %281, %282 in 1 : vector<1x512xf32>, vector<1x288xf32> -> vector<1x800xf32>
    %284 = tpu.concatenate %190, %283 in 0 : vector<1x800xf32>, vector<1x800xf32> -> vector<2x800xf32>
    %285 = arith.truncf %284 : vector<2x800xf32> to vector<2x800xbf16>
    %c0_53 = arith.constant 0 : index
    %c0_54 = arith.constant 0 : index
    %c0_55 = arith.constant 0 : index
    %286 = vector.load %arg4[%c0_53, %c0_54, %c0_55] : memref<1x800x64xbf16, #tpu.memory_space<vmem>>, vector<1x800x64xbf16>
    %287 = vector.shape_cast %286 : vector<1x800x64xbf16> to vector<800x64xbf16>
    %cst_56 = arith.constant dense<0.000000e+00> : vector<2x64xf32>
    %288 = tpu.matmul %285, %287, %cst_56 {dimension_numbers = #tpu.dot_dimension_numbers<[1], [0], [0], [1], [0, 0, 1, 1], [], []>} : vector<2x800xbf16>, vector<800x64xbf16>, vector<2x64xf32> -> vector<2x64xf32>
    %289 = vector.broadcast %4 : vector<1x64xf32> to vector<2x64xf32>
    %290 = arith.addf %288, %289 : vector<2x64xf32>
    %cst_57 = arith.constant 0.000000e+00 : f32
    %291 = vector.broadcast %cst_57 : f32 to vector<2x64xf32>
    %292 = arith.maximumf %290, %291 : vector<2x64xf32>
    %293 = arith.truncf %292 : vector<2x64xf32> to vector<2x64xbf16>
    %c0_58 = arith.constant 0 : index
    %c0_59 = arith.constant 0 : index
    %c0_60 = arith.constant 0 : index
    %294 = vector.load %arg5[%c0_58, %c0_59, %c0_60] : memref<1x64x32xbf16, #tpu.memory_space<vmem>>, vector<1x64x32xbf16>
    %295 = vector.shape_cast %294 : vector<1x64x32xbf16> to vector<64x32xbf16>
    %cst_61 = arith.constant dense<0.000000e+00> : vector<2x32xf32>
    %296 = tpu.matmul %293, %295, %cst_61 {dimension_numbers = #tpu.dot_dimension_numbers<[1], [0], [0], [1], [0, 0, 1, 1], [], []>} : vector<2x64xbf16>, vector<64x32xbf16>, vector<2x32xf32> -> vector<2x32xf32>
    %297 = vector.broadcast %5 : vector<1x32xf32> to vector<2x32xf32>
    %298 = arith.addf %296, %297 : vector<2x32xf32>
    %cst_62 = arith.constant 0.000000e+00 : f32
    %299 = vector.broadcast %cst_62 : f32 to vector<2x32xf32>
    %300 = arith.maximumf %298, %299 : vector<2x32xf32>
    %301 = arith.truncf %300 : vector<2x32xf32> to vector<2x32xbf16>
    %c0_63 = arith.constant 0 : index
    %c0_64 = arith.constant 0 : index
    %c0_65 = arith.constant 0 : index
    %302 = vector.load %arg6[%c0_63, %c0_64, %c0_65] : memref<1x32x16xbf16, #tpu.memory_space<vmem>>, vector<1x32x16xbf16>
    %303 = vector.shape_cast %302 : vector<1x32x16xbf16> to vector<32x16xbf16>
    %cst_66 = arith.constant dense<0.000000e+00> : vector<2x16xf32>
    %304 = tpu.matmul %301, %303, %cst_66 {dimension_numbers = #tpu.dot_dimension_numbers<[1], [0], [0], [1], [0, 0, 1, 1], [], []>} : vector<2x32xbf16>, vector<32x16xbf16>, vector<2x16xf32> -> vector<2x16xf32>
    %305 = vector.broadcast %6 : vector<1x16xf32> to vector<2x16xf32>
    %306 = arith.addf %304, %305 : vector<2x16xf32>
    %cst_67 = arith.constant 0.000000e+00 : f32
    %307 = vector.broadcast %cst_67 : f32 to vector<2x16xf32>
    %308 = arith.maximumf %306, %307 : vector<2x16xf32>
    %309 = arith.truncf %308 : vector<2x16xf32> to vector<2x16xbf16>
    %c0_68 = arith.constant 0 : index
    %c0_69 = arith.constant 0 : index
    %c0_70 = arith.constant 0 : index
    %310 = vector.load %arg7[%c0_68, %c0_69, %c0_70] : memref<1x16x128xbf16, #tpu.memory_space<vmem>>, vector<1x16x128xbf16>
    %311 = vector.shape_cast %310 : vector<1x16x128xbf16> to vector<16x128xbf16>
    %cst_71 = arith.constant dense<0.000000e+00> : vector<2x128xf32>
    %312 = tpu.matmul %309, %311, %cst_71 {dimension_numbers = #tpu.dot_dimension_numbers<[1], [0], [0], [1], [0, 0, 1, 1], [], []>} : vector<2x16xbf16>, vector<16x128xbf16>, vector<2x128xf32> -> vector<2x128xf32>
    %313 = vector.broadcast %7 : vector<1x128xf32> to vector<2x128xf32>
    %314 = arith.addf %312, %313 : vector<2x128xf32>
    %c0_72 = arith.constant 0 : index
    %c0_73 = arith.constant 0 : index
    %c0_74 = arith.constant 0 : index
    %315 = vector.load %arg9[%c0_72, %c0_73, %c0_74] : memref<1x2x128xf32, #tpu.memory_space<vmem>>, vector<1x2x128xf32>
    %316 = vector.shape_cast %315 : vector<1x2x128xf32> to vector<2x128xf32>
    %317 = vector.shape_cast %314 : vector<2x128xf32> to vector<1x2x128xf32>
    tpu.vector_store %arg9[%c0_72, %c0_73, %c0_74], %317 {strides = array<i32>} : memref<1x2x128xf32, #tpu.memory_space<vmem>>, vector<1x2x128xf32>,
    return
  }
  func.func @transform_0(%arg0: i32) -> (i32, i32, i32, i32) {
    %c0_i32 = arith.constant 0 : i32
    %c0_i32_0 = arith.constant 0 : i32
    %c0_i32_1 = arith.constant 0 : i32
    %c0_i32_2 = arith.constant 0 : i32
    return %arg0, %c0_i32, %c0_i32_0, %c0_i32_1 : i32, i32, i32, i32
  }
  func.func @transform_1(%arg0: i32) -> (i32, i32, i32, i32) {
    %c0_i32 = arith.constant 0 : i32
    %c0_i32_0 = arith.constant 0 : i32
    %c0_i32_1 = arith.constant 0 : i32
    %c0_i32_2 = arith.constant 0 : i32
    return %arg0, %c0_i32, %c0_i32_0, %c0_i32_1 : i32, i32, i32, i32
  }
  func.func @transform_2(%arg0: i32) -> (i32, i32, i32, i32) {
    %c0_i32 = arith.constant 0 : i32
    %c0_i32_0 = arith.constant 0 : i32
    %c0_i32_1 = arith.constant 0 : i32
    %c0_i32_2 = arith.constant 0 : i32
    return %arg0, %c0_i32, %c0_i32_0, %c0_i32_1 : i32, i32, i32, i32
  }
  func.func @transform_3(%arg0: i32) -> (i32, i32, i32) {
    %c0_i32 = arith.constant 0 : i32
    %c0_i32_0 = arith.constant 0 : i32
    %c0_i32_1 = arith.constant 0 : i32
    return %arg0, %c0_i32, %c0_i32_0 : i32, i32, i32
  }
  func.func @transform_4(%arg0: i32) -> (i32, i32, i32) {
    %c0_i32 = arith.constant 0 : i32
    %c0_i32_0 = arith.constant 0 : i32
    %c0_i32_1 = arith.constant 0 : i32
    return %arg0, %c0_i32, %c0_i32_0 : i32, i32, i32
  }
  func.func @transform_5(%arg0: i32) -> (i32, i32, i32) {
    %c0_i32 = arith.constant 0 : i32
    %c0_i32_0 = arith.constant 0 : i32
    %c0_i32_1 = arith.constant 0 : i32
    return %arg0, %c0_i32, %c0_i32_0 : i32, i32, i32
  }
  func.func @transform_6(%arg0: i32) -> (i32, i32, i32) {
    %c0_i32 = arith.constant 0 : i32
    %c0_i32_0 = arith.constant 0 : i32
    %c0_i32_1 = arith.constant 0 : i32
    return %arg0, %c0_i32, %c0_i32_0 : i32, i32, i32
  }
  func.func @transform_7(%arg0: i32) -> (i32, i32, i32) {
    %c0_i32 = arith.constant 0 : i32
    %c0_i32_0 = arith.constant 0 : i32
    %c0_i32_1 = arith.constant 0 : i32
    return %arg0, %c0_i32, %c0_i32_0 : i32, i32, i32
  }
  func.func @transform_8(%arg0: i32) -> (i32, i32, i32) {
    %c0_i32 = arith.constant 0 : i32
    %c0_i32_0 = arith.constant 0 : i32
    %c0_i32_1 = arith.constant 0 : i32
    return %arg0, %c0_i32, %c0_i32_0 : i32, i32, i32
  }
}

module attributes {stable_mosaic.version = 11 : i64} {
  func.func @head_kernel(%arg0: memref<2x2x128xf32, #tpu.memory_space<vmem>>, %arg1: memref<2x128x2xbf16, #tpu.memory_space<vmem>>, %arg2: memref<1x2xf32, #tpu.memory_space<vmem>>, %arg3: memref<2x2xf32, #tpu.memory_space<vmem>>) attributes {dimension_semantics = [], scalar_prefetch = 0 : i64, scratch_operands = 0 : i64, tpu.core_type = #tpu.core_type<tc>} {
    %c0 = arith.constant 0 : index
    %c0_0 = arith.constant 0 : index
    %c0_1 = arith.constant 0 : index
    %0 = vector.load %arg0[%c0, %c0_0, %c0_1] : memref<2x2x128xf32, #tpu.memory_space<vmem>>, vector<1x2x128xf32>
    %1 = vector.shape_cast %0 : vector<1x2x128xf32> to vector<2x128xf32>
    %2 = arith.truncf %1 : vector<2x128xf32> to vector<2x128xbf16>
    %c1 = arith.constant 1 : index
    %c0_2 = arith.constant 0 : index
    %c0_3 = arith.constant 0 : index
    %3 = vector.load %arg0[%c1, %c0_2, %c0_3] : memref<2x2x128xf32, #tpu.memory_space<vmem>>, vector<1x2x128xf32>
    %4 = vector.shape_cast %3 : vector<1x2x128xf32> to vector<2x128xf32>
    %5 = arith.truncf %4 : vector<2x128xf32> to vector<2x128xbf16>
    %c0_4 = arith.constant 0 : index
    %c0_5 = arith.constant 0 : index
    %c0_6 = arith.constant 0 : index
    %6 = vector.load %arg1[%c0_4, %c0_5, %c0_6] : memref<2x128x2xbf16, #tpu.memory_space<vmem>>, vector<1x128x2xbf16>
    %7 = vector.shape_cast %6 : vector<1x128x2xbf16> to vector<128x2xbf16>
    %cst = arith.constant dense<0.000000e+00> : vector<2x2xf32>
    %8 = tpu.matmul %2, %7, %cst {dimension_numbers = #tpu.dot_dimension_numbers<[1], [0], [0], [1], [0, 0, 1, 1], [], []>} : vector<2x128xbf16>, vector<128x2xbf16>, vector<2x2xf32> -> vector<2x2xf32>
    %c1_7 = arith.constant 1 : index
    %c0_8 = arith.constant 0 : index
    %c0_9 = arith.constant 0 : index
    %9 = vector.load %arg1[%c1_7, %c0_8, %c0_9] : memref<2x128x2xbf16, #tpu.memory_space<vmem>>, vector<1x128x2xbf16>
    %10 = vector.shape_cast %9 : vector<1x128x2xbf16> to vector<128x2xbf16>
    %cst_10 = arith.constant dense<0.000000e+00> : vector<2x2xf32>
    %11 = tpu.matmul %5, %10, %cst_10 {dimension_numbers = #tpu.dot_dimension_numbers<[1], [0], [0], [1], [0, 0, 1, 1], [], []>} : vector<2x128xbf16>, vector<128x2xbf16>, vector<2x2xf32> -> vector<2x2xf32>
    %12 = arith.addf %8, %11 : vector<2x2xf32>
    %c0_11 = arith.constant 0 : index
    %c0_12 = arith.constant 0 : index
    %13 = vector.load %arg2[%c0_11, %c0_12] : memref<1x2xf32, #tpu.memory_space<vmem>>, vector<1x2xf32>
    %14 = vector.broadcast %13 : vector<1x2xf32> to vector<2x2xf32>
    %15 = arith.addf %12, %14 : vector<2x2xf32>
    %c0_13 = arith.constant 0 : index
    %c0_14 = arith.constant 0 : index
    %16 = vector.load %arg3[%c0_13, %c0_14] : memref<2x2xf32, #tpu.memory_space<vmem>>, vector<2x2xf32>
    tpu.vector_store %arg3[%c0_13, %c0_14], %15 {strides = array<i32>} : memref<2x2xf32, #tpu.memory_space<vmem>>, vector<2x2xf32>,
    return
  }
}

</mosaic_0001>

<llo_original>
// kernel: two_lenet5_forward.3
$region0: #{two_lenet5_forward.3}
  #allocation0 [shape = 'u32[]', space=smem, size = 0x4, offset = 0x4, fixed_abs, tag = 'smem constant byte address 0x4 - core index']
  #allocation1 [shape = 'u32[144,128]{1,0:T(1,128)}', space=vmem, size = 0x12000, scoped, tag = 'internal scratch']
  %s0 = inlined_call_operand.vmem [shape: f32[2,2,128], index: 0, kind: input, shape index: {}]
  %s1 = inlined_call_operand.vmem [shape: bf16[2,128,2], index: 1, kind: input, shape index: {}]
  %s2 = inlined_call_operand.vmem [shape: f32[1,2], index: 2, kind: input, shape index: {}]
  %s3 = inlined_call_operand.hbm [shape: f32[2,2], index: 3, kind: output, shape index: {}]
  %s4 = sld [smem:[#allocation0]]
  $region22: #{two_lenet5_forward.3} parent=0
    _
  %s6 = ssub.s32 1, %s4
  %s7 = scalar_select 0, %s6, %s4
  $region1: #{two_lenet5_forward.3} parent=0
    #allocation2 [shape = 'u8[1024]{0}', space=vmem, size = 0x400, scoped, tag = 'output window, operand 0, single buffered']
    #allocation3 [shape = 's32[1]{0}', space=sflag, size = 0x4, scoped, tag = 'scoped memory for two_lenet5_forward.3']
    %8 = vsyncpa [#allocation3], 0
    // Predicated region
    $region2: #{two_lenet5_forward.3} parent=1 // pred_check
      _
    $region3: #{two_lenet5_forward.3} parent=1 // pred_check_branch
      %10 = sbr.rel (0) target = $region5
    $region4: #{two_lenet5_forward.3} parent=1 // pred_region
      _
    $region5: #{two_lenet5_forward.3} parent=1 // pred_fallthru
      _
    // Predicated region
    $region6: #{two_lenet5_forward.3} parent=1 // pred_check
      _
    $region7: #{two_lenet5_forward.3} parent=1 // pred_check_branch
      %12 = sbr.rel (0) target = $region9
    $region8: #{two_lenet5_forward.3} parent=1 // pred_region
      _
    $region9: #{two_lenet5_forward.3} parent=1 // pred_fallthru
      _
    // Predicated region
    $region10: #{two_lenet5_forward.3} parent=1 // pred_check
      _
    $region11: #{two_lenet5_forward.3} parent=1 // pred_check_branch
      %14 = sbr.rel (0) target = $region13
    $region12: #{two_lenet5_forward.3} parent=1 // pred_region
      _
    $region13: #{two_lenet5_forward.3} parent=1 // pred_fallthru
      _
    %v16 = vld [vmem:[%s0] sm:$0x3]
    %v17 = vpack.c.bf16 %v16, %v16
    %s18 = scalar_lea.vmem %s0, 2
    %v19 = vld [vmem:[%s18] sm:$0x3]
    %v20 = vpack.c.bf16 %v19, %v19
    %v21 = vld [vmem:[%s1] sm:$0xf]
    %v22 = vld [vmem:[%s1 + $0x4] sm:$0xf]
    %v23 = vld [vmem:[%s1 + $0x8] sm:$0xf]
    %v24 = vld [vmem:[%s1 + $0xc] sm:$0xf]
    %v25 = vld [vmem:[%s1 + $0x10] sm:$0xf]
    %v26 = vld [vmem:[%s1 + $0x14] sm:$0xf]
    %v27 = vld [vmem:[%s1 + $0x18] sm:$0xf]
    %v28 = vld [vmem:[%s1 + $0x1c] sm:$0xf]
    %v29 = vld [vmem:[%s1 + $0x20] sm:$0xf]
    %v30 = vld [vmem:[%s1 + $0x24] sm:$0xf]
    %v31 = vld [vmem:[%s1 + $0x28] sm:$0xf]
    %v32 = vld [vmem:[%s1 + $0x2c] sm:$0xf]
    %v33 = vld [vmem:[%s1 + $0x30] sm:$0xf]
    %v34 = vld [vmem:[%s1 + $0x34] sm:$0xf]
    %v35 = vld [vmem:[%s1 + $0x38] sm:$0xf]
    %v36 = vld [vmem:[%s1 + $0x3c] sm:$0xf]
    %s37 = scalar_lea.vmem %s1, 64
    %v38 = vld [vmem:[%s37] sm:$0xf]
    %v39 = vld [vmem:[%s37 + $0x4] sm:$0xf]
    %v40 = vld [vmem:[%s37 + $0x8] sm:$0xf]
    %v41 = vld [vmem:[%s37 + $0xc] sm:$0xf]
    %v42 = vld [vmem:[%s37 + $0x10] sm:$0xf]
    %v43 = vld [vmem:[%s37 + $0x14] sm:$0xf]
    %v44 = vld [vmem:[%s37 + $0x18] sm:$0xf]
    %v45 = vld [vmem:[%s37 + $0x1c] sm:$0xf]
    %v46 = vld [vmem:[%s37 + $0x20] sm:$0xf]
    %v47 = vld [vmem:[%s37 + $0x24] sm:$0xf]
    %v48 = vld [vmem:[%s37 + $0x28] sm:$0xf]
    %v49 = vld [vmem:[%s37 + $0x2c] sm:$0xf]
    %v50 = vld [vmem:[%s37 + $0x30] sm:$0xf]
    %v51 = vld [vmem:[%s37 + $0x34] sm:$0xf]
    %v52 = vld [vmem:[%s37 + $0x38] sm:$0xf]
    %v53 = vld [vmem:[%s37 + $0x3c] sm:$0xf]
    %v70 = vunpack.c.l.b16 %v38
    %v71 = vunpack.c.l.b16 %v39
    %v72 = vunpack.c.l.b16 %v40
    %v73 = vunpack.c.l.b16 %v41
    %v74 = vunpack.c.l.b16 %v42
    %v75 = vunpack.c.l.b16 %v43
    %v76 = vunpack.c.l.b16 %v44
    %v77 = vunpack.c.l.b16 %v45
    %v78 = vunpack.c.l.b16 %v46
    %v79 = vunpack.c.l.b16 %v47
    %v80 = vunpack.c.l.b16 %v48
    %v81 = vunpack.c.l.b16 %v49
    %v82 = vunpack.c.l.b16 %v50
    %v83 = vunpack.c.l.b16 %v51
    %v84 = vunpack.c.l.b16 %v52
    %v85 = vunpack.c.l.b16 %v53
    %v86 = vpack.c.b16 %v71, %v70
    %v87 = vpack.c.b16 %v73, %v72
    %v88 = vpack.c.b16 %v75, %v74
    %v89 = vpack.c.b16 %v77, %v76
    %v90 = vpack.c.b16 %v79, %v78
    %v91 = vpack.c.b16 %v81, %v80
    %v92 = vpack.c.b16 %v83, %v82
    %v93 = vpack.c.b16 %v85, %v84
    %102 = vmatprep.subr.bf16.mxu0 0
    %103 = vmatpush1.bf16.msra.mxu0 %v86
    %104 = vmatprep.subr.bf16.mxu0 0
    %105 = vmatpush1.bf16.msra.mxu0 %v87
    %106 = vmatprep.subr.bf16.mxu0 0
    %107 = vmatpush1.bf16.msra.mxu0 %v88
    %108 = vmatprep.subr.bf16.mxu0 0
    %109 = vmatpush1.bf16.msra.mxu0 %v89
    %110 = vmatprep.subr.bf16.mxu0 0
    %111 = vmatpush1.bf16.msra.mxu0 %v90
    %112 = vmatprep.subr.bf16.mxu0 0
    %113 = vmatpush1.bf16.msra.mxu0 %v91
    %114 = vmatprep.subr.bf16.mxu0 0
    %115 = vmatpush1.bf16.msra.mxu0 %v92
    %116 = vmatprep.subr.bf16.mxu0 0
    %117 = vmatpush1.bf16.msra.mxu0 %v93
    %118 = vmatprep.subr.bf16.mxu0 0
    %119 = vmatpush1.bf16.msra.mxu0 0
    %120 = vmatprep.subr.bf16.mxu0 0
    %121 = vmatpush1.bf16.msra.mxu0 0
    %122 = vmatprep.subr.bf16.mxu0 0
    %123 = vmatpush1.bf16.msra.mxu0 0
    %124 = vmatprep.subr.bf16.mxu0 0
    %125 = vmatpush1.bf16.msra.mxu0 0
    %126 = vmatprep.subr.bf16.mxu0 0
    %127 = vmatpush1.bf16.msra.mxu0 0
    %128 = vmatprep.subr.bf16.mxu0 0
    %129 = vmatpush1.bf16.msra.mxu0 0
    %130 = vmatprep.subr.bf16.mxu0 0
    %131 = vmatpush1.bf16.msra.mxu0 0
    %132 = vmatprep.subr.bf16.mxu0 0
    %133 = vmatpush1.bf16.msra.mxu0 0
    %134 = vmatprep.mubr.bf16.mxu0 0
    %135 = vmatmul.mubr.bf16.gmra.mrb[0].mxu0 %v20
    %v136 = vpop.f32.mrb[0].mxu0
    %v137 = vadd.f32 0.0, %v136
    %v138 = vpop.f32.mrb[0].mxu0
    %v139 = vpop.f32.mrb[0].mxu0
    %v140 = vpop.f32.mrb[0].mxu0
    %141 = vdwg.mxu0
    %v158 = vunpack.c.l.b16 %v21
    %v159 = vunpack.c.l.b16 %v22
    %v160 = vunpack.c.l.b16 %v23
    %v161 = vunpack.c.l.b16 %v24
    %v162 = vunpack.c.l.b16 %v25
    %v163 = vunpack.c.l.b16 %v26
    %v164 = vunpack.c.l.b16 %v27
    %v165 = vunpack.c.l.b16 %v28
    %v166 = vunpack.c.l.b16 %v29
    %v167 = vunpack.c.l.b16 %v30
    %v168 = vunpack.c.l.b16 %v31
    %v169 = vunpack.c.l.b16 %v32
    %v170 = vunpack.c.l.b16 %v33
    %v171 = vunpack.c.l.b16 %v34
    %v172 = vunpack.c.l.b16 %v35
    %v173 = vunpack.c.l.b16 %v36
    %v174 = vpack.c.b16 %v159, %v158
    %v175 = vpack.c.b16 %v161, %v160
    %v176 = vpack.c.b16 %v163, %v162
    %v177 = vpack.c.b16 %v165, %v164
    %v178 = vpack.c.b16 %v167, %v166
    %v179 = vpack.c.b16 %v169, %v168
    %v180 = vpack.c.b16 %v171, %v170
    %v181 = vpack.c.b16 %v173, %v172
    %190 = vmatprep.subr.bf16.mxu0 0
    %191 = vmatpush1.bf16.msra.mxu0 %v174
    %192 = vmatprep.subr.bf16.mxu0 0
    %193 = vmatpush1.bf16.msra.mxu0 %v175
    %194 = vmatprep.subr.bf16.mxu0 0
    %195 = vmatpush1.bf16.msra.mxu0 %v176
    %196 = vmatprep.subr.bf16.mxu0 0
    %197 = vmatpush1.bf16.msra.mxu0 %v177
    %198 = vmatprep.subr.bf16.mxu0 0
    %199 = vmatpush1.bf16.msra.mxu0 %v178
    %200 = vmatprep.subr.bf16.mxu0 0
    %201 = vmatpush1.bf16.msra.mxu0 %v179
    %202 = vmatprep.subr.bf16.mxu0 0
    %203 = vmatpush1.bf16.msra.mxu0 %v180
    %204 = vmatprep.subr.bf16.mxu0 0
    %205 = vmatpush1.bf16.msra.mxu0 %v181
    %206 = vmatprep.subr.bf16.mxu0 0
    %207 = vmatpush1.bf16.msra.mxu0 0
    %208 = vmatprep.subr.bf16.mxu0 0
    %209 = vmatpush1.bf16.msra.mxu0 0
    %210 = vmatprep.subr.bf16.mxu0 0
    %211 = vmatpush1.bf16.msra.mxu0 0
    %212 = vmatprep.subr.bf16.mxu0 0
    %213 = vmatpush1.bf16.msra.mxu0 0
    %214 = vmatprep.subr.bf16.mxu0 0
    %215 = vmatpush1.bf16.msra.mxu0 0
    %216 = vmatprep.subr.bf16.mxu0 0
    %217 = vmatpush1.bf16.msra.mxu0 0
    %218 = vmatprep.subr.bf16.mxu0 0
    %219 = vmatpush1.bf16.msra.mxu0 0
    %220 = vmatprep.subr.bf16.mxu0 0
    %221 = vmatpush1.bf16.msra.mxu0 0
    %222 = vmatprep.mubr.bf16.mxu0 0
    %223 = vmatmul.mubr.bf16.gmra.mrb[0].mxu0 %v17
    %v224 = vpop.f32.mrb[0].mxu0
    %v225 = vadd.f32 %v137, %v224
    %v226 = vpop.f32.mrb[0].mxu0
    %v227 = vpop.f32.mrb[0].mxu0
    %v228 = vpop.f32.mrb[0].mxu0
    %229 = vdwg.mxu0
    %v230 = vld [vmem:[%s2] sm:$0x1]
    %v232 = vlaneseq
    %v233 = vshrl.u32 %v232, 7
    %v234 = vsub.s32 0, %v233
    %v235 = vrot.slane %v230, %v234
    %v237 = vadd.f32 %v225, %v235
    %vm238 = vcmask 9216
    %239 = vst.msk [vmem:[#allocation2] sm:$0x3] %vm238, %v237
    // Predicated region
    $region14: #{two_lenet5_forward.3} parent=1 // pred_check
      _
    $region15: #{two_lenet5_forward.3} parent=1 // pred_check_branch
      %241 = sbr.rel (0) target = $region17
    $region16: #{two_lenet5_forward.3} parent=1 // pred_region
      %s243 = ssub.s32 32, 32
      %244 = vsyncadd [#allocation3], %s243
      %s246 = sshll.u32 [#allocation2], 4
      %s247 = int_to_ptr.vmem [resolvable:$true] %s246
      %249 = dma.vmem_to_hbm [thread:$0]  %s247, 32, %s3, [#allocation3]
    $region17: #{two_lenet5_forward.3} parent=1 // pred_fallthru
      _
    // Predicated region
    $region18: #{two_lenet5_forward.3} parent=1 // pred_check
      _
    $region19: #{two_lenet5_forward.3} parent=1 // pred_check_branch
      %251 = sbr.rel (0) target = $region21
    $region20: #{two_lenet5_forward.3} parent=1 // pred_region
      %252 = dma.done [#allocation3], 32
    $region21: #{two_lenet5_forward.3} parent=1 // pred_fallthru
      _
    %253 = vsyncpa [#allocation3], 1

// kernel: two_lenet5_forward.2
$region0: #{two_lenet5_forward.2}
  #allocation0 [shape = 'u32[]', space=smem, size = 0x4, offset = 0x4, fixed_abs, tag = 'smem constant byte address 0x4 - core index']
  #allocation1 [shape = 'u32[144,128]{1,0:T(1,128)}', space=vmem, size = 0x12000, scoped, tag = 'internal scratch']
  %s0 = inlined_call_operand.vmem [shape: f32[2,2,18,18], index: 0, kind: input, shape index: {}]
  %s1 = inlined_call_operand.vmem [shape: bf16[2,5,18,112], index: 1, kind: input, shape index: {}]
  %s2 = inlined_call_operand.vmem [shape: bf16[2,5,112,320], index: 2, kind: input, shape index: {}]
  %s3 = inlined_call_operand.vmem [shape: bf16[2,800,64], index: 3, kind: input, shape index: {}]
  %s4 = inlined_call_operand.vmem [shape: bf16[2,64,32], index: 4, kind: input, shape index: {}]
  %s5 = inlined_call_operand.vmem [shape: bf16[2,32,16], index: 5, kind: input, shape index: {}]
  %s6 = inlined_call_operand.vmem [shape: bf16[2,16,128], index: 6, kind: input, shape index: {}]
  %s7 = inlined_call_operand.vmem [shape: f32[2,6,320], index: 7, kind: input, shape index: {}]
  %s8 = inlined_call_operand.vmem [shape: f32[2,2,128], index: 8, kind: output, shape index: {}]
  %s9 = sld [smem:[#allocation0]]
  $region65: #{two_lenet5_forward.2} parent=0
    _
  %s11 = ssub.s32 1, %s9
  %s12 = scalar_select 0, %s11, %s9
  loop: start=0, step=1, limit=4
  $region2: #{two_lenet5_forward.2} parent=0 // loop_pre_header
    _
  $region3: #{two_lenet5_forward.2} parent=0 // loop_header
    %s14 = sphi 0, %s18
    %p15 = scmp.ge.s32.totalorder %s14, 4
    %s24 = sphi 0, %s26
    %s27 = sphi 0, %s24
    %s28 = sphi 0, %s27
    %s44 = sphi 0, %s28
    %s50 = sphi 0, %s52
    %s53 = sphi 0, %s50
    %s54 = sphi 0, %s53
    %s70 = sphi 0, %s54
    %s76 = sphi 0, %s78
    %s79 = sphi 0, %s76
    %s80 = sphi 0, %s79
    %s96 = sphi 0, %s80
    %s102 = sphi 0, %s104
    %s105 = sphi 0, %s102
    %s106 = sphi 0, %s105
    %s122 = sphi 0, %s106
    %s128 = sphi 0, %s130
    %s131 = sphi 0, %s128
    %s132 = sphi 0, %s131
    %s148 = sphi 0, %s132
    %s154 = sphi 0, %s156
    %s157 = sphi 0, %s154
    %s158 = sphi 0, %s157
    %s174 = sphi 0, %s158
    %s180 = sphi 0, %s182
    %s183 = sphi 0, %s180
    %s184 = sphi 0, %s183
    %s200 = sphi 0, %s184
    %s206 = sphi 0, %s208
    %s209 = sphi 0, %s206
    %s210 = sphi 0, %s209
    %s226 = sphi 0, %s210
    %s232 = sphi 0, %s234
    %s235 = sphi 0, %s232
    %s236 = sphi 0, %s235
    %s252 = sphi 0, %s236
  $region4: #{two_lenet5_forward.2} parent=0 // loop_header_branch
    %17 = sbr.rel (%p15) target = $region8
  $region5: #{two_lenet5_forward.2} parent=0 // loop_body
    %s19 = ssub.s32 %s14, 1
    %s20 = ssub.s32 %s14, 2
    %s21 = sadd.s32 %s14, 1
    %s22 = ssub.s32 %s14, %s21
    %p23 = scmp.eq.s32.totalorder %s22, 0
    %s25 = sadd.s32 %s24, 1
    %s26 = scalar_select %p23, %s24, %s25
    %p29 = pneg %p23
    %p30 = scmp.eq.s32.totalorder %s14, 1
    %p31 = por %p29, %p30
    %p32 = scmp.ne.s32.totalorder %s24, %s27
    %p33 = scmp.eq.s32.totalorder %s14, 0
    %p34 = por %p32, %p33
    %p35 = scmp.ne.s32.totalorder %s24, %s27
    %p36 = scmp.eq.s32.totalorder %s19, 1
    %p37 = por %p35, %p36
    %p38 = scmp.ne.s32.totalorder %s27, %s28
    %p39 = scmp.eq.s32.totalorder %s19, 0
    %p40 = por %p38, %p39
    %p41 = scmp.ne.s32.totalorder %s27, %s28
    %p42 = scmp.eq.s32.totalorder %s20, 1
    %p43 = por %p41, %p42
    %p45 = scmp.ne.s32.totalorder %s28, %s44
    %p46 = scmp.eq.s32.totalorder %s20, 0
    %p47 = por %p45, %p46
    %s48 = ssub.s32 %s14, %s21
    %p49 = scmp.eq.s32.totalorder %s48, 0
    %s51 = sadd.s32 %s50, 1
    %s52 = scalar_select %p49, %s50, %s51
    %p55 = pneg %p49
    %p56 = scmp.eq.s32.totalorder %s14, 1
    %p57 = por %p55, %p56
    %p58 = scmp.ne.s32.totalorder %s50, %s53
    %p59 = scmp.eq.s32.totalorder %s14, 0
    %p60 = por %p58, %p59
    %p61 = scmp.ne.s32.totalorder %s50, %s53
    %p62 = scmp.eq.s32.totalorder %s19, 1
    %p63 = por %p61, %p62
    %p64 = scmp.ne.s32.totalorder %s53, %s54
    %p65 = scmp.eq.s32.totalorder %s19, 0
    %p66 = por %p64, %p65
    %p67 = scmp.ne.s32.totalorder %s53, %s54
    %p68 = scmp.eq.s32.totalorder %s20, 1
    %p69 = por %p67, %p68
    %p71 = scmp.ne.s32.totalorder %s54, %s70
    %p72 = scmp.eq.s32.totalorder %s20, 0
    %p73 = por %p71, %p72
    %s74 = ssub.s32 %s14, %s21
    %p75 = scmp.eq.s32.totalorder %s74, 0
    %s77 = sadd.s32 %s76, 1
    %s78 = scalar_select %p75, %s76, %s77
    %p81 = pneg %p75
    %p82 = scmp.eq.s32.totalorder %s14, 1
    %p83 = por %p81, %p82
    %p84 = scmp.ne.s32.totalorder %s76, %s79
    %p85 = scmp.eq.s32.totalorder %s14, 0
    %p86 = por %p84, %p85
    %p87 = scmp.ne.s32.totalorder %s76, %s79
    %p88 = scmp.eq.s32.totalorder %s19, 1
    %p89 = por %p87, %p88
    %p90 = scmp.ne.s32.totalorder %s79, %s80
    %p91 = scmp.eq.s32.totalorder %s19, 0
    %p92 = por %p90, %p91
    %p93 = scmp.ne.s32.totalorder %s79, %s80
    %p94 = scmp.eq.s32.totalorder %s20, 1
    %p95 = por %p93, %p94
    %p97 = scmp.ne.s32.totalorder %s80, %s96
    %p98 = scmp.eq.s32.totalorder %s20, 0
    %p99 = por %p97, %p98
    %s100 = ssub.s32 %s14, %s21
    %p101 = scmp.eq.s32.totalorder %s100, 0
    %s103 = sadd.s32 %s102, 1
    %s104 = scalar_select %p101, %s102, %s103
    %p107 = pneg %p101
    %p108 = scmp.eq.s32.totalorder %s14, 1
    %p109 = por %p107, %p108
    %p110 = scmp.ne.s32.totalorder %s102, %s105
    %p111 = scmp.eq.s32.totalorder %s14, 0
    %p112 = por %p110, %p111
    %p113 = scmp.ne.s32.totalorder %s102, %s105
    %p114 = scmp.eq.s32.totalorder %s19, 1
    %p115 = por %p113, %p114
    %p116 = scmp.ne.s32.totalorder %s105, %s106
    %p117 = scmp.eq.s32.totalorder %s19, 0
    %p118 = por %p116, %p117
    %p119 = scmp.ne.s32.totalorder %s105, %s106
    %p120 = scmp.eq.s32.totalorder %s20, 1
    %p121 = por %p119, %p120
    %p123 = scmp.ne.s32.totalorder %s106, %s122
    %p124 = scmp.eq.s32.totalorder %s20, 0
    %p125 = por %p123, %p124
    %s126 = ssub.s32 %s14, %s21
    %p127 = scmp.eq.s32.totalorder %s126, 0
    %s129 = sadd.s32 %s128, 1
    %s130 = scalar_select %p127, %s128, %s129
    %p133 = pneg %p127
    %p134 = scmp.eq.s32.totalorder %s14, 1
    %p135 = por %p133, %p134
    %p136 = scmp.ne.s32.totalorder %s128, %s131
    %p137 = scmp.eq.s32.totalorder %s14, 0
    %p138 = por %p136, %p137
    %p139 = scmp.ne.s32.totalorder %s128, %s131
    %p140 = scmp.eq.s32.totalorder %s19, 1
    %p141 = por %p139, %p140
    %p142 = scmp.ne.s32.totalorder %s131, %s132
    %p143 = scmp.eq.s32.totalorder %s19, 0
    %p144 = por %p142, %p143
    %p145 = scmp.ne.s32.totalorder %s131, %s132
    %p146 = scmp.eq.s32.totalorder %s20, 1
    %p147 = por %p145, %p146
    %p149 = scmp.ne.s32.totalorder %s132, %s148
    %p150 = scmp.eq.s32.totalorder %s20, 0
    %p151 = por %p149, %p150
    %s152 = ssub.s32 %s14, %s21
    %p153 = scmp.eq.s32.totalorder %s152, 0
    %s155 = sadd.s32 %s154, 1
    %s156 = scalar_select %p153, %s154, %s155
    %p159 = pneg %p153
    %p160 = scmp.eq.s32.totalorder %s14, 1
    %p161 = por %p159, %p160
    %p162 = scmp.ne.s32.totalorder %s154, %s157
    %p163 = scmp.eq.s32.totalorder %s14, 0
    %p164 = por %p162, %p163
    %p165 = scmp.ne.s32.totalorder %s154, %s157
    %p166 = scmp.eq.s32.totalorder %s19, 1
    %p167 = por %p165, %p166
    %p168 = scmp.ne.s32.totalorder %s157, %s158
    %p169 = scmp.eq.s32.totalorder %s19, 0
    %p170 = por %p168, %p169
    %p171 = scmp.ne.s32.totalorder %s157, %s158
    %p172 = scmp.eq.s32.totalorder %s20, 1
    %p173 = por %p171, %p172
    %p175 = scmp.ne.s32.totalorder %s158, %s174
    %p176 = scmp.eq.s32.totalorder %s20, 0
    %p177 = por %p175, %p176
    %s178 = ssub.s32 %s14, %s21
    %p179 = scmp.eq.s32.totalorder %s178, 0
    %s181 = sadd.s32 %s180, 1
    %s182 = scalar_select %p179, %s180, %s181
    %p185 = pneg %p179
    %p186 = scmp.eq.s32.totalorder %s14, 1
    %p187 = por %p185, %p186
    %p188 = scmp.ne.s32.totalorder %s180, %s183
    %p189 = scmp.eq.s32.totalorder %s14, 0
    %p190 = por %p188, %p189
    %p191 = scmp.ne.s32.totalorder %s180, %s183
    %p192 = scmp.eq.s32.totalorder %s19, 1
    %p193 = por %p191, %p192
    %p194 = scmp.ne.s32.totalorder %s183, %s184
    %p195 = scmp.eq.s32.totalorder %s19, 0
    %p196 = por %p194, %p195
    %p197 = scmp.ne.s32.totalorder %s183, %s184
    %p198 = scmp.eq.s32.totalorder %s20, 1
    %p199 = por %p197, %p198
    %p201 = scmp.ne.s32.totalorder %s184, %s200
    %p202 = scmp.eq.s32.totalorder %s20, 0
    %p203 = por %p201, %p202
    %s204 = ssub.s32 %s14, %s21
    %p205 = scmp.eq.s32.totalorder %s204, 0
    %s207 = sadd.s32 %s206, 1
    %s208 = scalar_select %p205, %s206, %s207
    %p211 = pneg %p205
    %p212 = scmp.eq.s32.totalorder %s14, 1
    %p213 = por %p211, %p212
    %p214 = scmp.ne.s32.totalorder %s206, %s209
    %p215 = scmp.eq.s32.totalorder %s14, 0
    %p216 = por %p214, %p215
    %p217 = scmp.ne.s32.totalorder %s206, %s209
    %p218 = scmp.eq.s32.totalorder %s19, 1
    %p219 = por %p217, %p218
    %p220 = scmp.ne.s32.totalorder %s209, %s210
    %p221 = scmp.eq.s32.totalorder %s19, 0
    %p222 = por %p220, %p221
    %p223 = scmp.ne.s32.totalorder %s209, %s210
    %p224 = scmp.eq.s32.totalorder %s20, 1
    %p225 = por %p223, %p224
    %p227 = scmp.ne.s32.totalorder %s210, %s226
    %p228 = scmp.eq.s32.totalorder %s20, 0
    %p229 = por %p227, %p228
    %s230 = ssub.s32 %s14, %s21
    %p231 = scmp.eq.s32.totalorder %s230, 0
    %s233 = sadd.s32 %s232, 1
    %s234 = scalar_select %p231, %s232, %s233
    %p237 = pneg %p231
    %p238 = scmp.eq.s32.totalorder %s14, 1
    %p239 = por %p237, %p238
    %p240 = scmp.ne.s32.totalorder %s232, %s235
    %p241 = scmp.eq.s32.totalorder %s14, 0
    %p242 = por %p240, %p241
    %p243 = scmp.ne.s32.totalorder %s232, %s235
    %p244 = scmp.eq.s32.totalorder %s19, 1
    %p245 = por %p243, %p244
    %p246 = scmp.ne.s32.totalorder %s235, %s236
    %p247 = scmp.eq.s32.totalorder %s19, 0
    %p248 = por %p246, %p247
    %p249 = scmp.ne.s32.totalorder %s235, %s236
    %p250 = scmp.eq.s32.totalorder %s20, 1
    %p251 = por %p249, %p250
    %p253 = scmp.ne.s32.totalorder %s236, %s252
    %p254 = scmp.eq.s32.totalorder %s20, 0
    %p255 = por %p253, %p254
    %p256 = scmp.le.s32.totalorder 1, %s14
    %p257 = scmp.lt.s32.totalorder %s14, 3
    %p258 = pnand %p256, %p257
    %p259 = pneg %p258
    // Predicated region
    $region9: #{two_lenet5_forward.2} parent=5 // pred_check
      _
    $region10: #{two_lenet5_forward.2} parent=5 // pred_check_branch
      %261 = sbr.rel (%p258) target = $region12
    $region11: #{two_lenet5_forward.2} parent=5 // pred_region
      %s262 = ssub.s32 %s14, 1
    $region12: #{two_lenet5_forward.2} parent=5 // pred_fallthru
      _
    %p263 = scmp.lt.s32.totalorder %s14, 2
    // Predicated region
    $region13: #{two_lenet5_forward.2} parent=5 // pred_check
      %p264 = pneg %p263
    $region14: #{two_lenet5_forward.2} parent=5 // pred_check_branch
      %266 = sbr.rel (%p264) target = $region16
    $region15: #{two_lenet5_forward.2} parent=5 // pred_region
      // Predicated region
      $region17: #{two_lenet5_forward.2} parent=15 // pred_check
        %p267 = pneg %p34
      $region18: #{two_lenet5_forward.2} parent=15 // pred_check_branch
        %269 = sbr.rel (%p267) target = $region20
      $region19: #{two_lenet5_forward.2} parent=15 // pred_region
        %p270 = scmp.lt.s32.totalorder %s14, 1
        %s271 = scalar_select %p270, %s14, 1
        %s272 = smul.addr %s271, 6
        %s273 = smul.addr %s272, 8
        %s274 = scalar_lea.vmem %s0, %s273
      $region20: #{two_lenet5_forward.2} parent=15 // pred_fallthru
        _
      // Predicated region
      $region21: #{two_lenet5_forward.2} parent=15 // pred_check
        %p275 = pneg %p60
      $region22: #{two_lenet5_forward.2} parent=15 // pred_check_branch
        %277 = sbr.rel (%p275) target = $region24
      $region23: #{two_lenet5_forward.2} parent=15 // pred_region
        %p278 = scmp.lt.s32.totalorder %s14, 1
        %s279 = scalar_select %p278, %s14, 1
        %s280 = smul.addr %s279, 15
        %s281 = smul.addr %s280, 4
        %s282 = scalar_lea.vmem %s1, %s281
      $region24: #{two_lenet5_forward.2} parent=15 // pred_fallthru
        _
      // Predicated region
      $region25: #{two_lenet5_forward.2} parent=15 // pred_check
        %p283 = pneg %p86
      $region26: #{two_lenet5_forward.2} parent=15 // pred_check_branch
        %285 = sbr.rel (%p283) target = $region28
      $region27: #{two_lenet5_forward.2} parent=15 // pred_region
        %p286 = scmp.lt.s32.totalorder %s14, 1
        %s287 = scalar_select %p286, %s14, 1
        %s288 = smul.addr %s287, 210
        %s289 = smul.addr %s288, 4
        %s290 = scalar_lea.vmem %s2, %s289
      $region28: #{two_lenet5_forward.2} parent=15 // pred_fallthru
        _
      // Predicated region
      $region29: #{two_lenet5_forward.2} parent=15 // pred_check
        %p291 = pneg %p112
      $region30: #{two_lenet5_forward.2} parent=15 // pred_check_branch
        %293 = sbr.rel (%p291) target = $region32
      $region31: #{two_lenet5_forward.2} parent=15 // pred_region
        %p294 = scmp.lt.s32.totalorder %s14, 1
        %s295 = scalar_select %p294, %s14, 1
        %s296 = smul.addr %s295, 100
        %s297 = smul.addr %s296, 4
        %s298 = scalar_lea.vmem %s3, %s297
      $region32: #{two_lenet5_forward.2} parent=15 // pred_fallthru
        _
      // Predicated region
      $region33: #{two_lenet5_forward.2} parent=15 // pred_check
        %p299 = pneg %p138
      $region34: #{two_lenet5_forward.2} parent=15 // pred_check_branch
        %301 = sbr.rel (%p299) target = $region36
      $region35: #{two_lenet5_forward.2} parent=15 // pred_region
        %p302 = scmp.lt.s32.totalorder %s14, 1
        %s303 = scalar_select %p302, %s14, 1
        %s304 = smul.addr %s303, 8
        %s305 = smul.addr %s304, 4
        %s306 = scalar_lea.vmem %s4, %s305
      $region36: #{two_lenet5_forward.2} parent=15 // pred_fallthru
        _
      // Predicated region
      $region37: #{two_lenet5_forward.2} parent=15 // pred_check
        %p307 = pneg %p164
      $region38: #{two_lenet5_forward.2} parent=15 // pred_check_branch
        %309 = sbr.rel (%p307) target = $region40
      $region39: #{two_lenet5_forward.2} parent=15 // pred_region
        %p310 = scmp.lt.s32.totalorder %s14, 1
        %s311 = scalar_select %p310, %s14, 1
        %s312 = smul.addr %s311, 4
        %s313 = smul.addr %s312, 4
        %s314 = scalar_lea.vmem %s5, %s313
      $region40: #{two_lenet5_forward.2} parent=15 // pred_fallthru
        _
      // Predicated region
      $region41: #{two_lenet5_forward.2} parent=15 // pred_check
        %p315 = pneg %p190
      $region42: #{two_lenet5_forward.2} parent=15 // pred_check_branch
        %317 = sbr.rel (%p315) target = $region44
      $region43: #{two_lenet5_forward.2} parent=15 // pred_region
        %p318 = scmp.lt.s32.totalorder %s14, 1
        %s319 = scalar_select %p318, %s14, 1
        %s320 = smul.addr %s319, 2
        %s321 = smul.addr %s320, 4
        %s322 = scalar_lea.vmem %s6, %s321
      $region44: #{two_lenet5_forward.2} parent=15 // pred_fallthru
        _
      // Predicated region
      $region45: #{two_lenet5_forward.2} parent=15 // pred_check
        %p323 = pneg %p216
      $region46: #{two_lenet5_forward.2} parent=15 // pred_check_branch
        %325 = sbr.rel (%p323) target = $region48
      $region47: #{two_lenet5_forward.2} parent=15 // pred_region
        %p326 = scmp.lt.s32.totalorder %s14, 1
        %s327 = scalar_select %p326, %s14, 1
        %s328 = smul.addr %s327, 3
        %s329 = smul.addr %s328, 8
        %s330 = scalar_lea.vmem %s7, %s329
      $region48: #{two_lenet5_forward.2} parent=15 // pred_fallthru
        _
    $region16: #{two_lenet5_forward.2} parent=5 // pred_fallthru
      _
    %p331 = scmp.le.s32.totalorder 1, %s14
    %p332 = scmp.lt.s32.totalorder %s14, 3
    %p333 = pnand %p331, %p332
    %p334 = pneg %p333
    // Predicated region
    $region49: #{two_lenet5_forward.2} parent=5 // pred_check
      _
    $region50: #{two_lenet5_forward.2} parent=5 // pred_check_branch
      %336 = sbr.rel (%p333) target = $region52
    $region51: #{two_lenet5_forward.2} parent=5 // pred_region
      %s337 = ssub.s32 %s14, 1
      %p338 = scmp.lt.s32.totalorder %s19, 1
      %s339 = scalar_select %p338, %s19, 1
      %s340 = smul.addr %s339, 6
      %s341 = smul.addr %s340, 8
      %s342 = scalar_lea.vmem %s0, %s341
      %p343 = pneg %p40
      %p344 = pneg %p37
      %p345 = scmp.lt.s32.totalorder %s19, 1
      %s346 = scalar_select %p345, %s19, 1
      %s347 = smul.addr %s346, 15
      %s348 = smul.addr %s347, 4
      %s349 = scalar_lea.vmem %s1, %s348
      %p350 = pneg %p66
      %p351 = pneg %p63
      %p352 = scmp.lt.s32.totalorder %s19, 1
      %s353 = scalar_select %p352, %s19, 1
      %s354 = smul.addr %s353, 210
      %s355 = smul.addr %s354, 4
      %s356 = scalar_lea.vmem %s2, %s355
      %p357 = pneg %p92
      %p358 = pneg %p89
      %p359 = scmp.lt.s32.totalorder %s19, 1
      %s360 = scalar_select %p359, %s19, 1
      %s361 = smul.addr %s360, 100
      %s362 = smul.addr %s361, 4
      %s363 = scalar_lea.vmem %s3, %s362
      %p364 = pneg %p118
      %p365 = pneg %p115
      %p366 = scmp.lt.s32.totalorder %s19, 1
      %s367 = scalar_select %p366, %s19, 1
      %s368 = smul.addr %s367, 8
      %s369 = smul.addr %s368, 4
      %s370 = scalar_lea.vmem %s4, %s369
      %p371 = pneg %p144
      %p372 = pneg %p141
      %p373 = scmp.lt.s32.totalorder %s19, 1
      %s374 = scalar_select %p373, %s19, 1
      %s375 = smul.addr %s374, 4
      %s376 = smul.addr %s375, 4
      %s377 = scalar_lea.vmem %s5, %s376
      %p378 = pneg %p170
      %p379 = pneg %p167
      %p380 = scmp.lt.s32.totalorder %s19, 1
      %s381 = scalar_select %p380, %s19, 1
      %s382 = smul.addr %s381, 2
      %s383 = smul.addr %s382, 4
      %s384 = scalar_lea.vmem %s6, %s383
      %p385 = pneg %p196
      %p386 = pneg %p193
      %p387 = scmp.lt.s32.totalorder %s19, 1
      %s388 = scalar_select %p387, %s19, 1
      %s389 = smul.addr %s388, 3
      %s390 = smul.addr %s389, 8
      %s391 = scalar_lea.vmem %s7, %s390
      %p392 = pneg %p222
      %p393 = pneg %p219
      %p394 = pneg %p248
      %p395 = pneg %p245
      %p396 = scmp.lt.s32.totalorder %s19, 1
      %s397 = scalar_select %p396, %s19, 1
      %s398 = smul.addr %s397, 2
      %s399 = scalar_lea.vmem %s8, %s398
      %p400 = scmp.lt.s32.totalorder %s19, 1
      %s401 = scalar_select %p400, %s19, 1
      %s402 = smul.addr %s401, 6
      %s403 = smul.addr %s402, 8
      %s404 = scalar_lea.vmem %s0, %s403
      %p405 = scmp.lt.s32.totalorder %s19, 1
      %s406 = scalar_select %p405, %s19, 1
      %s407 = smul.addr %s406, 15
      %s408 = smul.addr %s407, 4
      %s409 = scalar_lea.vmem %s1, %s408
      %p410 = scmp.lt.s32.totalorder %s19, 1
      %s411 = scalar_select %p410, %s19, 1
      %s412 = smul.addr %s411, 210
      %s413 = smul.addr %s412, 4
      %s414 = scalar_lea.vmem %s2, %s413
      %p415 = scmp.lt.s32.totalorder %s19, 1
      %s416 = scalar_select %p415, %s19, 1
      %s417 = smul.addr %s416, 100
      %s418 = smul.addr %s417, 4
      %s419 = scalar_lea.vmem %s3, %s418
      %p420 = scmp.lt.s32.totalorder %s19, 1
      %s421 = scalar_select %p420, %s19, 1
      %s422 = smul.addr %s421, 8
      %s423 = smul.addr %s422, 4
      %s424 = scalar_lea.vmem %s4, %s423
      %p425 = scmp.lt.s32.totalorder %s19, 1
      %s426 = scalar_select %p425, %s19, 1
      %s427 = smul.addr %s426, 4
      %s428 = smul.addr %s427, 4
      %s429 = scalar_lea.vmem %s5, %s428
      %p430 = scmp.lt.s32.totalorder %s19, 1
      %s431 = scalar_select %p430, %s19, 1
      %s432 = smul.addr %s431, 2
      %s433 = smul.addr %s432, 4
      %s434 = scalar_lea.vmem %s6, %s433
      %p435 = scmp.lt.s32.totalorder %s19, 1
      %s436 = scalar_select %p435, %s19, 1
      %s437 = smul.addr %s436, 3
      %s438 = smul.addr %s437, 8
      %s439 = scalar_lea.vmem %s7, %s438
      %p440 = scmp.lt.s32.totalorder %s19, 1
      %s441 = scalar_select %p440, %s19, 1
      %s442 = smul.addr %s441, 2
      %s443 = scalar_lea.vmem %s8, %s442
      %v445 = vld [vmem:[%s439] sm:$0x3f]
      %v446 = vld [vmem:[%s439 + $0x8] sm:$0x3f]
      %v447 = vld [vmem:[%s439 + $0x10] sm:$0x3f]
      %v448 = vld [vmem:[%s404] sm:$0xff]
      %v449 = vld [vmem:[%s404 + $0x8] sm:$0xff]
      %v450 = vld [vmem:[%s404 + $0x10] sm:$0x3]
      %v451 = vld [vmem:[%s404 + $0x18] sm:$0xff]
      %v452 = vld [vmem:[%s404 + $0x20] sm:$0xff]
      %v453 = vld [vmem:[%s404 + $0x28] sm:$0x3]
      %v454 = vpack.c.bf16 %v449, %v448
      %v455 = vpack.c.bf16 %v450, %v450
      %v456 = vpack.c.bf16 %v452, %v451
      %v457 = vpack.c.bf16 %v453, %v453
      %v459 = vrot.slane %v456, 1
      %vm460 = vcmask 1046528
      %v463 = vsel %vm460, %v454, %v459
      %v464 = vld [vmem:[%s409] sm:$0xf]
      %v465 = vld [vmem:[%s409 + $0x4] sm:$0xf]
      %v466 = vld [vmem:[%s409 + $0x8] sm:$0x1]
      %v467 = vshrl.u32 %v454, 16
      %v469 = vshll.u32 %v454, 16
      %v471 = vrot.slane %v469, 1
      %v472 = vor.u32 %v467, %v471
      %v474 = vshrl.u32 %v456, 16
      %v476 = vrot.slane %v474, 1
      %v477 = vshll.u32 %v456, 16
      %v479 = vrot.slane %v477, 2
      %v480 = vor.u32 %v476, %v479
      %v483 = vsel %vm460, %v472, %v480
      %s484 = scalar_lea.vmem %s409, 12
      %v485 = vld [vmem:[%s484] sm:$0xf]
      %v486 = vld [vmem:[%s484 + $0x4] sm:$0xf]
      %v487 = vld [vmem:[%s484 + $0x8] sm:$0x1]
      %v491 = vunpack.c.l.b16 %v485
      %v492 = vunpack.c.l.b16 %v486
      %v493 = vunpack.c.l.b16 %v487
      %v494 = vpack.c.b16 %v492, %v491
      %v495 = vpack.c.b16 %v493, %v493
      %vm497 = vcmask 146432
      %v498 = vsel %vm497, %v483, 0
      %v500 = vsel %vm497, %v480, 0
      %vm502 = vcmask 1040384
      %v504 = vsel %vm502, %v495, 0
      %506 = vmatprep.subr.bf16.mxu0 0
      %507 = vmatpush1.bf16.msra.mxu0 %v494
      %508 = vmatprep.subr.bf16.mxu0 0
      %509 = vmatpush1.bf16.msra.mxu0 %v504
      %510 = vmatprep.subr.bf16.mxu0 0
      %511 = vmatpush1.bf16.msra.mxu0 0
      %512 = vmatprep.subr.bf16.mxu0 0
      %513 = vmatpush1.bf16.msra.mxu0 0
      %514 = vmatprep.subr.bf16.mxu0 0
      %515 = vmatpush1.bf16.msra.mxu0 0
      %516 = vmatprep.subr.bf16.mxu0 0
      %517 = vmatpush1.bf16.msra.mxu0 0
      %518 = vmatprep.subr.bf16.mxu0 0
      %519 = vmatpush1.bf16.msra.mxu0 0
      %520 = vmatprep.subr.bf16.mxu0 0
      %521 = vmatpush1.bf16.msra.mxu0 0
      %522 = vmatprep.subr.bf16.mxu0 0
      %523 = vmatpush1.bf16.msra.mxu0 0
      %524 = vmatprep.subr.bf16.mxu0 0
      %525 = vmatpush1.bf16.msra.mxu0 0
      %526 = vmatprep.subr.bf16.mxu0 0
      %527 = vmatpush1.bf16.msra.mxu0 0
      %528 = vmatprep.subr.bf16.mxu0 0
      %529 = vmatpush1.bf16.msra.mxu0 0
      %530 = vmatprep.subr.bf16.mxu0 0
      %531 = vmatpush1.bf16.msra.mxu0 0
      %532 = vmatprep.subr.bf16.mxu0 0
      %533 = vmatpush1.bf16.msra.mxu0 0
      %534 = vmatprep.subr.bf16.mxu0 0
      %535 = vmatpush1.bf16.msra.mxu0 0
      %536 = vmatprep.subr.bf16.mxu0 0
      %537 = vmatpush1.bf16.msra.mxu0 0
      %538 = vmatprep.mubr.bf16.mxu0 0
      %539 = vmatmul.mubr.bf16.gmra.mrb[0].mxu0 %v498
      %v540 = vpop.f32.mrb[0].mxu0
      %v541 = vadd.f32 0.0, %v540
      %v542 = vpop.f32.mrb[0].mxu0
      %v543 = vpop.f32.mrb[0].mxu0
      %v544 = vadd.f32 0.0, %v543
      %v545 = vpop.f32.mrb[0].mxu0
      %546 = vmatprep.mubr.bf16.mxu0 0
      %547 = vmatmul.mubr.bf16.gmra.mrb[0].mxu0 %v500
      %v548 = vpop.f32.mrb[0].mxu0
      %v549 = vadd.f32 0.0, %v548
      %v550 = vpop.f32.mrb[0].mxu0
      %v551 = vpop.f32.mrb[0].mxu0
      %v552 = vadd.f32 0.0, %v551
      %v553 = vpop.f32.mrb[0].mxu0
      %554 = vdwg.mxu0
      %v558 = vunpack.c.l.b16 %v464
      %v559 = vunpack.c.l.b16 %v465
      %v560 = vunpack.c.l.b16 %v466
      %v561 = vpack.c.b16 %v559, %v558
      %v562 = vpack.c.b16 %v560, %v560
      %v564 = vsel %vm497, %v463, 0
      %v566 = vsel %vm497, %v459, 0
      %v569 = vsel %vm502, %v562, 0
      %571 = vmatprep.subr.bf16.mxu0 0
      %572 = vmatpush1.bf16.msra.mxu0 %v561
      %573 = vmatprep.subr.bf16.mxu0 0
      %574 = vmatpush1.bf16.msra.mxu0 %v569
      %575 = vmatprep.subr.bf16.mxu0 0
      %576 = vmatpush1.bf16.msra.mxu0 0
      %577 = vmatprep.subr.bf16.mxu0 0
      %578 = vmatpush1.bf16.msra.mxu0 0
      %579 = vmatprep.subr.bf16.mxu0 0
      %580 = vmatpush1.bf16.msra.mxu0 0
      %581 = vmatprep.subr.bf16.mxu0 0
      %582 = vmatpush1.bf16.msra.mxu0 0
      %583 = vmatprep.subr.bf16.mxu0 0
      %584 = vmatpush1.bf16.msra.mxu0 0
      %585 = vmatprep.subr.bf16.mxu0 0
      %586 = vmatpush1.bf16.msra.mxu0 0
      %587 = vmatprep.subr.bf16.mxu0 0
      %588 = vmatpush1.bf16.msra.mxu0 0
      %589 = vmatprep.subr.bf16.mxu0 0
      %590 = vmatpush1.bf16.msra.mxu0 0
      %591 = vmatprep.subr.bf16.mxu0 0
      %592 = vmatpush1.bf16.msra.mxu0 0
      %593 = vmatprep.subr.bf16.mxu0 0
      %594 = vmatpush1.bf16.msra.mxu0 0
      %595 = vmatprep.subr.bf16.mxu0 0
      %596 = vmatpush1.bf16.msra.mxu0 0
      %597 = vmatprep.subr.bf16.mxu0 0
      %598 = vmatpush1.bf16.msra.mxu0 0
      %599 = vmatprep.subr.bf16.mxu0 0
      %600 = vmatpush1.bf16.msra.mxu0 0
      %601 = vmatprep.subr.bf16.mxu0 0
      %602 = vmatpush1.bf16.msra.mxu0 0
      %603 = vmatprep.mubr.bf16.mxu0 0
      %604 = vmatmul.mubr.bf16.gmra.mrb[0].mxu0 %v564
      %v605 = vpop.f32.mrb[0].mxu0
      %v606 = vadd.f32 %v541, %v605
      %v607 = vpop.f32.mrb[0].mxu0
      %v608 = vpop.f32.mrb[0].mxu0
      %v609 = vadd.f32 %v544, %v608
      %v610 = vpop.f32.mrb[0].mxu0
      %611 = vmatprep.mubr.bf16.mxu0 0
      %612 = vmatmul.mubr.bf16.gmra.mrb[0].mxu0 %v566
      %v613 = vpop.f32.mrb[0].mxu0
      %v614 = vadd.f32 %v549, %v613
      %v615 = vpop.f32.mrb[0].mxu0
      %v616 = vpop.f32.mrb[0].mxu0
      %v617 = vadd.f32 %v552, %v616
      %v618 = vpop.f32.mrb[0].mxu0
      %619 = vdwg.mxu0
      %v621 = vrot.slane %v454, 1
      %v622 = vrot.slane %v456, 2
      %v625 = vsel %vm460, %v621, %v622
      %s626 = scalar_lea.vmem %s409, 24
      %v627 = vld [vmem:[%s626] sm:$0xf]
      %v628 = vld [vmem:[%s626 + $0x4] sm:$0xf]
      %v629 = vld [vmem:[%s626 + $0x8] sm:$0x1]
      %v633 = vunpack.c.l.b16 %v627
      %v634 = vunpack.c.l.b16 %v628
      %v635 = vunpack.c.l.b16 %v629
      %v636 = vpack.c.b16 %v634, %v633
      %v637 = vpack.c.b16 %v635, %v635
      %v639 = vsel %vm497, %v625, 0
      %v641 = vsel %vm497, %v622, 0
      %v644 = vsel %vm502, %v637, 0
      %646 = vmatprep.subr.bf16.mxu0 0
      %647 = vmatpush1.bf16.msra.mxu0 %v636
      %648 = vmatprep.subr.bf16.mxu0 0
      %649 = vmatpush1.bf16.msra.mxu0 %v644
      %650 = vmatprep.subr.bf16.mxu0 0
      %651 = vmatpush1.bf16.msra.mxu0 0
      %652 = vmatprep.subr.bf16.mxu0 0
      %653 = vmatpush1.bf16.msra.mxu0 0
      %654 = vmatprep.subr.bf16.mxu0 0
      %655 = vmatpush1.bf16.msra.mxu0 0
      %656 = vmatprep.subr.bf16.mxu0 0
      %657 = vmatpush1.bf16.msra.mxu0 0
      %658 = vmatprep.subr.bf16.mxu0 0
      %659 = vmatpush1.bf16.msra.mxu0 0
      %660 = vmatprep.subr.bf16.mxu0 0
      %661 = vmatpush1.bf16.msra.mxu0 0
      %662 = vmatprep.subr.bf16.mxu0 0
      %663 = vmatpush1.bf16.msra.mxu0 0
      %664 = vmatprep.subr.bf16.mxu0 0
      %665 = vmatpush1.bf16.msra.mxu0 0
      %666 = vmatprep.subr.bf16.mxu0 0
      %667 = vmatpush1.bf16.msra.mxu0 0
      %668 = vmatprep.subr.bf16.mxu0 0
      %669 = vmatpush1.bf16.msra.mxu0 0
      %670 = vmatprep.subr.bf16.mxu0 0
      %671 = vmatpush1.bf16.msra.mxu0 0
      %672 = vmatprep.subr.bf16.mxu0 0
      %673 = vmatpush1.bf16.msra.mxu0 0
      %674 = vmatprep.subr.bf16.mxu0 0
      %675 = vmatpush1.bf16.msra.mxu0 0
      %676 = vmatprep.subr.bf16.mxu0 0
      %677 = vmatpush1.bf16.msra.mxu0 0
      %678 = vmatprep.mubr.bf16.mxu0 0
      %679 = vmatmul.mubr.bf16.gmra.mrb[0].mxu0 %v639
      %v680 = vpop.f32.mrb[0].mxu0
      %v681 = vadd.f32 0.0, %v680
      %v682 = vpop.f32.mrb[0].mxu0
      %v683 = vpop.f32.mrb[0].mxu0
      %v684 = vadd.f32 0.0, %v683
      %v685 = vpop.f32.mrb[0].mxu0
      %686 = vmatprep.mubr.bf16.mxu0 0
      %687 = vmatmul.mubr.bf16.gmra.mrb[0].mxu0 %v641
      %v688 = vpop.f32.mrb[0].mxu0
      %v689 = vadd.f32 0.0, %v688
      %v690 = vpop.f32.mrb[0].mxu0
      %v691 = vpop.f32.mrb[0].mxu0
      %v692 = vadd.f32 0.0, %v691
      %v693 = vpop.f32.mrb[0].mxu0
      %694 = vdwg.mxu0
      %v695 = vadd.f32 %v606, %v681
      %v696 = vadd.f32 %v609, %v684
      %v697 = vadd.f32 %v614, %v689
      %v698 = vadd.f32 %v617, %v692
      %vm699 = vsmask.f32 6400
      %v700 = vrot.slane %v467, 1
      %v701 = vrot.slane %v469, 2
      %v702 = vor.u32 %v700, %v701
      %v704 = vshll.u32 %v455, 16
      %v706 = vrot.slane %v704, 2
      %v707 = vsel %vm699, %v702, %v706
      %vm708 = vsmask.f32 5376
      %v709 = vrot.slane %v474, 2
      %v710 = vrot.slane %v477, 3
      %v711 = vor.u32 %v709, %v710
      %v713 = vshll.u32 %v457, 16
      %v715 = vrot.slane %v713, 3
      %v716 = vsel %vm708, %v711, %v715
      %v719 = vsel %vm460, %v707, %v711
      %s720 = scalar_lea.vmem %s409, 36
      %v721 = vld [vmem:[%s720] sm:$0xf]
      %v722 = vld [vmem:[%s720 + $0x4] sm:$0xf]
      %v723 = vld [vmem:[%s720 + $0x8] sm:$0x1]
      %v727 = vunpack.c.l.b16 %v721
      %v728 = vunpack.c.l.b16 %v722
      %v729 = vunpack.c.l.b16 %v723
      %v730 = vpack.c.b16 %v728, %v727
      %v731 = vpack.c.b16 %v729, %v729
      %v733 = vsel %vm497, %v719, 0
      %v736 = vsel %vm497, %v716, 0
      %v739 = vsel %vm502, %v731, 0
      %741 = vmatprep.subr.bf16.mxu0 0
      %742 = vmatpush1.bf16.msra.mxu0 %v730
      %743 = vmatprep.subr.bf16.mxu0 0
      %744 = vmatpush1.bf16.msra.mxu0 %v739
      %745 = vmatprep.subr.bf16.mxu0 0
      %746 = vmatpush1.bf16.msra.mxu0 0
      %747 = vmatprep.subr.bf16.mxu0 0
      %748 = vmatpush1.bf16.msra.mxu0 0
      %749 = vmatprep.subr.bf16.mxu0 0
      %750 = vmatpush1.bf16.msra.mxu0 0
      %751 = vmatprep.subr.bf16.mxu0 0
      %752 = vmatpush1.bf16.msra.mxu0 0
      %753 = vmatprep.subr.bf16.mxu0 0
      %754 = vmatpush1.bf16.msra.mxu0 0
      %755 = vmatprep.subr.bf16.mxu0 0
      %756 = vmatpush1.bf16.msra.mxu0 0
      %757 = vmatprep.subr.bf16.mxu0 0
      %758 = vmatpush1.bf16.msra.mxu0 0
      %759 = vmatprep.subr.bf16.mxu0 0
      %760 = vmatpush1.bf16.msra.mxu0 0
      %761 = vmatprep.subr.bf16.mxu0 0
      %762 = vmatpush1.bf16.msra.mxu0 0
      %763 = vmatprep.subr.bf16.mxu0 0
      %764 = vmatpush1.bf16.msra.mxu0 0
      %765 = vmatprep.subr.bf16.mxu0 0
      %766 = vmatpush1.bf16.msra.mxu0 0
      %767 = vmatprep.subr.bf16.mxu0 0
      %768 = vmatpush1.bf16.msra.mxu0 0
      %769 = vmatprep.subr.bf16.mxu0 0
      %770 = vmatpush1.bf16.msra.mxu0 0
      %771 = vmatprep.subr.bf16.mxu0 0
      %772 = vmatpush1.bf16.msra.mxu0 0
      %773 = vmatprep.mubr.bf16.mxu0 0
      %774 = vmatmul.mubr.bf16.gmra.mrb[0].mxu0 %v733
      %v775 = vpop.f32.mrb[0].mxu0
      %v776 = vadd.f32 0.0, %v775
      %v777 = vpop.f32.mrb[0].mxu0
      %v778 = vpop.f32.mrb[0].mxu0
      %v779 = vadd.f32 0.0, %v778
      %v780 = vpop.f32.mrb[0].mxu0
      %781 = vmatprep.mubr.bf16.mxu0 0
      %782 = vmatmul.mubr.bf16.gmra.mrb[0].mxu0 %v736
      %v783 = vpop.f32.mrb[0].mxu0
      %v784 = vadd.f32 0.0, %v783
      %v785 = vpop.f32.mrb[0].mxu0
      %v786 = vpop.f32.mrb[0].mxu0
      %v787 = vadd.f32 0.0, %v786
      %v788 = vpop.f32.mrb[0].mxu0
      %789 = vdwg.mxu0
      %v790 = vadd.f32 %v695, %v776
      %v791 = vadd.f32 %v696, %v779
      %v792 = vadd.f32 %v697, %v784
      %v793 = vadd.f32 %v698, %v787
      %vm795 = vcmask 1045504
      %v796 = vrot.slane %v454, 2
      %v797 = vrot.slane %v455, 2
      %v798 = vsel %vm795, %v796, %v797
      %vm800 = vcmask 1044480
      %v801 = vrot.slane %v456, 3
      %v802 = vrot.slane %v457, 3
      %v803 = vsel %vm800, %v801, %v802
      %v806 = vsel %vm460, %v798, %v801
      %s807 = scalar_lea.vmem %s409, 48
      %v808 = vld [vmem:[%s807] sm:$0xf]
      %v809 = vld [vmem:[%s807 + $0x4] sm:$0xf]
      %v810 = vld [vmem:[%s807 + $0x8] sm:$0x1]
      %v814 = vunpack.c.l.b16 %v808
      %v815 = vunpack.c.l.b16 %v809
      %v816 = vunpack.c.l.b16 %v810
      %v817 = vpack.c.b16 %v815, %v814
      %v818 = vpack.c.b16 %v816, %v816
      %v820 = vsel %vm497, %v806, 0
      %v823 = vsel %vm497, %v803, 0
      %v826 = vsel %vm502, %v818, 0
      %828 = vmatprep.subr.bf16.mxu0 0
      %829 = vmatpush1.bf16.msra.mxu0 %v817
      %830 = vmatprep.subr.bf16.mxu0 0
      %831 = vmatpush1.bf16.msra.mxu0 %v826
      %832 = vmatprep.subr.bf16.mxu0 0
      %833 = vmatpush1.bf16.msra.mxu0 0
      %834 = vmatprep.subr.bf16.mxu0 0
      %835 = vmatpush1.bf16.msra.mxu0 0
      %836 = vmatprep.subr.bf16.mxu0 0
      %837 = vmatpush1.bf16.msra.mxu0 0
      %838 = vmatprep.subr.bf16.mxu0 0
      %839 = vmatpush1.bf16.msra.mxu0 0
      %840 = vmatprep.subr.bf16.mxu0 0
      %841 = vmatpush1.bf16.msra.mxu0 0
      %842 = vmatprep.subr.bf16.mxu0 0
      %843 = vmatpush1.bf16.msra.mxu0 0
      %844 = vmatprep.subr.bf16.mxu0 0
      %845 = vmatpush1.bf16.msra.mxu0 0
      %846 = vmatprep.subr.bf16.mxu0 0
      %847 = vmatpush1.bf16.msra.mxu0 0
      %848 = vmatprep.subr.bf16.mxu0 0
      %849 = vmatpush1.bf16.msra.mxu0 0
      %850 = vmatprep.subr.bf16.mxu0 0
      %851 = vmatpush1.bf16.msra.mxu0 0
      %852 = vmatprep.subr.bf16.mxu0 0
      %853 = vmatpush1.bf16.msra.mxu0 0
      %854 = vmatprep.subr.bf16.mxu0 0
      %855 = vmatpush1.bf16.msra.mxu0 0
      %856 = vmatprep.subr.bf16.mxu0 0
      %857 = vmatpush1.bf16.msra.mxu0 0
      %858 = vmatprep.subr.bf16.mxu0 0
      %859 = vmatpush1.bf16.msra.mxu0 0
      %860 = vmatprep.mubr.bf16.mxu0 0
      %861 = vmatmul.mubr.bf16.gmra.mrb[0].mxu0 %v820
      %v862 = vpop.f32.mrb[0].mxu0
      %v863 = vadd.f32 0.0, %v862
      %v864 = vpop.f32.mrb[0].mxu0
      %v865 = vpop.f32.mrb[0].mxu0
      %v866 = vadd.f32 0.0, %v865
      %v867 = vpop.f32.mrb[0].mxu0
      %868 = vmatprep.mubr.bf16.mxu0 0
      %869 = vmatmul.mubr.bf16.gmra.mrb[0].mxu0 %v823
      %v870 = vpop.f32.mrb[0].mxu0
      %v871 = vadd.f32 0.0, %v870
      %v872 = vpop.f32.mrb[0].mxu0
      %v873 = vpop.f32.mrb[0].mxu0
      %v874 = vadd.f32 0.0, %v873
      %v875 = vpop.f32.mrb[0].mxu0
      %876 = vdwg.mxu0
      %v877 = vadd.f32 %v790, %v863
      %v878 = vadd.f32 %v791, %v866
      %v879 = vadd.f32 %v792, %v871
      %v880 = vadd.f32 %v793, %v874
      %v881 = vlaneseq
      %v882 = vshrl.u32 %v881, 7
      %v883 = vsub.s32 0, %v882
      %v884 = vrot.slane %v445, %v883
      %v885 = vadd.f32 %v877, %v884
      %v886 = vadd.f32 %v878, %v884
      %v887 = vadd.f32 %v879, %v884
      %v888 = vadd.f32 %v880, %v884
      %v889 = vmax.f32 %v885, 0.0
      %v890 = vmax.f32 %v886, 0.0
      %v891 = vmax.f32 %v887, 0.0
      %v892 = vmax.f32 %v888, 0.0
      %v893 = vpack.c.bf16 %v890, %v889
      %v894 = vpack.c.bf16 %v892, %v891
      %v897 = vrot.slane %v893, 2
      %v898 = vrot.slane %v894, 2
      %v899 = vsel %vm795, %v897, %v898
      %vm900 = vcmask 1044480
      %v903 = vsel %vm900, %v893, %v899
      %v904 = vld [vmem:[%s414] sm:$0xff]
      %v905 = vld [vmem:[%s414 + $0x8] sm:$0xf]
      %v906 = vld [vmem:[%s414 + $0xc] sm:$0xff]
      %v907 = vld [vmem:[%s414 + $0x14] sm:$0xf]
      %v908 = vld [vmem:[%s414 + $0x18] sm:$0xff]
      %v909 = vld [vmem:[%s414 + $0x20] sm:$0xf]
      %v910 = vld [vmem:[%s414 + $0x24] sm:$0xff]
      %v911 = vld [vmem:[%s414 + $0x2c] sm:$0xf]
      %v912 = vld [vmem:[%s414 + $0x30] sm:$0xff]
      %v913 = vld [vmem:[%s414 + $0x38] sm:$0xf]
      %v914 = vld [vmem:[%s414 + $0x3c] sm:$0xff]
      %v915 = vld [vmem:[%s414 + $0x44] sm:$0xf]
      %v916 = vld [vmem:[%s414 + $0x48] sm:$0xff]
      %v917 = vld [vmem:[%s414 + $0x50] sm:$0xf]
      %v918 = vld [vmem:[%s414 + $0x54] sm:$0xff]
      %v919 = vld [vmem:[%s414 + $0x5c] sm:$0xf]
      %v920 = vld [vmem:[%s414 + $0x60] sm:$0xff]
      %v921 = vld [vmem:[%s414 + $0x68] sm:$0xf]
      %v922 = vld [vmem:[%s414 + $0x6c] sm:$0xff]
      %v923 = vld [vmem:[%s414 + $0x74] sm:$0xf]
      %v924 = vld [vmem:[%s414 + $0x78] sm:$0xff]
      %v925 = vld [vmem:[%s414 + $0x80] sm:$0xf]
      %v926 = vld [vmem:[%s414 + $0x84] sm:$0xff]
      %v927 = vld [vmem:[%s414 + $0x8c] sm:$0xf]
      %v928 = vld [vmem:[%s414 + $0x90] sm:$0xff]
      %v929 = vld [vmem:[%s414 + $0x98] sm:$0xf]
      %v930 = vld [vmem:[%s414 + $0x9c] sm:$0xff]
      %v931 = vld [vmem:[%s414 + $0xa4] sm:$0xf]
      %v932 = vshrl.u32 %v893, 16
      %v934 = vshll.u32 %v893, 16
      %v936 = vrot.slane %v934, 1
      %v937 = vor.u32 %v932, %v936
      %v938 = vrot.slane %v932, 2
      %v940 = vshrl.u32 %v894, 16
      %v942 = vrot.slane %v940, 2
      %v943 = vshll.u32 %v894, 16
      %v945 = vrot.slane %v943, 3
      %v946 = vor.u32 %v942, %v945
      %v947 = vsel %vm708, %v938, %v946
      %v950 = vsel %vm900, %v937, %v947
      %s951 = scalar_lea.vmem %s414, 168
      %v952 = vld [vmem:[%s951] sm:$0xff]
      %v953 = vld [vmem:[%s951 + $0x8] sm:$0xf]
      %v954 = vld [vmem:[%s951 + $0xc] sm:$0xff]
      %v955 = vld [vmem:[%s951 + $0x14] sm:$0xf]
      %v956 = vld [vmem:[%s951 + $0x18] sm:$0xff]
      %v957 = vld [vmem:[%s951 + $0x20] sm:$0xf]
      %v958 = vld [vmem:[%s951 + $0x24] sm:$0xff]
      %v959 = vld [vmem:[%s951 + $0x2c] sm:$0xf]
      %v960 = vld [vmem:[%s951 + $0x30] sm:$0xff]
      %v961 = vld [vmem:[%s951 + $0x38] sm:$0xf]
      %v962 = vld [vmem:[%s951 + $0x3c] sm:$0xff]
      %v963 = vld [vmem:[%s951 + $0x44] sm:$0xf]
      %v964 = vld [vmem:[%s951 + $0x48] sm:$0xff]
      %v965 = vld [vmem:[%s951 + $0x50] sm:$0xf]
      %v966 = vld [vmem:[%s951 + $0x54] sm:$0xff]
      %v967 = vld [vmem:[%s951 + $0x5c] sm:$0xf]
      %v968 = vld [vmem:[%s951 + $0x60] sm:$0xff]
      %v969 = vld [vmem:[%s951 + $0x68] sm:$0xf]
      %v970 = vld [vmem:[%s951 + $0x6c] sm:$0xff]
      %v971 = vld [vmem:[%s951 + $0x74] sm:$0xf]
      %v972 = vld [vmem:[%s951 + $0x78] sm:$0xff]
      %v973 = vld [vmem:[%s951 + $0x80] sm:$0xf]
      %v974 = vld [vmem:[%s951 + $0x84] sm:$0xff]
      %v975 = vld [vmem:[%s951 + $0x8c] sm:$0xf]
      %v976 = vld [vmem:[%s951 + $0x90] sm:$0xff]
      %v977 = vld [vmem:[%s951 + $0x98] sm:$0xf]
      %v978 = vld [vmem:[%s951 + $0x9c] sm:$0xff]
      %v979 = vld [vmem:[%s951 + $0xa4] sm:$0xf]
      %v1008 = vunpack.c.l.b16 %v952
      %v1009 = vunpack.c.h.b16 %v952
      %v1010 = vunpack.c.l.b16 %v953
      %v1011 = vunpack.c.l.b16 %v954
      %v1012 = vunpack.c.h.b16 %v954
      %v1013 = vunpack.c.l.b16 %v955
      %v1014 = vunpack.c.l.b16 %v956
      %v1015 = vunpack.c.h.b16 %v956
      %v1016 = vunpack.c.l.b16 %v957
      %v1017 = vunpack.c.l.b16 %v958
      %v1018 = vunpack.c.h.b16 %v958
      %v1019 = vunpack.c.l.b16 %v959
      %v1020 = vunpack.c.l.b16 %v960
      %v1021 = vunpack.c.h.b16 %v960
      %v1022 = vunpack.c.l.b16 %v961
      %v1023 = vunpack.c.l.b16 %v962
      %v1024 = vunpack.c.h.b16 %v962
      %v1025 = vunpack.c.l.b16 %v963
      %v1026 = vunpack.c.l.b16 %v964
      %v1027 = vunpack.c.h.b16 %v964
      %v1028 = vunpack.c.l.b16 %v965
      %v1029 = vunpack.c.l.b16 %v966
      %v1030 = vunpack.c.h.b16 %v966
      %v1031 = vunpack.c.l.b16 %v967
      %v1032 = vunpack.c.l.b16 %v968
      %v1033 = vunpack.c.h.b16 %v968
      %v1034 = vunpack.c.l.b16 %v969
      %v1035 = vunpack.c.l.b16 %v970
      %v1036 = vunpack.c.h.b16 %v970
      %v1037 = vunpack.c.l.b16 %v971
      %v1038 = vunpack.c.l.b16 %v972
      %v1039 = vunpack.c.h.b16 %v972
      %v1040 = vunpack.c.l.b16 %v973
      %v1041 = vunpack.c.l.b16 %v974
      %v1042 = vunpack.c.h.b16 %v974
      %v1043 = vunpack.c.l.b16 %v975
      %v1044 = vunpack.c.l.b16 %v976
      %v1045 = vunpack.c.h.b16 %v976
      %v1046 = vunpack.c.l.b16 %v977
      %v1047 = vunpack.c.l.b16 %v978
      %v1048 = vunpack.c.h.b16 %v978
      %v1049 = vunpack.c.l.b16 %v979
      %v1050 = vpack.c.b16 %v1011, %v1008
      %v1051 = vpack.c.b16 %v1012, %v1009
      %v1052 = vpack.c.b16 %v1013, %v1010
      %v1053 = vpack.c.b16 %v1017, %v1014
      %v1054 = vpack.c.b16 %v1018, %v1015
      %v1055 = vpack.c.b16 %v1019, %v1016
      %v1056 = vpack.c.b16 %v1023, %v1020
      %v1057 = vpack.c.b16 %v1024, %v1021
      %v1058 = vpack.c.b16 %v1025, %v1022
      %v1059 = vpack.c.b16 %v1029, %v1026
      %v1060 = vpack.c.b16 %v1030, %v1027
      %v1061 = vpack.c.b16 %v1031, %v1028
      %v1062 = vpack.c.b16 %v1035, %v1032
      %v1063 = vpack.c.b16 %v1036, %v1033
      %v1064 = vpack.c.b16 %v1037, %v1034
      %v1065 = vpack.c.b16 %v1041, %v1038
      %v1066 = vpack.c.b16 %v1042, %v1039
      %v1067 = vpack.c.b16 %v1043, %v1040
      %v1068 = vpack.c.b16 %v1047, %v1044
      %v1069 = vpack.c.b16 %v1048, %v1045
      %v1070 = vpack.c.b16 %v1049, %v1046
      %vm1092 = vcmask 916480
      %v1093 = vsel %vm1092, %v950, 0
      %v1096 = vsel %vm1092, %v946, 0
      %1098 = vmatprep.subr.bf16.mxu0 %v1051
      %1099 = vmatpush1.bf16.msra.mxu0 %v1050
      %1100 = vmatprep.subr.bf16.mxu0 %v1054
      %1101 = vmatpush1.bf16.msra.mxu0 %v1053
      %1102 = vmatprep.subr.bf16.mxu0 %v1057
      %1103 = vmatpush1.bf16.msra.mxu0 %v1056
      %1104 = vmatprep.subr.bf16.mxu0 %v1060
      %1105 = vmatpush1.bf16.msra.mxu0 %v1059
      %1106 = vmatprep.subr.bf16.mxu0 %v1063
      %1107 = vmatpush1.bf16.msra.mxu0 %v1062
      %1108 = vmatprep.subr.bf16.mxu0 %v1066
      %1109 = vmatpush1.bf16.msra.mxu0 %v1065
      %1110 = vmatprep.subr.bf16.mxu0 %v1069
      %1111 = vmatpush1.bf16.msra.mxu0 %v1068
      %1112 = vmatprep.subr.bf16.mxu0 0
      %1113 = vmatpush1.bf16.msra.mxu0 0
      %1114 = vmatprep.subr.bf16.mxu0 0
      %1115 = vmatpush1.bf16.msra.mxu0 0
      %1116 = vmatprep.subr.bf16.mxu0 0
      %1117 = vmatpush1.bf16.msra.mxu0 0
      %1118 = vmatprep.subr.bf16.mxu0 0
      %1119 = vmatpush1.bf16.msra.mxu0 0
      %1120 = vmatprep.subr.bf16.mxu0 0
      %1121 = vmatpush1.bf16.msra.mxu0 0
      %1122 = vmatprep.subr.bf16.mxu0 0
      %1123 = vmatpush1.bf16.msra.mxu0 0
      %1124 = vmatprep.subr.bf16.mxu0 0
      %1125 = vmatpush1.bf16.msra.mxu0 0
      %1126 = vmatprep.subr.bf16.mxu0 0
      %1127 = vmatpush1.bf16.msra.mxu0 0
      %1128 = vmatprep.subr.bf16.mxu0 0
      %1129 = vmatpush1.bf16.msra.mxu0 0
      %1130 = vmatprep.mubr.bf16.mxu0 0
      %1131 = vmatmul.mubr.bf16.gmra.mrb[0].mxu0 %v1093
      %v1132 = vpop.f32.mrb[0].mxu0
      %v1133 = vadd.f32 0.0, %v1132
      %v1134 = vpop.f32.mrb[0].mxu0
      %v1135 = vadd.f32 0.0, %v1134
      %v1136 = vpop.f32.mrb[0].mxu0
      %v1137 = vadd.f32 0.0, %v1136
      %v1138 = vpop.f32.mrb[0].mxu0
      %v1139 = vadd.f32 0.0, %v1138
      %1140 = vmatprep.mubr.bf16.mxu0 0
      %1141 = vmatmul.mubr.bf16.gmra.mrb[0].mxu0 %v1096
      %v1142 = vpop.f32.mrb[0].mxu0
      %v1143 = vadd.f32 0.0, %v1142
      %v1144 = vpop.f32.mrb[0].mxu0
      %v1145 = vadd.f32 0.0, %v1144
      %v1146 = vpop.f32.mrb[0].mxu0
      %v1147 = vpop.f32.mrb[0].mxu0
      %1148 = vdwg.mxu0
      %1149 = vmatprep.subr.bf16.mxu0 0
      %1150 = vmatpush1.bf16.msra.mxu0 %v1052
      %1151 = vmatprep.subr.bf16.mxu0 0
      %1152 = vmatpush1.bf16.msra.mxu0 %v1055
      %1153 = vmatprep.subr.bf16.mxu0 0
      %1154 = vmatpush1.bf16.msra.mxu0 %v1058
      %1155 = vmatprep.subr.bf16.mxu0 0
      %1156 = vmatpush1.bf16.msra.mxu0 %v1061
      %1157 = vmatprep.subr.bf16.mxu0 0
      %1158 = vmatpush1.bf16.msra.mxu0 %v1064
      %1159 = vmatprep.subr.bf16.mxu0 0
      %1160 = vmatpush1.bf16.msra.mxu0 %v1067
      %1161 = vmatprep.subr.bf16.mxu0 0
      %1162 = vmatpush1.bf16.msra.mxu0 %v1070
      %1163 = vmatprep.subr.bf16.mxu0 0
      %1164 = vmatpush1.bf16.msra.mxu0 0
      %1165 = vmatprep.subr.bf16.mxu0 0
      %1166 = vmatpush1.bf16.msra.mxu0 0
      %1167 = vmatprep.subr.bf16.mxu0 0
      %1168 = vmatpush1.bf16.msra.mxu0 0
      %1169 = vmatprep.subr.bf16.mxu0 0
      %1170 = vmatpush1.bf16.msra.mxu0 0
      %1171 = vmatprep.subr.bf16.mxu0 0
      %1172 = vmatpush1.bf16.msra.mxu0 0
      %1173 = vmatprep.subr.bf16.mxu0 0
      %1174 = vmatpush1.bf16.msra.mxu0 0
      %1175 = vmatprep.subr.bf16.mxu0 0
      %1176 = vmatpush1.bf16.msra.mxu0 0
      %1177 = vmatprep.subr.bf16.mxu0 0
      %1178 = vmatpush1.bf16.msra.mxu0 0
      %1179 = vmatprep.subr.bf16.mxu0 0
      %1180 = vmatpush1.bf16.msra.mxu0 0
      %1181 = vmatprep.mubr.bf16.mxu0 0
      %1182 = vmatmul.mubr.bf16.gmra.mrb[0].mxu0 %v1093
      %v1183 = vpop.f32.mrb[0].mxu0
      %v1184 = vadd.f32 0.0, %v1183
      %v1185 = vpop.f32.mrb[0].mxu0
      %v1186 = vpop.f32.mrb[0].mxu0
      %v1187 = vadd.f32 0.0, %v1186
      %v1188 = vpop.f32.mrb[0].mxu0
      %1189 = vmatprep.mubr.bf16.mxu0 0
      %1190 = vmatmul.mubr.bf16.gmra.mrb[0].mxu0 %v1096
      %v1191 = vpop.f32.mrb[0].mxu0
      %v1192 = vadd.f32 0.0, %v1191
      %v1193 = vpop.f32.mrb[0].mxu0
      %v1194 = vpop.f32.mrb[0].mxu0
      %v1195 = vpop.f32.mrb[0].mxu0
      %1196 = vdwg.mxu0
      %v1225 = vunpack.c.l.b16 %v904
      %v1226 = vunpack.c.h.b16 %v904
      %v1227 = vunpack.c.l.b16 %v905
      %v1228 = vunpack.c.l.b16 %v906
      %v1229 = vunpack.c.h.b16 %v906
      %v1230 = vunpack.c.l.b16 %v907
      %v1231 = vunpack.c.l.b16 %v908
      %v1232 = vunpack.c.h.b16 %v908
      %v1233 = vunpack.c.l.b16 %v909
      %v1234 = vunpack.c.l.b16 %v910
      %v1235 = vunpack.c.h.b16 %v910
      %v1236 = vunpack.c.l.b16 %v911
      %v1237 = vunpack.c.l.b16 %v912
      %v1238 = vunpack.c.h.b16 %v912
      %v1239 = vunpack.c.l.b16 %v913
      %v1240 = vunpack.c.l.b16 %v914
      %v1241 = vunpack.c.h.b16 %v914
      %v1242 = vunpack.c.l.b16 %v915
      %v1243 = vunpack.c.l.b16 %v916
      %v1244 = vunpack.c.h.b16 %v916
      %v1245 = vunpack.c.l.b16 %v917
      %v1246 = vunpack.c.l.b16 %v918
      %v1247 = vunpack.c.h.b16 %v918
      %v1248 = vunpack.c.l.b16 %v919
      %v1249 = vunpack.c.l.b16 %v920
      %v1250 = vunpack.c.h.b16 %v920
      %v1251 = vunpack.c.l.b16 %v921
      %v1252 = vunpack.c.l.b16 %v922
      %v1253 = vunpack.c.h.b16 %v922
      %v1254 = vunpack.c.l.b16 %v923
      %v1255 = vunpack.c.l.b16 %v924
      %v1256 = vunpack.c.h.b16 %v924
      %v1257 = vunpack.c.l.b16 %v925
      %v1258 = vunpack.c.l.b16 %v926
      %v1259 = vunpack.c.h.b16 %v926
      %v1260 = vunpack.c.l.b16 %v927
      %v1261 = vunpack.c.l.b16 %v928
      %v1262 = vunpack.c.h.b16 %v928
      %v1263 = vunpack.c.l.b16 %v929
      %v1264 = vunpack.c.l.b16 %v930
      %v1265 = vunpack.c.h.b16 %v930
      %v1266 = vunpack.c.l.b16 %v931
      %v1267 = vpack.c.b16 %v1228, %v1225
      %v1268 = vpack.c.b16 %v1229, %v1226
      %v1269 = vpack.c.b16 %v1230, %v1227
      %v1270 = vpack.c.b16 %v1234, %v1231
      %v1271 = vpack.c.b16 %v1235, %v1232
      %v1272 = vpack.c.b16 %v1236, %v1233
      %v1273 = vpack.c.b16 %v1240, %v1237
      %v1274 = vpack.c.b16 %v1241, %v1238
      %v1275 = vpack.c.b16 %v1242, %v1239
      %v1276 = vpack.c.b16 %v1246, %v1243
      %v1277 = vpack.c.b16 %v1247, %v1244
      %v1278 = vpack.c.b16 %v1248, %v1245
      %v1279 = vpack.c.b16 %v1252, %v1249
      %v1280 = vpack.c.b16 %v1253, %v1250
      %v1281 = vpack.c.b16 %v1254, %v1251
      %v1282 = vpack.c.b16 %v1258, %v1255
      %v1283 = vpack.c.b16 %v1259, %v1256
      %v1284 = vpack.c.b16 %v1260, %v1257
      %v1285 = vpack.c.b16 %v1264, %v1261
      %v1286 = vpack.c.b16 %v1265, %v1262
      %v1287 = vpack.c.b16 %v1266, %v1263
      %v1309 = vsel %vm1092, %v903, 0
      %v1312 = vsel %vm1092, %v898, 0
      %1314 = vmatprep.subr.bf16.mxu0 %v1268
      %1315 = vmatpush1.bf16.msra.mxu0 %v1267
      %1316 = vmatprep.subr.bf16.mxu0 %v1271
      %1317 = vmatpush1.bf16.msra.mxu0 %v1270
      %1318 = vmatprep.subr.bf16.mxu0 %v1274
      %1319 = vmatpush1.bf16.msra.mxu0 %v1273
      %1320 = vmatprep.subr.bf16.mxu0 %v1277
      %1321 = vmatpush1.bf16.msra.mxu0 %v1276
      %1322 = vmatprep.subr.bf16.mxu0 %v1280
      %1323 = vmatpush1.bf16.msra.mxu0 %v1279
      %1324 = vmatprep.subr.bf16.mxu0 %v1283
      %1325 = vmatpush1.bf16.msra.mxu0 %v1282
      %1326 = vmatprep.subr.bf16.mxu0 %v1286
      %1327 = vmatpush1.bf16.msra.mxu0 %v1285
      %1328 = vmatprep.subr.bf16.mxu0 0
      %1329 = vmatpush1.bf16.msra.mxu0 0
      %1330 = vmatprep.subr.bf16.mxu0 0
      %1331 = vmatpush1.bf16.msra.mxu0 0
      %1332 = vmatprep.subr.bf16.mxu0 0
      %1333 = vmatpush1.bf16.msra.mxu0 0
      %1334 = vmatprep.subr.bf16.mxu0 0
      %1335 = vmatpush1.bf16.msra.mxu0 0
      %1336 = vmatprep.subr.bf16.mxu0 0
      %1337 = vmatpush1.bf16.msra.mxu0 0
      %1338 = vmatprep.subr.bf16.mxu0 0
      %1339 = vmatpush1.bf16.msra.mxu0 0
      %1340 = vmatprep.subr.bf16.mxu0 0
      %1341 = vmatpush1.bf16.msra.mxu0 0
      %1342 = vmatprep.subr.bf16.mxu0 0
      %1343 = vmatpush1.bf16.msra.mxu0 0
      %1344 = vmatprep.subr.bf16.mxu0 0
      %1345 = vmatpush1.bf16.msra.mxu0 0
      %1346 = vmatprep.mubr.bf16.mxu0 0
      %1347 = vmatmul.mubr.bf16.gmra.mrb[0].mxu0 %v1309
      %v1348 = vpop.f32.mrb[0].mxu0
      %v1349 = vadd.f32 %v1133, %v1348
      %v1350 = vpop.f32.mrb[0].mxu0
      %v1351 = vadd.f32 %v1135, %v1350
      %v1352 = vpop.f32.mrb[0].mxu0
      %v1353 = vadd.f32 %v1137, %v1352
      %v1354 = vpop.f32.mrb[0].mxu0
      %v1355 = vadd.f32 %v1139, %v1354
      %1356 = vmatprep.mubr.bf16.mxu0 0
      %1357 = vmatmul.mubr.bf16.gmra.mrb[0].mxu0 %v1312
      %v1358 = vpop.f32.mrb[0].mxu0
      %v1359 = vadd.f32 %v1143, %v1358
      %v1360 = vpop.f32.mrb[0].mxu0
      %v1361 = vadd.f32 %v1145, %v1360
      %v1362 = vpop.f32.mrb[0].mxu0
      %v1363 = vpop.f32.mrb[0].mxu0
      %1364 = vdwg.mxu0
      %1365 = vmatprep.subr.bf16.mxu0 0
      %1366 = vmatpush1.bf16.msra.mxu0 %v1269
      %1367 = vmatprep.subr.bf16.mxu0 0
      %1368 = vmatpush1.bf16.msra.mxu0 %v1272
      %1369 = vmatprep.subr.bf16.mxu0 0
      %1370 = vmatpush1.bf16.msra.mxu0 %v1275
      %1371 = vmatprep.subr.bf16.mxu0 0
      %1372 = vmatpush1.bf16.msra.mxu0 %v1278
      %1373 = vmatprep.subr.bf16.mxu0 0
      %1374 = vmatpush1.bf16.msra.mxu0 %v1281
      %1375 = vmatprep.subr.bf16.mxu0 0
      %1376 = vmatpush1.bf16.msra.mxu0 %v1284
      %1377 = vmatprep.subr.bf16.mxu0 0
      %1378 = vmatpush1.bf16.msra.mxu0 %v1287
      %1379 = vmatprep.subr.bf16.mxu0 0
      %1380 = vmatpush1.bf16.msra.mxu0 0
      %1381 = vmatprep.subr.bf16.mxu0 0
      %1382 = vmatpush1.bf16.msra.mxu0 0
      %1383 = vmatprep.subr.bf16.mxu0 0
      %1384 = vmatpush1.bf16.msra.mxu0 0
      %1385 = vmatprep.subr.bf16.mxu0 0
      %1386 = vmatpush1.bf16.msra.mxu0 0
      %1387 = vmatprep.subr.bf16.mxu0 0
      %1388 = vmatpush1.bf16.msra.mxu0 0
      %1389 = vmatprep.subr.bf16.mxu0 0
      %1390 = vmatpush1.bf16.msra.mxu0 0
      %1391 = vmatprep.subr.bf16.mxu0 0
      %1392 = vmatpush1.bf16.msra.mxu0 0
      %1393 = vmatprep.subr.bf16.mxu0 0
      %1394 = vmatpush1.bf16.msra.mxu0 0
      %1395 = vmatprep.subr.bf16.mxu0 0
      %1396 = vmatpush1.bf16.msra.mxu0 0
      %1397 = vmatprep.mubr.bf16.mxu0 0
      %1398 = vmatmul.mubr.bf16.gmra.mrb[0].mxu0 %v1309
      %v1399 = vpop.f32.mrb[0].mxu0
      %v1400 = vadd.f32 %v1184, %v1399
      %v1401 = vpop.f32.mrb[0].mxu0
      %v1402 = vpop.f32.mrb[0].mxu0
      %v1403 = vadd.f32 %v1187, %v1402
      %v1404 = vpop.f32.mrb[0].mxu0
      %1405 = vmatprep.mubr.bf16.mxu0 0
      %1406 = vmatmul.mubr.bf16.gmra.mrb[0].mxu0 %v1312
      %v1407 = vpop.f32.mrb[0].mxu0
      %v1408 = vadd.f32 %v1192, %v1407
      %v1409 = vpop.f32.mrb[0].mxu0
      %v1410 = vpop.f32.mrb[0].mxu0
      %v1411 = vpop.f32.mrb[0].mxu0
      %1412 = vdwg.mxu0
      %v1413 = vrot.slane %v893, 1
      %v1414 = vrot.slane %v894, 3
      %v1417 = vsel %vm900, %v1413, %v1414
      %s1418 = scalar_lea.vmem %s414, 336
      %v1419 = vld [vmem:[%s1418] sm:$0xff]
      %v1420 = vld [vmem:[%s1418 + $0x8] sm:$0xf]
      %v1421 = vld [vmem:[%s1418 + $0xc] sm:$0xff]
      %v1422 = vld [vmem:[%s1418 + $0x14] sm:$0xf]
      %v1423 = vld [vmem:[%s1418 + $0x18] sm:$0xff]
      %v1424 = vld [vmem:[%s1418 + $0x20] sm:$0xf]
      %v1425 = vld [vmem:[%s1418 + $0x24] sm:$0xff]
      %v1426 = vld [vmem:[%s1418 + $0x2c] sm:$0xf]
      %v1427 = vld [vmem:[%s1418 + $0x30] sm:$0xff]
      %v1428 = vld [vmem:[%s1418 + $0x38] sm:$0xf]
      %v1429 = vld [vmem:[%s1418 + $0x3c] sm:$0xff]
      %v1430 = vld [vmem:[%s1418 + $0x44] sm:$0xf]
      %v1431 = vld [vmem:[%s1418 + $0x48] sm:$0xff]
      %v1432 = vld [vmem:[%s1418 + $0x50] sm:$0xf]
      %v1433 = vld [vmem:[%s1418 + $0x54] sm:$0xff]
      %v1434 = vld [vmem:[%s1418 + $0x5c] sm:$0xf]
      %v1435 = vld [vmem:[%s1418 + $0x60] sm:$0xff]
      %v1436 = vld [vmem:[%s1418 + $0x68] sm:$0xf]
      %v1437 = vld [vmem:[%s1418 + $0x6c] sm:$0xff]
      %v1438 = vld [vmem:[%s1418 + $0x74] sm:$0xf]
      %v1439 = vld [vmem:[%s1418 + $0x78] sm:$0xff]
      %v1440 = vld [vmem:[%s1418 + $0x80] sm:$0xf]
      %v1441 = vld [vmem:[%s1418 + $0x84] sm:$0xff]
      %v1442 = vld [vmem:[%s1418 + $0x8c] sm:$0xf]
      %v1443 = vld [vmem:[%s1418 + $0x90] sm:$0xff]
      %v1444 = vld [vmem:[%s1418 + $0x98] sm:$0xf]
      %v1445 = vld [vmem:[%s1418 + $0x9c] sm:$0xff]
      %v1446 = vld [vmem:[%s1418 + $0xa4] sm:$0xf]
      %v1475 = vunpack.c.l.b16 %v1419
      %v1476 = vunpack.c.h.b16 %v1419
      %v1477 = vunpack.c.l.b16 %v1420
      %v1478 = vunpack.c.l.b16 %v1421
      %v1479 = vunpack.c.h.b16 %v1421
      %v1480 = vunpack.c.l.b16 %v1422
      %v1481 = vunpack.c.l.b16 %v1423
      %v1482 = vunpack.c.h.b16 %v1423
      %v1483 = vunpack.c.l.b16 %v1424
      %v1484 = vunpack.c.l.b16 %v1425
      %v1485 = vunpack.c.h.b16 %v1425
      %v1486 = vunpack.c.l.b16 %v1426
      %v1487 = vunpack.c.l.b16 %v1427
      %v1488 = vunpack.c.h.b16 %v1427
      %v1489 = vunpack.c.l.b16 %v1428
      %v1490 = vunpack.c.l.b16 %v1429
      %v1491 = vunpack.c.h.b16 %v1429
      %v1492 = vunpack.c.l.b16 %v1430
      %v1493 = vunpack.c.l.b16 %v1431
      %v1494 = vunpack.c.h.b16 %v1431
      %v1495 = vunpack.c.l.b16 %v1432
      %v1496 = vunpack.c.l.b16 %v1433
      %v1497 = vunpack.c.h.b16 %v1433
      %v1498 = vunpack.c.l.b16 %v1434
      %v1499 = vunpack.c.l.b16 %v1435
      %v1500 = vunpack.c.h.b16 %v1435
      %v1501 = vunpack.c.l.b16 %v1436
      %v1502 = vunpack.c.l.b16 %v1437
      %v1503 = vunpack.c.h.b16 %v1437
      %v1504 = vunpack.c.l.b16 %v1438
      %v1505 = vunpack.c.l.b16 %v1439
      %v1506 = vunpack.c.h.b16 %v1439
      %v1507 = vunpack.c.l.b16 %v1440
      %v1508 = vunpack.c.l.b16 %v1441
      %v1509 = vunpack.c.h.b16 %v1441
      %v1510 = vunpack.c.l.b16 %v1442
      %v1511 = vunpack.c.l.b16 %v1443
      %v1512 = vunpack.c.h.b16 %v1443
      %v1513 = vunpack.c.l.b16 %v1444
      %v1514 = vunpack.c.l.b16 %v1445
      %v1515 = vunpack.c.h.b16 %v1445
      %v1516 = vunpack.c.l.b16 %v1446
      %v1517 = vpack.c.b16 %v1478, %v1475
      %v1518 = vpack.c.b16 %v1479, %v1476
      %v1519 = vpack.c.b16 %v1480, %v1477
      %v1520 = vpack.c.b16 %v1484, %v1481
      %v1521 = vpack.c.b16 %v1485, %v1482
      %v1522 = vpack.c.b16 %v1486, %v1483
      %v1523 = vpack.c.b16 %v1490, %v1487
      %v1524 = vpack.c.b16 %v1491, %v1488
      %v1525 = vpack.c.b16 %v1492, %v1489
      %v1526 = vpack.c.b16 %v1496, %v1493
      %v1527 = vpack.c.b16 %v1497, %v1494
      %v1528 = vpack.c.b16 %v1498, %v1495
      %v1529 = vpack.c.b16 %v1502, %v1499
      %v1530 = vpack.c.b16 %v1503, %v1500
      %v1531 = vpack.c.b16 %v1504, %v1501
      %v1532 = vpack.c.b16 %v1508, %v1505
      %v1533 = vpack.c.b16 %v1509, %v1506
      %v1534 = vpack.c.b16 %v1510, %v1507
      %v1535 = vpack.c.b16 %v1514, %v1511
      %v1536 = vpack.c.b16 %v1515, %v1512
      %v1537 = vpack.c.b16 %v1516, %v1513
      %v1559 = vsel %vm1092, %v1417, 0
      %v1561 = vsel %vm1092, %v1414, 0
      %1563 = vmatprep.subr.bf16.mxu0 %v1518
      %1564 = vmatpush1.bf16.msra.mxu0 %v1517
      %1565 = vmatprep.subr.bf16.mxu0 %v1521
      %1566 = vmatpush1.bf16.msra.mxu0 %v1520
      %1567 = vmatprep.subr.bf16.mxu0 %v1524
      %1568 = vmatpush1.bf16.msra.mxu0 %v1523
      %1569 = vmatprep.subr.bf16.mxu0 %v1527
      %1570 = vmatpush1.bf16.msra.mxu0 %v1526
      %1571 = vmatprep.subr.bf16.mxu0 %v1530
      %1572 = vmatpush1.bf16.msra.mxu0 %v1529
      %1573 = vmatprep.subr.bf16.mxu0 %v1533
      %1574 = vmatpush1.bf16.msra.mxu0 %v1532
      %1575 = vmatprep.subr.bf16.mxu0 %v1536
      %1576 = vmatpush1.bf16.msra.mxu0 %v1535
      %1577 = vmatprep.subr.bf16.mxu0 0
      %1578 = vmatpush1.bf16.msra.mxu0 0
      %1579 = vmatprep.subr.bf16.mxu0 0
      %1580 = vmatpush1.bf16.msra.mxu0 0
      %1581 = vmatprep.subr.bf16.mxu0 0
      %1582 = vmatpush1.bf16.msra.mxu0 0
      %1583 = vmatprep.subr.bf16.mxu0 0
      %1584 = vmatpush1.bf16.msra.mxu0 0
      %1585 = vmatprep.subr.bf16.mxu0 0
      %1586 = vmatpush1.bf16.msra.mxu0 0
      %1587 = vmatprep.subr.bf16.mxu0 0
      %1588 = vmatpush1.bf16.msra.mxu0 0
      %1589 = vmatprep.subr.bf16.mxu0 0
      %1590 = vmatpush1.bf16.msra.mxu0 0
      %1591 = vmatprep.subr.bf16.mxu0 0
      %1592 = vmatpush1.bf16.msra.mxu0 0
      %1593 = vmatprep.subr.bf16.mxu0 0
      %1594 = vmatpush1.bf16.msra.mxu0 0
      %1595 = vmatprep.mubr.bf16.mxu0 0
      %1596 = vmatmul.mubr.bf16.gmra.mrb[0].mxu0 %v1559
      %v1597 = vpop.f32.mrb[0].mxu0
      %v1598 = vadd.f32 0.0, %v1597
      %v1599 = vpop.f32.mrb[0].mxu0
      %v1600 = vadd.f32 0.0, %v1599
      %v1601 = vpop.f32.mrb[0].mxu0
      %v1602 = vadd.f32 0.0, %v1601
      %v1603 = vpop.f32.mrb[0].mxu0
      %v1604 = vadd.f32 0.0, %v1603
      %1605 = vmatprep.mubr.bf16.mxu0 0
      %1606 = vmatmul.mubr.bf16.gmra.mrb[0].mxu0 %v1561
      %v1607 = vpop.f32.mrb[0].mxu0
      %v1608 = vadd.f32 0.0, %v1607
      %v1609 = vpop.f32.mrb[0].mxu0
      %v1610 = vadd.f32 0.0, %v1609
      %v1611 = vpop.f32.mrb[0].mxu0
      %v1612 = vpop.f32.mrb[0].mxu0
      %1613 = vdwg.mxu0
      %1614 = vmatprep.subr.bf16.mxu0 0
      %1615 = vmatpush1.bf16.msra.mxu0 %v1519
      %1616 = vmatprep.subr.bf16.mxu0 0
      %1617 = vmatpush1.bf16.msra.mxu0 %v1522
      %1618 = vmatprep.subr.bf16.mxu0 0
      %1619 = vmatpush1.bf16.msra.mxu0 %v1525
      %1620 = vmatprep.subr.bf16.mxu0 0
      %1621 = vmatpush1.bf16.msra.mxu0 %v1528
      %1622 = vmatprep.subr.bf16.mxu0 0
      %1623 = vmatpush1.bf16.msra.mxu0 %v1531
      %1624 = vmatprep.subr.bf16.mxu0 0
      %1625 = vmatpush1.bf16.msra.mxu0 %v1534
      %1626 = vmatprep.subr.bf16.mxu0 0
      %1627 = vmatpush1.bf16.msra.mxu0 %v1537
      %1628 = vmatprep.subr.bf16.mxu0 0
      %1629 = vmatpush1.bf16.msra.mxu0 0
      %1630 = vmatprep.subr.bf16.mxu0 0
      %1631 = vmatpush1.bf16.msra.mxu0 0
      %1632 = vmatprep.subr.bf16.mxu0 0
      %1633 = vmatpush1.bf16.msra.mxu0 0
      %1634 = vmatprep.subr.bf16.mxu0 0
      %1635 = vmatpush1.bf16.msra.mxu0 0
      %1636 = vmatprep.subr.bf16.mxu0 0
      %1637 = vmatpush1.bf16.msra.mxu0 0
      %1638 = vmatprep.subr.bf16.mxu0 0
      %1639 = vmatpush1.bf16.msra.mxu0 0
      %1640 = vmatprep.subr.bf16.mxu0 0
      %1641 = vmatpush1.bf16.msra.mxu0 0
      %1642 = vmatprep.subr.bf16.mxu0 0
      %1643 = vmatpush1.bf16.msra.mxu0 0
      %1644 = vmatprep.subr.bf16.mxu0 0
      %1645 = vmatpush1.bf16.msra.mxu0 0
      %1646 = vmatprep.mubr.bf16.mxu0 0
      %1647 = vmatmul.mubr.bf16.gmra.mrb[0].mxu0 %v1559
      %v1648 = vpop.f32.mrb[0].mxu0
      %v1649 = vadd.f32 0.0, %v1648
      %v1650 = vpop.f32.mrb[0].mxu0
      %v1651 = vpop.f32.mrb[0].mxu0
      %v1652 = vadd.f32 0.0, %v1651
      %v1653 = vpop.f32.mrb[0].mxu0
      %1654 = vmatprep.mubr.bf16.mxu0 0
      %1655 = vmatmul.mubr.bf16.gmra.mrb[0].mxu0 %v1561
      %v1656 = vpop.f32.mrb[0].mxu0
      %v1657 = vadd.f32 0.0, %v1656
      %v1658 = vpop.f32.mrb[0].mxu0
      %v1659 = vpop.f32.mrb[0].mxu0
      %v1660 = vpop.f32.mrb[0].mxu0
      %1661 = vdwg.mxu0
      %v1662 = vadd.f32 %v1349, %v1598
      %v1663 = vadd.f32 %v1351, %v1600
      %v1664 = vadd.f32 %v1400, %v1649
      %v1665 = vadd.f32 %v1353, %v1602
      %v1666 = vadd.f32 %v1355, %v1604
      %v1667 = vadd.f32 %v1403, %v1652
      %v1668 = vadd.f32 %v1359, %v1608
      %v1669 = vadd.f32 %v1361, %v1610
      %v1670 = vadd.f32 %v1408, %v1657
      %v1671 = vrot.slane %v932, 1
      %v1672 = vrot.slane %v934, 2
      %v1673 = vor.u32 %v1671, %v1672
      %v1674 = vrot.slane %v940, 3
      %v1675 = vrot.slane %v943, 4
      %v1676 = vor.u32 %v1674, %v1675
      %v1679 = vsel %vm900, %v1673, %v1676
      %s1680 = scalar_lea.vmem %s414, 504
      %v1681 = vld [vmem:[%s1680] sm:$0xff]
      %v1682 = vld [vmem:[%s1680 + $0x8] sm:$0xf]
      %v1683 = vld [vmem:[%s1680 + $0xc] sm:$0xff]
      %v1684 = vld [vmem:[%s1680 + $0x14] sm:$0xf]
      %v1685 = vld [vmem:[%s1680 + $0x18] sm:$0xff]
      %v1686 = vld [vmem:[%s1680 + $0x20] sm:$0xf]
      %v1687 = vld [vmem:[%s1680 + $0x24] sm:$0xff]
      %v1688 = vld [vmem:[%s1680 + $0x2c] sm:$0xf]
      %v1689 = vld [vmem:[%s1680 + $0x30] sm:$0xff]
      %v1690 = vld [vmem:[%s1680 + $0x38] sm:$0xf]
      %v1691 = vld [vmem:[%s1680 + $0x3c] sm:$0xff]
      %v1692 = vld [vmem:[%s1680 + $0x44] sm:$0xf]
      %v1693 = vld [vmem:[%s1680 + $0x48] sm:$0xff]
      %v1694 = vld [vmem:[%s1680 + $0x50] sm:$0xf]
      %v1695 = vld [vmem:[%s1680 + $0x54] sm:$0xff]
      %v1696 = vld [vmem:[%s1680 + $0x5c] sm:$0xf]
      %v1697 = vld [vmem:[%s1680 + $0x60] sm:$0xff]
      %v1698 = vld [vmem:[%s1680 + $0x68] sm:$0xf]
      %v1699 = vld [vmem:[%s1680 + $0x6c] sm:$0xff]
      %v1700 = vld [vmem:[%s1680 + $0x74] sm:$0xf]
      %v1701 = vld [vmem:[%s1680 + $0x78] sm:$0xff]
      %v1702 = vld [vmem:[%s1680 + $0x80] sm:$0xf]
      %v1703 = vld [vmem:[%s1680 + $0x84] sm:$0xff]
      %v1704 = vld [vmem:[%s1680 + $0x8c] sm:$0xf]
      %v1705 = vld [vmem:[%s1680 + $0x90] sm:$0xff]
      %v1706 = vld [vmem:[%s1680 + $0x98] sm:$0xf]
      %v1707 = vld [vmem:[%s1680 + $0x9c] sm:$0xff]
      %v1708 = vld [vmem:[%s1680 + $0xa4] sm:$0xf]
      %v1737 = vunpack.c.l.b16 %v1681
      %v1738 = vunpack.c.h.b16 %v1681
      %v1739 = vunpack.c.l.b16 %v1682
      %v1740 = vunpack.c.l.b16 %v1683
      %v1741 = vunpack.c.h.b16 %v1683
      %v1742 = vunpack.c.l.b16 %v1684
      %v1743 = vunpack.c.l.b16 %v1685
      %v1744 = vunpack.c.h.b16 %v1685
      %v1745 = vunpack.c.l.b16 %v1686
      %v1746 = vunpack.c.l.b16 %v1687
      %v1747 = vunpack.c.h.b16 %v1687
      %v1748 = vunpack.c.l.b16 %v1688
      %v1749 = vunpack.c.l.b16 %v1689
      %v1750 = vunpack.c.h.b16 %v1689
      %v1751 = vunpack.c.l.b16 %v1690
      %v1752 = vunpack.c.l.b16 %v1691
      %v1753 = vunpack.c.h.b16 %v1691
      %v1754 = vunpack.c.l.b16 %v1692
      %v1755 = vunpack.c.l.b16 %v1693
      %v1756 = vunpack.c.h.b16 %v1693
      %v1757 = vunpack.c.l.b16 %v1694
      %v1758 = vunpack.c.l.b16 %v1695
      %v1759 = vunpack.c.h.b16 %v1695
      %v1760 = vunpack.c.l.b16 %v1696
      %v1761 = vunpack.c.l.b16 %v1697
      %v1762 = vunpack.c.h.b16 %v1697
      %v1763 = vunpack.c.l.b16 %v1698
      %v1764 = vunpack.c.l.b16 %v1699
      %v1765 = vunpack.c.h.b16 %v1699
      %v1766 = vunpack.c.l.b16 %v1700
      %v1767 = vunpack.c.l.b16 %v1701
      %v1768 = vunpack.c.h.b16 %v1701
      %v1769 = vunpack.c.l.b16 %v1702
      %v1770 = vunpack.c.l.b16 %v1703
      %v1771 = vunpack.c.h.b16 %v1703
      %v1772 = vunpack.c.l.b16 %v1704
      %v1773 = vunpack.c.l.b16 %v1705
      %v1774 = vunpack.c.h.b16 %v1705
      %v1775 = vunpack.c.l.b16 %v1706
      %v1776 = vunpack.c.l.b16 %v1707
      %v1777 = vunpack.c.h.b16 %v1707
      %v1778 = vunpack.c.l.b16 %v1708
      %v1779 = vpack.c.b16 %v1740, %v1737
      %v1780 = vpack.c.b16 %v1741, %v1738
      %v1781 = vpack.c.b16 %v1742, %v1739
      %v1782 = vpack.c.b16 %v1746, %v1743
      %v1783 = vpack.c.b16 %v1747, %v1744
      %v1784 = vpack.c.b16 %v1748, %v1745
      %v1785 = vpack.c.b16 %v1752, %v1749
      %v1786 = vpack.c.b16 %v1753, %v1750
      %v1787 = vpack.c.b16 %v1754, %v1751
      %v1788 = vpack.c.b16 %v1758, %v1755
      %v1789 = vpack.c.b16 %v1759, %v1756
      %v1790 = vpack.c.b16 %v1760, %v1757
      %v1791 = vpack.c.b16 %v1764, %v1761
      %v1792 = vpack.c.b16 %v1765, %v1762
      %v1793 = vpack.c.b16 %v1766, %v1763
      %v1794 = vpack.c.b16 %v1770, %v1767
      %v1795 = vpack.c.b16 %v1771, %v1768
      %v1796 = vpack.c.b16 %v1772, %v1769
      %v1797 = vpack.c.b16 %v1776, %v1773
      %v1798 = vpack.c.b16 %v1777, %v1774
      %v1799 = vpack.c.b16 %v1778, %v1775
      %v1821 = vsel %vm1092, %v1679, 0
      %v1823 = vsel %vm1092, %v1676, 0
      %1825 = vmatprep.subr.bf16.mxu0 %v1780
      %1826 = vmatpush1.bf16.msra.mxu0 %v1779
      %1827 = vmatprep.subr.bf16.mxu0 %v1783
      %1828 = vmatpush1.bf16.msra.mxu0 %v1782
      %1829 = vmatprep.subr.bf16.mxu0 %v1786
      %1830 = vmatpush1.bf16.msra.mxu0 %v1785
      %1831 = vmatprep.subr.bf16.mxu0 %v1789
      %1832 = vmatpush1.bf16.msra.mxu0 %v1788
      %1833 = vmatprep.subr.bf16.mxu0 %v1792
      %1834 = vmatpush1.bf16.msra.mxu0 %v1791
      %1835 = vmatprep.subr.bf16.mxu0 %v1795
      %1836 = vmatpush1.bf16.msra.mxu0 %v1794
      %1837 = vmatprep.subr.bf16.mxu0 %v1798
      %1838 = vmatpush1.bf16.msra.mxu0 %v1797
      %1839 = vmatprep.subr.bf16.mxu0 0
      %1840 = vmatpush1.bf16.msra.mxu0 0
      %1841 = vmatprep.subr.bf16.mxu0 0
      %1842 = vmatpush1.bf16.msra.mxu0 0
      %1843 = vmatprep.subr.bf16.mxu0 0
      %1844 = vmatpush1.bf16.msra.mxu0 0
      %1845 = vmatprep.subr.bf16.mxu0 0
      %1846 = vmatpush1.bf16.msra.mxu0 0
      %1847 = vmatprep.subr.bf16.mxu0 0
      %1848 = vmatpush1.bf16.msra.mxu0 0
      %1849 = vmatprep.subr.bf16.mxu0 0
      %1850 = vmatpush1.bf16.msra.mxu0 0
      %1851 = vmatprep.subr.bf16.mxu0 0
      %1852 = vmatpush1.bf16.msra.mxu0 0
      %1853 = vmatprep.subr.bf16.mxu0 0
      %1854 = vmatpush1.bf16.msra.mxu0 0
      %1855 = vmatprep.subr.bf16.mxu0 0
      %1856 = vmatpush1.bf16.msra.mxu0 0
      %1857 = vmatprep.mubr.bf16.mxu0 0
      %1858 = vmatmul.mubr.bf16.gmra.mrb[0].mxu0 %v1821
      %v1859 = vpop.f32.mrb[0].mxu0
      %v1860 = vadd.f32 0.0, %v1859
      %v1861 = vpop.f32.mrb[0].mxu0
      %v1862 = vadd.f32 0.0, %v1861
      %v1863 = vpop.f32.mrb[0].mxu0
      %v1864 = vadd.f32 0.0, %v1863
      %v1865 = vpop.f32.mrb[0].mxu0
      %v1866 = vadd.f32 0.0, %v1865
      %1867 = vmatprep.mubr.bf16.mxu0 0
      %1868 = vmatmul.mubr.bf16.gmra.mrb[0].mxu0 %v1823
      %v1869 = vpop.f32.mrb[0].mxu0
      %v1870 = vadd.f32 0.0, %v1869
      %v1871 = vpop.f32.mrb[0].mxu0
      %v1872 = vadd.f32 0.0, %v1871
      %v1873 = vpop.f32.mrb[0].mxu0
      %v1874 = vpop.f32.mrb[0].mxu0
      %1875 = vdwg.mxu0
      %1876 = vmatprep.subr.bf16.mxu0 0
      %1877 = vmatpush1.bf16.msra.mxu0 %v1781
      %1878 = vmatprep.subr.bf16.mxu0 0
      %1879 = vmatpush1.bf16.msra.mxu0 %v1784
      %1880 = vmatprep.subr.bf16.mxu0 0
      %1881 = vmatpush1.bf16.msra.mxu0 %v1787
      %1882 = vmatprep.subr.bf16.mxu0 0
      %1883 = vmatpush1.bf16.msra.mxu0 %v1790
      %1884 = vmatprep.subr.bf16.mxu0 0
      %1885 = vmatpush1.bf16.msra.mxu0 %v1793
      %1886 = vmatprep.subr.bf16.mxu0 0
      %1887 = vmatpush1.bf16.msra.mxu0 %v1796
      %1888 = vmatprep.subr.bf16.mxu0 0
      %1889 = vmatpush1.bf16.msra.mxu0 %v1799
      %1890 = vmatprep.subr.bf16.mxu0 0
      %1891 = vmatpush1.bf16.msra.mxu0 0
      %1892 = vmatprep.subr.bf16.mxu0 0
      %1893 = vmatpush1.bf16.msra.mxu0 0
      %1894 = vmatprep.subr.bf16.mxu0 0
      %1895 = vmatpush1.bf16.msra.mxu0 0
      %1896 = vmatprep.subr.bf16.mxu0 0
      %1897 = vmatpush1.bf16.msra.mxu0 0
      %1898 = vmatprep.subr.bf16.mxu0 0
      %1899 = vmatpush1.bf16.msra.mxu0 0
      %1900 = vmatprep.subr.bf16.mxu0 0
      %1901 = vmatpush1.bf16.msra.mxu0 0
      %1902 = vmatprep.subr.bf16.mxu0 0
      %1903 = vmatpush1.bf16.msra.mxu0 0
      %1904 = vmatprep.subr.bf16.mxu0 0
      %1905 = vmatpush1.bf16.msra.mxu0 0
      %1906 = vmatprep.subr.bf16.mxu0 0
      %1907 = vmatpush1.bf16.msra.mxu0 0
      %1908 = vmatprep.mubr.bf16.mxu0 0
      %1909 = vmatmul.mubr.bf16.gmra.mrb[0].mxu0 %v1821
      %v1910 = vpop.f32.mrb[0].mxu0
      %v1911 = vadd.f32 0.0, %v1910
      %v1912 = vpop.f32.mrb[0].mxu0
      %v1913 = vpop.f32.mrb[0].mxu0
      %v1914 = vadd.f32 0.0, %v1913
      %v1915 = vpop.f32.mrb[0].mxu0
      %1916 = vmatprep.mubr.bf16.mxu0 0
      %1917 = vmatmul.mubr.bf16.gmra.mrb[0].mxu0 %v1823
      %v1918 = vpop.f32.mrb[0].mxu0
      %v1919 = vadd.f32 0.0, %v1918
      %v1920 = vpop.f32.mrb[0].mxu0
      %v1921 = vpop.f32.mrb[0].mxu0
      %v1922 = vpop.f32.mrb[0].mxu0
      %1923 = vdwg.mxu0
      %v1924 = vadd.f32 %v1662, %v1860
      %v1925 = vadd.f32 %v1663, %v1862
      %v1926 = vadd.f32 %v1664, %v1911
      %v1927 = vadd.f32 %v1665, %v1864
      %v1928 = vadd.f32 %v1666, %v1866
      %v1929 = vadd.f32 %v1667, %v1914
      %v1930 = vadd.f32 %v1668, %v1870
      %v1931 = vadd.f32 %v1669, %v1872
      %v1932 = vadd.f32 %v1670, %v1919
      %v1933 = vrot.slane %v894, 4
      %v1936 = vsel %vm900, %v897, %v1933
      %s1937 = scalar_lea.vmem %s414, 672
      %v1938 = vld [vmem:[%s1937] sm:$0xff]
      %v1939 = vld [vmem:[%s1937 + $0x8] sm:$0xf]
      %v1940 = vld [vmem:[%s1937 + $0xc] sm:$0xff]
      %v1941 = vld [vmem:[%s1937 + $0x14] sm:$0xf]
      %v1942 = vld [vmem:[%s1937 + $0x18] sm:$0xff]
      %v1943 = vld [vmem:[%s1937 + $0x20] sm:$0xf]
      %v1944 = vld [vmem:[%s1937 + $0x24] sm:$0xff]
      %v1945 = vld [vmem:[%s1937 + $0x2c] sm:$0xf]
      %v1946 = vld [vmem:[%s1937 + $0x30] sm:$0xff]
      %v1947 = vld [vmem:[%s1937 + $0x38] sm:$0xf]
      %v1948 = vld [vmem:[%s1937 + $0x3c] sm:$0xff]
      %v1949 = vld [vmem:[%s1937 + $0x44] sm:$0xf]
      %v1950 = vld [vmem:[%s1937 + $0x48] sm:$0xff]
      %v1951 = vld [vmem:[%s1937 + $0x50] sm:$0xf]
      %v1952 = vld [vmem:[%s1937 + $0x54] sm:$0xff]
      %v1953 = vld [vmem:[%s1937 + $0x5c] sm:$0xf]
      %v1954 = vld [vmem:[%s1937 + $0x60] sm:$0xff]
      %v1955 = vld [vmem:[%s1937 + $0x68] sm:$0xf]
      %v1956 = vld [vmem:[%s1937 + $0x6c] sm:$0xff]
      %v1957 = vld [vmem:[%s1937 + $0x74] sm:$0xf]
      %v1958 = vld [vmem:[%s1937 + $0x78] sm:$0xff]
      %v1959 = vld [vmem:[%s1937 + $0x80] sm:$0xf]
      %v1960 = vld [vmem:[%s1937 + $0x84] sm:$0xff]
      %v1961 = vld [vmem:[%s1937 + $0x8c] sm:$0xf]
      %v1962 = vld [vmem:[%s1937 + $0x90] sm:$0xff]
      %v1963 = vld [vmem:[%s1937 + $0x98] sm:$0xf]
      %v1964 = vld [vmem:[%s1937 + $0x9c] sm:$0xff]
      %v1965 = vld [vmem:[%s1937 + $0xa4] sm:$0xf]
      %v1994 = vunpack.c.l.b16 %v1938
      %v1995 = vunpack.c.h.b16 %v1938
      %v1996 = vunpack.c.l.b16 %v1939
      %v1997 = vunpack.c.l.b16 %v1940
      %v1998 = vunpack.c.h.b16 %v1940
      %v1999 = vunpack.c.l.b16 %v1941
      %v2000 = vunpack.c.l.b16 %v1942
      %v2001 = vunpack.c.h.b16 %v1942
      %v2002 = vunpack.c.l.b16 %v1943
      %v2003 = vunpack.c.l.b16 %v1944
      %v2004 = vunpack.c.h.b16 %v1944
      %v2005 = vunpack.c.l.b16 %v1945
      %v2006 = vunpack.c.l.b16 %v1946
      %v2007 = vunpack.c.h.b16 %v1946
      %v2008 = vunpack.c.l.b16 %v1947
      %v2009 = vunpack.c.l.b16 %v1948
      %v2010 = vunpack.c.h.b16 %v1948
      %v2011 = vunpack.c.l.b16 %v1949
      %v2012 = vunpack.c.l.b16 %v1950
      %v2013 = vunpack.c.h.b16 %v1950
      %v2014 = vunpack.c.l.b16 %v1951
      %v2015 = vunpack.c.l.b16 %v1952
      %v2016 = vunpack.c.h.b16 %v1952
      %v2017 = vunpack.c.l.b16 %v1953
      %v2018 = vunpack.c.l.b16 %v1954
      %v2019 = vunpack.c.h.b16 %v1954
      %v2020 = vunpack.c.l.b16 %v1955
      %v2021 = vunpack.c.l.b16 %v1956
      %v2022 = vunpack.c.h.b16 %v1956
      %v2023 = vunpack.c.l.b16 %v1957
      %v2024 = vunpack.c.l.b16 %v1958
      %v2025 = vunpack.c.h.b16 %v1958
      %v2026 = vunpack.c.l.b16 %v1959
      %v2027 = vunpack.c.l.b16 %v1960
      %v2028 = vunpack.c.h.b16 %v1960
      %v2029 = vunpack.c.l.b16 %v1961
      %v2030 = vunpack.c.l.b16 %v1962
      %v2031 = vunpack.c.h.b16 %v1962
      %v2032 = vunpack.c.l.b16 %v1963
      %v2033 = vunpack.c.l.b16 %v1964
      %v2034 = vunpack.c.h.b16 %v1964
      %v2035 = vunpack.c.l.b16 %v1965
      %v2036 = vpack.c.b16 %v1997, %v1994
      %v2037 = vpack.c.b16 %v1998, %v1995
      %v2038 = vpack.c.b16 %v1999, %v1996
      %v2039 = vpack.c.b16 %v2003, %v2000
      %v2040 = vpack.c.b16 %v2004, %v2001
      %v2041 = vpack.c.b16 %v2005, %v2002
      %v2042 = vpack.c.b16 %v2009, %v2006
      %v2043 = vpack.c.b16 %v2010, %v2007
      %v2044 = vpack.c.b16 %v2011, %v2008
      %v2045 = vpack.c.b16 %v2015, %v2012
      %v2046 = vpack.c.b16 %v2016, %v2013
      %v2047 = vpack.c.b16 %v2017, %v2014
      %v2048 = vpack.c.b16 %v2021, %v2018
      %v2049 = vpack.c.b16 %v2022, %v2019
      %v2050 = vpack.c.b16 %v2023, %v2020
      %v2051 = vpack.c.b16 %v2027, %v2024
      %v2052 = vpack.c.b16 %v2028, %v2025
      %v2053 = vpack.c.b16 %v2029, %v2026
      %v2054 = vpack.c.b16 %v2033, %v2030
      %v2055 = vpack.c.b16 %v2034, %v2031
      %v2056 = vpack.c.b16 %v2035, %v2032
      %v2078 = vsel %vm1092, %v1936, 0
      %v2080 = vsel %vm1092, %v1933, 0
      %2082 = vmatprep.subr.bf16.mxu0 %v2037
      %2083 = vmatpush1.bf16.msra.mxu0 %v2036
      %2084 = vmatprep.subr.bf16.mxu0 %v2040
      %2085 = vmatpush1.bf16.msra.mxu0 %v2039
      %2086 = vmatprep.subr.bf16.mxu0 %v2043
      %2087 = vmatpush1.bf16.msra.mxu0 %v2042
      %2088 = vmatprep.subr.bf16.mxu0 %v2046
      %2089 = vmatpush1.bf16.msra.mxu0 %v2045
      %2090 = vmatprep.subr.bf16.mxu0 %v2049
      %2091 = vmatpush1.bf16.msra.mxu0 %v2048
      %2092 = vmatprep.subr.bf16.mxu0 %v2052
      %2093 = vmatpush1.bf16.msra.mxu0 %v2051
      %2094 = vmatprep.subr.bf16.mxu0 %v2055
      %2095 = vmatpush1.bf16.msra.mxu0 %v2054
      %2096 = vmatprep.subr.bf16.mxu0 0
      %2097 = vmatpush1.bf16.msra.mxu0 0
      %2098 = vmatprep.subr.bf16.mxu0 0
      %2099 = vmatpush1.bf16.msra.mxu0 0
      %2100 = vmatprep.subr.bf16.mxu0 0
      %2101 = vmatpush1.bf16.msra.mxu0 0
      %2102 = vmatprep.subr.bf16.mxu0 0
      %2103 = vmatpush1.bf16.msra.mxu0 0
      %2104 = vmatprep.subr.bf16.mxu0 0
      %2105 = vmatpush1.bf16.msra.mxu0 0
      %2106 = vmatprep.subr.bf16.mxu0 0
      %2107 = vmatpush1.bf16.msra.mxu0 0
      %2108 = vmatprep.subr.bf16.mxu0 0
      %2109 = vmatpush1.bf16.msra.mxu0 0
      %2110 = vmatprep.subr.bf16.mxu0 0
      %2111 = vmatpush1.bf16.msra.mxu0 0
      %2112 = vmatprep.subr.bf16.mxu0 0
      %2113 = vmatpush1.bf16.msra.mxu0 0
      %2114 = vmatprep.mubr.bf16.mxu0 0
      %2115 = vmatmul.mubr.bf16.gmra.mrb[0].mxu0 %v2078
      %v2116 = vpop.f32.mrb[0].mxu0
      %v2117 = vadd.f32 0.0, %v2116
      %v2118 = vpop.f32.mrb[0].mxu0
      %v2119 = vadd.f32 0.0, %v2118
      %v2120 = vpop.f32.mrb[0].mxu0
      %v2121 = vadd.f32 0.0, %v2120
      %v2122 = vpop.f32.mrb[0].mxu0
      %v2123 = vadd.f32 0.0, %v2122
      %2124 = vmatprep.mubr.bf16.mxu0 0
      %2125 = vmatmul.mubr.bf16.gmra.mrb[0].mxu0 %v2080
      %v2126 = vpop.f32.mrb[0].mxu0
      %v2127 = vadd.f32 0.0, %v2126
      %v2128 = vpop.f32.mrb[0].mxu0
      %v2129 = vadd.f32 0.0, %v2128
      %v2130 = vpop.f32.mrb[0].mxu0
      %v2131 = vpop.f32.mrb[0].mxu0
      %2132 = vdwg.mxu0
      %2133 = vmatprep.subr.bf16.mxu0 0
      %2134 = vmatpush1.bf16.msra.mxu0 %v2038
      %2135 = vmatprep.subr.bf16.mxu0 0
      %2136 = vmatpush1.bf16.msra.mxu0 %v2041
      %2137 = vmatprep.subr.bf16.mxu0 0
      %2138 = vmatpush1.bf16.msra.mxu0 %v2044
      %2139 = vmatprep.subr.bf16.mxu0 0
      %2140 = vmatpush1.bf16.msra.mxu0 %v2047
      %2141 = vmatprep.subr.bf16.mxu0 0
      %2142 = vmatpush1.bf16.msra.mxu0 %v2050
      %2143 = vmatprep.subr.bf16.mxu0 0
      %2144 = vmatpush1.bf16.msra.mxu0 %v2053
      %2145 = vmatprep.subr.bf16.mxu0 0
      %2146 = vmatpush1.bf16.msra.mxu0 %v2056
      %2147 = vmatprep.subr.bf16.mxu0 0
      %2148 = vmatpush1.bf16.msra.mxu0 0
      %2149 = vmatprep.subr.bf16.mxu0 0
      %2150 = vmatpush1.bf16.msra.mxu0 0
      %2151 = vmatprep.subr.bf16.mxu0 0
      %2152 = vmatpush1.bf16.msra.mxu0 0
      %2153 = vmatprep.subr.bf16.mxu0 0
      %2154 = vmatpush1.bf16.msra.mxu0 0
      %2155 = vmatprep.subr.bf16.mxu0 0
      %2156 = vmatpush1.bf16.msra.mxu0 0
      %2157 = vmatprep.subr.bf16.mxu0 0
      %2158 = vmatpush1.bf16.msra.mxu0 0
      %2159 = vmatprep.subr.bf16.mxu0 0
      %2160 = vmatpush1.bf16.msra.mxu0 0
      %2161 = vmatprep.subr.bf16.mxu0 0
      %2162 = vmatpush1.bf16.msra.mxu0 0
      %2163 = vmatprep.subr.bf16.mxu0 0
      %2164 = vmatpush1.bf16.msra.mxu0 0
      %2165 = vmatprep.mubr.bf16.mxu0 0
      %2166 = vmatmul.mubr.bf16.gmra.mrb[0].mxu0 %v2078
      %v2167 = vpop.f32.mrb[0].mxu0
      %v2168 = vadd.f32 0.0, %v2167
      %v2169 = vpop.f32.mrb[0].mxu0
      %v2170 = vpop.f32.mrb[0].mxu0
      %v2171 = vadd.f32 0.0, %v2170
      %v2172 = vpop.f32.mrb[0].mxu0
      %2173 = vmatprep.mubr.bf16.mxu0 0
      %2174 = vmatmul.mubr.bf16.gmra.mrb[0].mxu0 %v2080
      %v2175 = vpop.f32.mrb[0].mxu0
      %v2176 = vadd.f32 0.0, %v2175
      %v2177 = vpop.f32.mrb[0].mxu0
      %v2178 = vpop.f32.mrb[0].mxu0
      %v2179 = vpop.f32.mrb[0].mxu0
      %2180 = vdwg.mxu0
      %v2181 = vadd.f32 %v1924, %v2117
      %v2182 = vadd.f32 %v1925, %v2119
      %v2183 = vadd.f32 %v1926, %v2168
      %v2184 = vadd.f32 %v1927, %v2121
      %v2185 = vadd.f32 %v1928, %v2123
      %v2186 = vadd.f32 %v1929, %v2171
      %v2187 = vadd.f32 %v1930, %v2127
      %v2188 = vadd.f32 %v1931, %v2129
      %v2189 = vadd.f32 %v1932, %v2176
      %v2190 = vlaneseq
      %v2191 = vshrl.u32 %v2190, 7
      %v2192 = vsub.s32 1, %v2191
      %v2193 = vrot.slane %v445, %v2192
      %v2194 = vlaneseq
      %v2195 = vshrl.u32 %v2194, 7
      %v2196 = vsub.s32 1, %v2195
      %v2197 = vrot.slane %v446, %v2196
      %v2198 = vlaneseq
      %v2199 = vshrl.u32 %v2198, 7
      %v2200 = vsub.s32 1, %v2199
      %v2201 = vrot.slane %v447, %v2200
      %v2202 = vadd.f32 %v2181, %v2193
      %v2203 = vadd.f32 %v2182, %v2197
      %v2204 = vadd.f32 %v2183, %v2201
      %v2205 = vadd.f32 %v2184, %v2193
      %v2206 = vadd.f32 %v2185, %v2197
      %v2207 = vadd.f32 %v2186, %v2201
      %v2208 = vadd.f32 %v2187, %v2193
      %v2209 = vadd.f32 %v2188, %v2197
      %v2210 = vadd.f32 %v2189, %v2201
      %v2211 = vmax.f32 %v2202, 0.0
      %v2212 = vmax.f32 %v2203, 0.0
      %v2213 = vmax.f32 %v2204, 0.0
      %v2214 = vmax.f32 %v2205, 0.0
      %v2215 = vmax.f32 %v2206, 0.0
      %v2216 = vmax.f32 %v2207, 0.0
      %v2217 = vmax.f32 %v2208, 0.0
      %v2218 = vmax.f32 %v2209, 0.0
      %v2219 = vmax.f32 %v2210, 0.0
      %v2223 = vrot.slane %v2211, 1
      %v2224 = vrot.slane %v2212, 1
      %v2225 = vrot.slane %v2213, 1
      %v2229 = vmax.f32 %v2211, %v2223
      %v2230 = vmax.f32 %v2212, %v2224
      %v2231 = vmax.f32 %v2213, %v2225
      %2233 = vrot.lane.b32.xlu0 %v2229, 96
      %v2234 = vpop.permute.xlu0 %2233
      %v2236 = vmax.f32 %v2229, %v2234
      %2238 = vrot.lane.b32.xlu0 %v2230, 96
      %v2239 = vpop.permute.xlu0 %2238
      %v2241 = vmax.f32 %v2230, %v2239
      %2243 = vrot.lane.b32.xlu0 %v2231, 96
      %v2244 = vpop.permute.xlu0 %2243
      %v2246 = vmax.f32 %v2231, %v2244
      %v2250 = vrot.slane %v2214, 1
      %v2251 = vrot.slane %v2215, 1
      %v2252 = vrot.slane %v2216, 1
      %v2256 = vmax.f32 %v2214, %v2250
      %v2257 = vmax.f32 %v2215, %v2251
      %v2258 = vmax.f32 %v2216, %v2252
      %2260 = vrot.lane.b32.xlu0 %v2256, 96
      %v2261 = vpop.permute.xlu0 %2260
      %v2263 = vmax.f32 %v2256, %v2261
      %2265 = vrot.lane.b32.xlu0 %v2257, 96
      %v2266 = vpop.permute.xlu0 %2265
      %v2268 = vmax.f32 %v2257, %v2266
      %2270 = vrot.lane.b32.xlu0 %v2258, 96
      %v2271 = vpop.permute.xlu0 %2270
      %v2273 = vmax.f32 %v2258, %v2271
      %2275 = vrot.lane.b32.xlu0 %v2236, 96
      %v2276 = vpop.permute.xlu0 %2275
      %2279 = vrot.lane.b32.xlu0 %v2241, 64
      %v2280 = vpop.permute.xlu0 %2279
      %2282 = vrot.lane.b32.xlu0 %v2241, 32
      %v2283 = vpop.permute.xlu0 %2282
      %v2285 = vrot.slane %v2236, 2
      %2286 = vrot.lane.b32.xlu0 %v2285, 32
      %v2287 = vpop.permute.xlu0 %2286
      %v2290 = vrot.slane %v2241, 2
      %2291 = vrot.lane.b32.xlu0 %v2290, 96
      %v2292 = vpop.permute.xlu0 %2291
      %2294 = vrot.lane.b32.xlu0 %v2290, 64
      %v2295 = vpop.permute.xlu0 %2294
      %v2298 = vrot.slane %v2246, 2
      %2299 = vrot.lane.b32.xlu0 %v2298, 32
      %v2300 = vpop.permute.xlu0 %2299
      %v2302 = vrot.slane %v2236, 4
      %2303 = vrot.lane.b32.xlu0 %v2302, 64
      %v2304 = vpop.permute.xlu0 %2303
      %2306 = vrot.lane.b32.xlu0 %v2302, 32
      %v2307 = vpop.permute.xlu0 %2306
      %v2309 = vrot.slane %v2241, 4
      %2311 = vrot.lane.b32.xlu0 %v2309, 96
      %v2312 = vpop.permute.xlu0 %2311
      %v2314 = vrot.slane %v2246, 4
      %2315 = vrot.lane.b32.xlu0 %v2314, 64
      %v2316 = vpop.permute.xlu0 %2315
      %v2318 = vrot.slane %v2236, 6
      %2319 = vrot.lane.b32.xlu0 %v2318, 96
      %v2320 = vpop.permute.xlu0 %2319
      %vm2322 = vcmask 261120
      %v2323 = vsel %vm2322, %v2236, %v2276
      %vm2324 = vcmask 523264
      %v2325 = vsel %vm2324, %v2323, %v2280
      %vm2326 = vcmask 785408
      %v2327 = vsel %vm2326, %v2325, %v2283
      %v2328 = vsel %vm2322, %v2246, %v2287
      %v2329 = vsel %vm2324, %v2328, %v2285
      %v2330 = vsel %vm2326, %v2329, %v2292
      %v2331 = vsel %vm2322, %v2295, %v2300
      %v2332 = vsel %vm2324, %v2331, %v2304
      %v2333 = vsel %vm2326, %v2332, %v2307
      %v2334 = vsel %vm2322, %v2309, %v2312
      %v2335 = vsel %vm2324, %v2334, %v2316
      %v2336 = vsel %vm2326, %v2335, %v2320
      %2337 = vrot.lane.b32.xlu0 %v2236, 64
      %v2338 = vpop.permute.xlu0 %2337
      %2340 = vrot.lane.b32.xlu0 %v2246, 96
      %v2341 = vpop.permute.xlu0 %2340
      %v2344 = vrot.slane %v2263, 2
      %2346 = vrot.lane.b32.xlu0 %v2344, 96
      %v2347 = vpop.permute.xlu0 %2346
      %v2350 = vrot.slane %v2268, 2
      %2351 = vrot.lane.b32.xlu0 %v2350, 64
      %v2352 = vpop.permute.xlu0 %2351
      %2354 = vrot.lane.b32.xlu0 %v2350, 32
      %v2355 = vpop.permute.xlu0 %2354
      %v2358 = vrot.slane %v2273, 2
      %v2359 = vsel %vm2322, %v2338, %v2283
      %v2360 = vsel %vm2324, %v2359, %v2241
      %v2361 = vsel %vm2326, %v2360, %v2341
      %v2362 = vsel %vm2322, %v2344, %v2347
      %v2363 = vsel %vm2324, %v2362, %v2352
      %v2364 = vsel %vm2326, %v2363, %v2355
      %v2367 = vrot.slane %v2361, 6
      %v2368 = vrot.slane %v2364, 6
      %v2369 = vrot.slane %v2358, 6
      %v2376 = vrot.slane %v2217, 1
      %v2377 = vrot.slane %v2218, 1
      %v2378 = vrot.slane %v2219, 1
      %v2382 = vmax.f32 %v2217, %v2376
      %v2383 = vmax.f32 %v2218, %v2377
      %v2384 = vmax.f32 %v2219, %v2378
      %2386 = vrot.lane.b32.xlu0 %v2382, 96
      %v2387 = vpop.permute.xlu0 %2386
      %v2389 = vmax.f32 %v2382, %v2387
      %2391 = vrot.lane.b32.xlu0 %v2383, 96
      %v2392 = vpop.permute.xlu0 %2391
      %v2394 = vmax.f32 %v2383, %v2392
      %2396 = vrot.lane.b32.xlu0 %v2384, 96
      %v2397 = vpop.permute.xlu0 %2396
      %v2399 = vmax.f32 %v2384, %v2397
      %2400 = vrot.lane.b32.xlu0 %v2263, 96
      %v2401 = vpop.permute.xlu0 %2400
      %2403 = vrot.lane.b32.xlu0 %v2268, 64
      %v2404 = vpop.permute.xlu0 %2403
      %2406 = vrot.lane.b32.xlu0 %v2268, 32
      %v2407 = vpop.permute.xlu0 %2406
      %2409 = vrot.lane.b32.xlu0 %v2344, 32
      %v2410 = vpop.permute.xlu0 %2409
      %2412 = vrot.lane.b32.xlu0 %v2350, 96
      %v2413 = vpop.permute.xlu0 %2412
      %2415 = vrot.lane.b32.xlu0 %v2358, 32
      %v2416 = vpop.permute.xlu0 %2415
      %v2418 = vrot.slane %v2263, 4
      %2419 = vrot.lane.b32.xlu0 %v2418, 64
      %v2420 = vpop.permute.xlu0 %2419
      %2422 = vrot.lane.b32.xlu0 %v2418, 32
      %v2423 = vpop.permute.xlu0 %2422
      %v2425 = vrot.slane %v2268, 4
      %2427 = vrot.lane.b32.xlu0 %v2425, 96
      %v2428 = vpop.permute.xlu0 %2427
      %v2430 = vrot.slane %v2273, 4
      %2431 = vrot.lane.b32.xlu0 %v2430, 64
      %v2432 = vpop.permute.xlu0 %2431
      %v2435 = vrot.slane %v2389, 6
      %2436 = vrot.lane.b32.xlu0 %v2435, 96
      %v2437 = vpop.permute.xlu0 %2436
      %v2439 = vsel %vm2322, %v2263, %v2401
      %v2440 = vsel %vm2324, %v2439, %v2404
      %v2441 = vsel %vm2326, %v2440, %v2407
      %v2442 = vsel %vm2322, %v2273, %v2410
      %v2443 = vsel %vm2324, %v2442, %v2344
      %v2444 = vsel %vm2326, %v2443, %v2413
      %v2445 = vsel %vm2322, %v2352, %v2416
      %v2446 = vsel %vm2324, %v2445, %v2420
      %v2447 = vsel %vm2326, %v2446, %v2423
      %v2448 = vsel %vm2322, %v2425, %v2428
      %v2449 = vsel %vm2324, %v2448, %v2432
      %v2450 = vsel %vm2326, %v2449, %v2437
      %2451 = vrot.lane.b32.xlu0 %v2389, 64
      %v2452 = vpop.permute.xlu0 %2451
      %2455 = vrot.lane.b32.xlu0 %v2394, 32
      %v2456 = vpop.permute.xlu0 %2455
      %2459 = vrot.lane.b32.xlu0 %v2399, 96
      %v2460 = vpop.permute.xlu0 %2459
      %v2462 = vrot.slane %v2389, 2
      %2464 = vrot.lane.b32.xlu0 %v2462, 96
      %v2465 = vpop.permute.xlu0 %2464
      %v2467 = vrot.slane %v2394, 2
      %2468 = vrot.lane.b32.xlu0 %v2467, 64
      %v2469 = vpop.permute.xlu0 %2468
      %2471 = vrot.lane.b32.xlu0 %v2467, 32
      %v2472 = vpop.permute.xlu0 %2471
      %v2474 = vrot.slane %v2399, 2
      %v2475 = vsel %vm2322, %v2452, %v2456
      %v2476 = vsel %vm2324, %v2475, %v2394
      %v2477 = vsel %vm2326, %v2476, %v2460
      %v2478 = vsel %vm2322, %v2462, %v2465
      %v2479 = vsel %vm2324, %v2478, %v2469
      %v2480 = vsel %vm2326, %v2479, %v2472
      %v2483 = vrot.slane %v2477, 6
      %v2484 = vrot.slane %v2480, 6
      %v2485 = vrot.slane %v2474, 6
      %v2490 = vrot.slane %v2441, 1
      %v2491 = vrot.slane %v2444, 1
      %v2492 = vrot.slane %v2447, 1
      %v2493 = vrot.slane %v2450, 1
      %v2494 = vrot.slane %v2483, 1
      %v2495 = vrot.slane %v2484, 1
      %v2496 = vrot.slane %v2485, 1
      %v2504 = vsel %vm502, %v2327, %v2490
      %v2505 = vsel %vm502, %v2330, %v2491
      %v2506 = vsel %vm502, %v2333, %v2492
      %v2507 = vsel %vm502, %v2336, %v2493
      %v2508 = vsel %vm502, %v2367, %v2494
      %v2509 = vsel %vm502, %v2368, %v2495
      %v2510 = vsel %vm502, %v2369, %v2496
      %v2511 = vpack.c.bf16 %v2504, %v2504
      %v2512 = vpack.c.bf16 %v2505, %v2505
      %v2513 = vpack.c.bf16 %v2506, %v2506
      %v2514 = vpack.c.bf16 %v2507, %v2507
      %v2515 = vpack.c.bf16 %v2508, %v2508
      %v2516 = vpack.c.bf16 %v2509, %v2509
      %v2517 = vpack.c.bf16 %v2510, %v2510
      %v2518 = vld [vmem:[%s419] sm:$0xf]
      %v2519 = vld [vmem:[%s419 + $0x4] sm:$0xf]
      %v2520 = vld [vmem:[%s419 + $0x8] sm:$0xf]
      %v2521 = vld [vmem:[%s419 + $0xc] sm:$0xf]
      %v2522 = vld [vmem:[%s419 + $0x10] sm:$0xf]
      %v2523 = vld [vmem:[%s419 + $0x14] sm:$0xf]
      %v2524 = vld [vmem:[%s419 + $0x18] sm:$0xf]
      %v2525 = vld [vmem:[%s419 + $0x1c] sm:$0xf]
      %v2526 = vld [vmem:[%s419 + $0x20] sm:$0xf]
      %v2527 = vld [vmem:[%s419 + $0x24] sm:$0xf]
      %v2528 = vld [vmem:[%s419 + $0x28] sm:$0xf]
      %v2529 = vld [vmem:[%s419 + $0x2c] sm:$0xf]
      %v2530 = vld [vmem:[%s419 + $0x30] sm:$0xf]
      %v2531 = vld [vmem:[%s419 + $0x34] sm:$0xf]
      %v2532 = vld [vmem:[%s419 + $0x38] sm:$0xf]
      %v2533 = vld [vmem:[%s419 + $0x3c] sm:$0xf]
      %v2534 = vld [vmem:[%s419 + $0x40] sm:$0xf]
      %v2535 = vld [vmem:[%s419 + $0x44] sm:$0xf]
      %v2536 = vld [vmem:[%s419 + $0x48] sm:$0xf]
      %v2537 = vld [vmem:[%s419 + $0x4c] sm:$0xf]
      %v2538 = vld [vmem:[%s419 + $0x50] sm:$0xf]
      %v2539 = vld [vmem:[%s419 + $0x54] sm:$0xf]
      %v2540 = vld [vmem:[%s419 + $0x58] sm:$0xf]
      %v2541 = vld [vmem:[%s419 + $0x5c] sm:$0xf]
      %v2542 = vld [vmem:[%s419 + $0x60] sm:$0xf]
      %v2543 = vld [vmem:[%s419 + $0x64] sm:$0xf]
      %v2544 = vld [vmem:[%s419 + $0x68] sm:$0xf]
      %v2545 = vld [vmem:[%s419 + $0x6c] sm:$0xf]
      %v2546 = vld [vmem:[%s419 + $0x70] sm:$0xf]
      %v2547 = vld [vmem:[%s419 + $0x74] sm:$0xf]
      %v2548 = vld [vmem:[%s419 + $0x78] sm:$0xf]
      %v2549 = vld [vmem:[%s419 + $0x7c] sm:$0xf]
      %v2550 = vld [vmem:[%s419 + $0x80] sm:$0xf]
      %v2551 = vld [vmem:[%s419 + $0x84] sm:$0xf]
      %v2552 = vld [vmem:[%s419 + $0x88] sm:$0xf]
      %v2553 = vld [vmem:[%s419 + $0x8c] sm:$0xf]
      %v2554 = vld [vmem:[%s419 + $0x90] sm:$0xf]
      %v2555 = vld [vmem:[%s419 + $0x94] sm:$0xf]
      %v2556 = vld [vmem:[%s419 + $0x98] sm:$0xf]
      %v2557 = vld [vmem:[%s419 + $0x9c] sm:$0xf]
      %v2558 = vld [vmem:[%s419 + $0xa0] sm:$0xf]
      %v2559 = vld [vmem:[%s419 + $0xa4] sm:$0xf]
      %v2560 = vld [vmem:[%s419 + $0xa8] sm:$0xf]
      %v2561 = vld [vmem:[%s419 + $0xac] sm:$0xf]
      %v2562 = vld [vmem:[%s419 + $0xb0] sm:$0xf]
      %v2563 = vld [vmem:[%s419 + $0xb4] sm:$0xf]
      %v2564 = vld [vmem:[%s419 + $0xb8] sm:$0xf]
      %v2565 = vld [vmem:[%s419 + $0xbc] sm:$0xf]
      %v2566 = vld [vmem:[%s419 + $0xc0] sm:$0xf]
      %v2567 = vld [vmem:[%s419 + $0xc4] sm:$0xf]
      %v2568 = vld [vmem:[%s419 + $0xc8] sm:$0xf]
      %v2569 = vld [vmem:[%s419 + $0xcc] sm:$0xf]
      %v2570 = vld [vmem:[%s419 + $0xd0] sm:$0xf]
      %v2571 = vld [vmem:[%s419 + $0xd4] sm:$0xf]
      %v2572 = vld [vmem:[%s419 + $0xd8] sm:$0xf]
      %v2573 = vld [vmem:[%s419 + $0xdc] sm:$0xf]
      %v2574 = vld [vmem:[%s419 + $0xe0] sm:$0xf]
      %v2575 = vld [vmem:[%s419 + $0xe4] sm:$0xf]
      %v2576 = vld [vmem:[%s419 + $0xe8] sm:$0xf]
      %v2577 = vld [vmem:[%s419 + $0xec] sm:$0xf]
      %v2578 = vld [vmem:[%s419 + $0xf0] sm:$0xf]
      %v2579 = vld [vmem:[%s419 + $0xf4] sm:$0xf]
      %v2580 = vld [vmem:[%s419 + $0xf8] sm:$0xf]
      %v2581 = vld [vmem:[%s419 + $0xfc] sm:$0xf]
      %v2582 = vld [vmem:[%s419 + $0x100] sm:$0xf]
      %v2583 = vld [vmem:[%s419 + $0x104] sm:$0xf]
      %v2584 = vld [vmem:[%s419 + $0x108] sm:$0xf]
      %v2585 = vld [vmem:[%s419 + $0x10c] sm:$0xf]
      %v2586 = vld [vmem:[%s419 + $0x110] sm:$0xf]
      %v2587 = vld [vmem:[%s419 + $0x114] sm:$0xf]
      %v2588 = vld [vmem:[%s419 + $0x118] sm:$0xf]
      %v2589 = vld [vmem:[%s419 + $0x11c] sm:$0xf]
      %v2590 = vld [vmem:[%s419 + $0x120] sm:$0xf]
      %v2591 = vld [vmem:[%s419 + $0x124] sm:$0xf]
      %v2592 = vld [vmem:[%s419 + $0x128] sm:$0xf]
      %v2593 = vld [vmem:[%s419 + $0x12c] sm:$0xf]
      %v2594 = vld [vmem:[%s419 + $0x130] sm:$0xf]
      %v2595 = vld [vmem:[%s419 + $0x134] sm:$0xf]
      %v2596 = vld [vmem:[%s419 + $0x138] sm:$0xf]
      %v2597 = vld [vmem:[%s419 + $0x13c] sm:$0xf]
      %v2598 = vld [vmem:[%s419 + $0x140] sm:$0xf]
      %v2599 = vld [vmem:[%s419 + $0x144] sm:$0xf]
      %v2600 = vld [vmem:[%s419 + $0x148] sm:$0xf]
      %v2601 = vld [vmem:[%s419 + $0x14c] sm:$0xf]
      %v2602 = vld [vmem:[%s419 + $0x150] sm:$0xf]
      %v2603 = vld [vmem:[%s419 + $0x154] sm:$0xf]
      %v2604 = vld [vmem:[%s419 + $0x158] sm:$0xf]
      %v2605 = vld [vmem:[%s419 + $0x15c] sm:$0xf]
      %v2606 = vld [vmem:[%s419 + $0x160] sm:$0xf]
      %v2607 = vld [vmem:[%s419 + $0x164] sm:$0xf]
      %v2608 = vld [vmem:[%s419 + $0x168] sm:$0xf]
      %v2609 = vld [vmem:[%s419 + $0x16c] sm:$0xf]
      %v2610 = vld [vmem:[%s419 + $0x170] sm:$0xf]
      %v2611 = vld [vmem:[%s419 + $0x174] sm:$0xf]
      %v2612 = vld [vmem:[%s419 + $0x178] sm:$0xf]
      %v2613 = vld [vmem:[%s419 + $0x17c] sm:$0xf]
      %v2614 = vld [vmem:[%s419 + $0x180] sm:$0xf]
      %v2615 = vld [vmem:[%s419 + $0x184] sm:$0xf]
      %v2616 = vld [vmem:[%s419 + $0x188] sm:$0xf]
      %v2617 = vld [vmem:[%s419 + $0x18c] sm:$0xf]
      %v2618 = vlaneseq
      %v2619 = vshrl.u32 %v2618, 7
      %v2620 = vsub.s32 2, %v2619
      %v2621 = vrot.slane %v445, %v2620
      %v2722 = vunpack.c.l.b16 %v2518
      %v2723 = vunpack.c.l.b16 %v2519
      %v2724 = vunpack.c.l.b16 %v2520
      %v2725 = vunpack.c.l.b16 %v2521
      %v2726 = vunpack.c.l.b16 %v2522
      %v2727 = vunpack.c.l.b16 %v2523
      %v2728 = vunpack.c.l.b16 %v2524
      %v2729 = vunpack.c.l.b16 %v2525
      %v2730 = vunpack.c.l.b16 %v2526
      %v2731 = vunpack.c.l.b16 %v2527
      %v2732 = vunpack.c.l.b16 %v2528
      %v2733 = vunpack.c.l.b16 %v2529
      %v2734 = vunpack.c.l.b16 %v2530
      %v2735 = vunpack.c.l.b16 %v2531
      %v2736 = vunpack.c.l.b16 %v2532
      %v2737 = vunpack.c.l.b16 %v2533
      %v2738 = vunpack.c.l.b16 %v2534
      %v2739 = vunpack.c.l.b16 %v2535
      %v2740 = vunpack.c.l.b16 %v2536
      %v2741 = vunpack.c.l.b16 %v2537
      %v2742 = vunpack.c.l.b16 %v2538
      %v2743 = vunpack.c.l.b16 %v2539
      %v2744 = vunpack.c.l.b16 %v2540
      %v2745 = vunpack.c.l.b16 %v2541
      %v2746 = vunpack.c.l.b16 %v2542
      %v2747 = vunpack.c.l.b16 %v2543
      %v2748 = vunpack.c.l.b16 %v2544
      %v2749 = vunpack.c.l.b16 %v2545
      %v2750 = vunpack.c.l.b16 %v2546
      %v2751 = vunpack.c.l.b16 %v2547
      %v2752 = vunpack.c.l.b16 %v2548
      %v2753 = vunpack.c.l.b16 %v2549
      %v2754 = vunpack.c.l.b16 %v2550
      %v2755 = vunpack.c.l.b16 %v2551
      %v2756 = vunpack.c.l.b16 %v2552
      %v2757 = vunpack.c.l.b16 %v2553
      %v2758 = vunpack.c.l.b16 %v2554
      %v2759 = vunpack.c.l.b16 %v2555
      %v2760 = vunpack.c.l.b16 %v2556
      %v2761 = vunpack.c.l.b16 %v2557
      %v2762 = vunpack.c.l.b16 %v2558
      %v2763 = vunpack.c.l.b16 %v2559
      %v2764 = vunpack.c.l.b16 %v2560
      %v2765 = vunpack.c.l.b16 %v2561
      %v2766 = vunpack.c.l.b16 %v2562
      %v2767 = vunpack.c.l.b16 %v2563
      %v2768 = vunpack.c.l.b16 %v2564
      %v2769 = vunpack.c.l.b16 %v2565
      %v2770 = vunpack.c.l.b16 %v2566
      %v2771 = vunpack.c.l.b16 %v2567
      %v2772 = vunpack.c.l.b16 %v2568
      %v2773 = vunpack.c.l.b16 %v2569
      %v2774 = vunpack.c.l.b16 %v2570
      %v2775 = vunpack.c.l.b16 %v2571
      %v2776 = vunpack.c.l.b16 %v2572
      %v2777 = vunpack.c.l.b16 %v2573
      %v2778 = vunpack.c.l.b16 %v2574
      %v2779 = vunpack.c.l.b16 %v2575
      %v2780 = vunpack.c.l.b16 %v2576
      %v2781 = vunpack.c.l.b16 %v2577
      %v2782 = vunpack.c.l.b16 %v2578
      %v2783 = vunpack.c.l.b16 %v2579
      %v2784 = vunpack.c.l.b16 %v2580
      %v2785 = vunpack.c.l.b16 %v2581
      %v2786 = vunpack.c.l.b16 %v2582
      %v2787 = vunpack.c.l.b16 %v2583
      %v2788 = vunpack.c.l.b16 %v2584
      %v2789 = vunpack.c.l.b16 %v2585
      %v2790 = vunpack.c.l.b16 %v2586
      %v2791 = vunpack.c.l.b16 %v2587
      %v2792 = vunpack.c.l.b16 %v2588
      %v2793 = vunpack.c.l.b16 %v2589
      %v2794 = vunpack.c.l.b16 %v2590
      %v2795 = vunpack.c.l.b16 %v2591
      %v2796 = vunpack.c.l.b16 %v2592
      %v2797 = vunpack.c.l.b16 %v2593
      %v2798 = vunpack.c.l.b16 %v2594
      %v2799 = vunpack.c.l.b16 %v2595
      %v2800 = vunpack.c.l.b16 %v2596
      %v2801 = vunpack.c.l.b16 %v2597
      %v2802 = vunpack.c.l.b16 %v2598
      %v2803 = vunpack.c.l.b16 %v2599
      %v2804 = vunpack.c.l.b16 %v2600
      %v2805 = vunpack.c.l.b16 %v2601
      %v2806 = vunpack.c.l.b16 %v2602
      %v2807 = vunpack.c.l.b16 %v2603
      %v2808 = vunpack.c.l.b16 %v2604
      %v2809 = vunpack.c.l.b16 %v2605
      %v2810 = vunpack.c.l.b16 %v2606
      %v2811 = vunpack.c.l.b16 %v2607
      %v2812 = vunpack.c.l.b16 %v2608
      %v2813 = vunpack.c.l.b16 %v2609
      %v2814 = vunpack.c.l.b16 %v2610
      %v2815 = vunpack.c.l.b16 %v2611
      %v2816 = vunpack.c.l.b16 %v2612
      %v2817 = vunpack.c.l.b16 %v2613
      %v2818 = vunpack.c.l.b16 %v2614
      %v2819 = vunpack.c.l.b16 %v2615
      %v2820 = vunpack.c.l.b16 %v2616
      %v2821 = vunpack.c.l.b16 %v2617
      %v2822 = vpack.c.b16 %v2723, %v2722
      %v2823 = vpack.c.b16 %v2725, %v2724
      %v2824 = vpack.c.b16 %v2727, %v2726
      %v2825 = vpack.c.b16 %v2729, %v2728
      %v2826 = vpack.c.b16 %v2731, %v2730
      %v2827 = vpack.c.b16 %v2733, %v2732
      %v2828 = vpack.c.b16 %v2735, %v2734
      %v2829 = vpack.c.b16 %v2737, %v2736
      %v2830 = vpack.c.b16 %v2739, %v2738
      %v2831 = vpack.c.b16 %v2741, %v2740
      %v2832 = vpack.c.b16 %v2743, %v2742
      %v2833 = vpack.c.b16 %v2745, %v2744
      %v2834 = vpack.c.b16 %v2747, %v2746
      %v2835 = vpack.c.b16 %v2749, %v2748
      %v2836 = vpack.c.b16 %v2751, %v2750
      %v2837 = vpack.c.b16 %v2753, %v2752
      %v2838 = vpack.c.b16 %v2755, %v2754
      %v2839 = vpack.c.b16 %v2757, %v2756
      %v2840 = vpack.c.b16 %v2759, %v2758
      %v2841 = vpack.c.b16 %v2761, %v2760
      %v2842 = vpack.c.b16 %v2763, %v2762
      %v2843 = vpack.c.b16 %v2765, %v2764
      %v2844 = vpack.c.b16 %v2767, %v2766
      %v2845 = vpack.c.b16 %v2769, %v2768
      %v2846 = vpack.c.b16 %v2771, %v2770
      %v2847 = vpack.c.b16 %v2773, %v2772
      %v2848 = vpack.c.b16 %v2775, %v2774
      %v2849 = vpack.c.b16 %v2777, %v2776
      %v2850 = vpack.c.b16 %v2779, %v2778
      %v2851 = vpack.c.b16 %v2781, %v2780
      %v2852 = vpack.c.b16 %v2783, %v2782
      %v2853 = vpack.c.b16 %v2785, %v2784
      %v2854 = vpack.c.b16 %v2787, %v2786
      %v2855 = vpack.c.b16 %v2789, %v2788
      %v2856 = vpack.c.b16 %v2791, %v2790
      %v2857 = vpack.c.b16 %v2793, %v2792
      %v2858 = vpack.c.b16 %v2795, %v2794
      %v2859 = vpack.c.b16 %v2797, %v2796
      %v2860 = vpack.c.b16 %v2799, %v2798
      %v2861 = vpack.c.b16 %v2801, %v2800
      %v2862 = vpack.c.b16 %v2803, %v2802
      %v2863 = vpack.c.b16 %v2805, %v2804
      %v2864 = vpack.c.b16 %v2807, %v2806
      %v2865 = vpack.c.b16 %v2809, %v2808
      %v2866 = vpack.c.b16 %v2811, %v2810
      %v2867 = vpack.c.b16 %v2813, %v2812
      %v2868 = vpack.c.b16 %v2815, %v2814
      %v2869 = vpack.c.b16 %v2817, %v2816
      %v2870 = vpack.c.b16 %v2819, %v2818
      %v2871 = vpack.c.b16 %v2821, %v2820
      %v2923 = vsel %vm2322, %v2517, 0
      %2925 = vmatprep.subr.bf16.mxu0 0
      %2926 = vmatpush1.bf16.msra.mxu0 %v2822
      %2927 = vmatprep.subr.bf16.mxu0 0
      %2928 = vmatpush1.bf16.msra.mxu0 %v2823
      %2929 = vmatprep.subr.bf16.mxu0 0
      %2930 = vmatpush1.bf16.msra.mxu0 %v2824
      %2931 = vmatprep.subr.bf16.mxu0 0
      %2932 = vmatpush1.bf16.msra.mxu0 %v2825
      %2933 = vmatprep.subr.bf16.mxu0 0
      %2934 = vmatpush1.bf16.msra.mxu0 %v2826
      %2935 = vmatprep.subr.bf16.mxu0 0
      %2936 = vmatpush1.bf16.msra.mxu0 %v2827
      %2937 = vmatprep.subr.bf16.mxu0 0
      %2938 = vmatpush1.bf16.msra.mxu0 %v2828
      %2939 = vmatprep.subr.bf16.mxu0 0
      %2940 = vmatpush1.bf16.msra.mxu0 %v2829
      %2941 = vmatprep.subr.bf16.mxu0 0
      %2942 = vmatpush1.bf16.msra.mxu0 %v2830
      %2943 = vmatprep.subr.bf16.mxu0 0
      %2944 = vmatpush1.bf16.msra.mxu0 %v2831
      %2945 = vmatprep.subr.bf16.mxu0 0
      %2946 = vmatpush1.bf16.msra.mxu0 %v2832
      %2947 = vmatprep.subr.bf16.mxu0 0
      %2948 = vmatpush1.bf16.msra.mxu0 %v2833
      %2949 = vmatprep.subr.bf16.mxu0 0
      %2950 = vmatpush1.bf16.msra.mxu0 %v2834
      %2951 = vmatprep.subr.bf16.mxu0 0
      %2952 = vmatpush1.bf16.msra.mxu0 %v2835
      %2953 = vmatprep.subr.bf16.mxu0 0
      %2954 = vmatpush1.bf16.msra.mxu0 %v2836
      %2955 = vmatprep.subr.bf16.mxu0 0
      %2956 = vmatpush1.bf16.msra.mxu0 %v2837
      %2957 = vmatprep.mubr.bf16.mxu0 %v2512
      %2958 = vmatmul.mubr.bf16.gmra.mrb[0].mxu0 %v2511
      %v2959 = vpop.f32.mrb[0].mxu0
      %v2960 = vadd.f32 %v2621, %v2959
      %v2961 = vpop.f32.mrb[0].mxu0
      %v2962 = vpop.f32.mrb[0].mxu0
      %v2963 = vpop.f32.mrb[0].mxu0
      %2964 = vdwg.mxu0
      %2965 = vmatprep.subr.bf16.mxu0 0
      %2966 = vmatpush1.bf16.msra.mxu0 %v2838
      %2967 = vmatprep.subr.bf16.mxu0 0
      %2968 = vmatpush1.bf16.msra.mxu0 %v2839
      %2969 = vmatprep.subr.bf16.mxu0 0
      %2970 = vmatpush1.bf16.msra.mxu0 %v2840
      %2971 = vmatprep.subr.bf16.mxu0 0
      %2972 = vmatpush1.bf16.msra.mxu0 %v2841
      %2973 = vmatprep.subr.bf16.mxu0 0
      %2974 = vmatpush1.bf16.msra.mxu0 %v2842
      %2975 = vmatprep.subr.bf16.mxu0 0
      %2976 = vmatpush1.bf16.msra.mxu0 %v2843
      %2977 = vmatprep.subr.bf16.mxu0 0
      %2978 = vmatpush1.bf16.msra.mxu0 %v2844
      %2979 = vmatprep.subr.bf16.mxu0 0
      %2980 = vmatpush1.bf16.msra.mxu0 %v2845
      %2981 = vmatprep.subr.bf16.mxu0 0
      %2982 = vmatpush1.bf16.msra.mxu0 %v2846
      %2983 = vmatprep.subr.bf16.mxu0 0
      %2984 = vmatpush1.bf16.msra.mxu0 %v2847
      %2985 = vmatprep.subr.bf16.mxu0 0
      %2986 = vmatpush1.bf16.msra.mxu0 %v2848
      %2987 = vmatprep.subr.bf16.mxu0 0
      %2988 = vmatpush1.bf16.msra.mxu0 %v2849
      %2989 = vmatprep.subr.bf16.mxu0 0
      %2990 = vmatpush1.bf16.msra.mxu0 %v2850
      %2991 = vmatprep.subr.bf16.mxu0 0
      %2992 = vmatpush1.bf16.msra.mxu0 %v2851
      %2993 = vmatprep.subr.bf16.mxu0 0
      %2994 = vmatpush1.bf16.msra.mxu0 %v2852
      %2995 = vmatprep.subr.bf16.mxu0 0
      %2996 = vmatpush1.bf16.msra.mxu0 %v2853
      %2997 = vmatprep.mubr.bf16.mxu0 %v2514
      %2998 = vmatmul.mubr.bf16.gmra.mrb[0].mxu0 %v2513
      %v2999 = vpop.f32.mrb[0].mxu0
      %v3000 = vadd.f32 %v2960, %v2999
      %v3001 = vpop.f32.mrb[0].mxu0
      %v3002 = vpop.f32.mrb[0].mxu0
      %v3003 = vpop.f32.mrb[0].mxu0
      %3004 = vdwg.mxu0
      %3005 = vmatprep.subr.bf16.mxu0 0
      %3006 = vmatpush1.bf16.msra.mxu0 %v2854
      %3007 = vmatprep.subr.bf16.mxu0 0
      %3008 = vmatpush1.bf16.msra.mxu0 %v2855
      %3009 = vmatprep.subr.bf16.mxu0 0
      %3010 = vmatpush1.bf16.msra.mxu0 %v2856
      %3011 = vmatprep.subr.bf16.mxu0 0
      %3012 = vmatpush1.bf16.msra.mxu0 %v2857
      %3013 = vmatprep.subr.bf16.mxu0 0
      %3014 = vmatpush1.bf16.msra.mxu0 %v2858
      %3015 = vmatprep.subr.bf16.mxu0 0
      %3016 = vmatpush1.bf16.msra.mxu0 %v2859
      %3017 = vmatprep.subr.bf16.mxu0 0
      %3018 = vmatpush1.bf16.msra.mxu0 %v2860
      %3019 = vmatprep.subr.bf16.mxu0 0
      %3020 = vmatpush1.bf16.msra.mxu0 %v2861
      %3021 = vmatprep.subr.bf16.mxu0 0
      %3022 = vmatpush1.bf16.msra.mxu0 %v2862
      %3023 = vmatprep.subr.bf16.mxu0 0
      %3024 = vmatpush1.bf16.msra.mxu0 %v2863
      %3025 = vmatprep.subr.bf16.mxu0 0
      %3026 = vmatpush1.bf16.msra.mxu0 %v2864
      %3027 = vmatprep.subr.bf16.mxu0 0
      %3028 = vmatpush1.bf16.msra.mxu0 %v2865
      %3029 = vmatprep.subr.bf16.mxu0 0
      %3030 = vmatpush1.bf16.msra.mxu0 %v2866
      %3031 = vmatprep.subr.bf16.mxu0 0
      %3032 = vmatpush1.bf16.msra.mxu0 %v2867
      %3033 = vmatprep.subr.bf16.mxu0 0
      %3034 = vmatpush1.bf16.msra.mxu0 %v2868
      %3035 = vmatprep.subr.bf16.mxu0 0
      %3036 = vmatpush1.bf16.msra.mxu0 %v2869
      %3037 = vmatprep.mubr.bf16.mxu0 %v2516
      %3038 = vmatmul.mubr.bf16.gmra.mrb[0].mxu0 %v2515
      %v3039 = vpop.f32.mrb[0].mxu0
      %v3040 = vadd.f32 %v3000, %v3039
      %v3041 = vpop.f32.mrb[0].mxu0
      %v3042 = vpop.f32.mrb[0].mxu0
      %v3043 = vpop.f32.mrb[0].mxu0
      %3044 = vdwg.mxu0
      %3045 = vmatprep.subr.bf16.mxu0 0
      %3046 = vmatpush1.bf16.msra.mxu0 %v2870
      %3047 = vmatprep.subr.bf16.mxu0 0
      %3048 = vmatpush1.bf16.msra.mxu0 %v2871
      %3049 = vmatprep.subr.bf16.mxu0 0
      %3050 = vmatpush1.bf16.msra.mxu0 0
      %3051 = vmatprep.subr.bf16.mxu0 0
      %3052 = vmatpush1.bf16.msra.mxu0 0
      %3053 = vmatprep.subr.bf16.mxu0 0
      %3054 = vmatpush1.bf16.msra.mxu0 0
      %3055 = vmatprep.subr.bf16.mxu0 0
      %3056 = vmatpush1.bf16.msra.mxu0 0
      %3057 = vmatprep.subr.bf16.mxu0 0
      %3058 = vmatpush1.bf16.msra.mxu0 0
      %3059 = vmatprep.subr.bf16.mxu0 0
      %3060 = vmatpush1.bf16.msra.mxu0 0
      %3061 = vmatprep.subr.bf16.mxu0 0
      %3062 = vmatpush1.bf16.msra.mxu0 0
      %3063 = vmatprep.subr.bf16.mxu0 0
      %3064 = vmatpush1.bf16.msra.mxu0 0
      %3065 = vmatprep.subr.bf16.mxu0 0
      %3066 = vmatpush1.bf16.msra.mxu0 0
      %3067 = vmatprep.subr.bf16.mxu0 0
      %3068 = vmatpush1.bf16.msra.mxu0 0
      %3069 = vmatprep.subr.bf16.mxu0 0
      %3070 = vmatpush1.bf16.msra.mxu0 0
      %3071 = vmatprep.subr.bf16.mxu0 0
      %3072 = vmatpush1.bf16.msra.mxu0 0
      %3073 = vmatprep.subr.bf16.mxu0 0
      %3074 = vmatpush1.bf16.msra.mxu0 0
      %3075 = vmatprep.subr.bf16.mxu0 0
      %3076 = vmatpush1.bf16.msra.mxu0 0
      %3077 = vmatprep.mubr.bf16.mxu0 0
      %3078 = vmatmul.mubr.bf16.gmra.mrb[0].mxu0 %v2923
      %v3079 = vpop.f32.mrb[0].mxu0
      %v3080 = vadd.f32 %v3040, %v3079
      %v3081 = vpop.f32.mrb[0].mxu0
      %v3082 = vpop.f32.mrb[0].mxu0
      %v3083 = vpop.f32.mrb[0].mxu0
      %3084 = vdwg.mxu0
      %v3085 = vmax.f32 %v3080, 0.0
      %v3086 = vpack.c.bf16 %v3085, %v3085
      %v3087 = vld [vmem:[%s424] sm:$0xf]
      %v3088 = vld [vmem:[%s424 + $0x4] sm:$0xf]
      %v3089 = vld [vmem:[%s424 + $0x8] sm:$0xf]
      %v3090 = vld [vmem:[%s424 + $0xc] sm:$0xf]
      %v3091 = vld [vmem:[%s424 + $0x10] sm:$0xf]
      %v3092 = vld [vmem:[%s424 + $0x14] sm:$0xf]
      %v3093 = vld [vmem:[%s424 + $0x18] sm:$0xf]
      %v3094 = vld [vmem:[%s424 + $0x1c] sm:$0xf]
      %v3095 = vlaneseq
      %v3096 = vshrl.u32 %v3095, 7
      %v3097 = vsub.s32 3, %v3096
      %v3098 = vrot.slane %v445, %v3097
      %v3107 = vunpack.c.l.b16 %v3087
      %v3108 = vunpack.c.l.b16 %v3088
      %v3109 = vunpack.c.l.b16 %v3089
      %v3110 = vunpack.c.l.b16 %v3090
      %v3111 = vunpack.c.l.b16 %v3091
      %v3112 = vunpack.c.l.b16 %v3092
      %v3113 = vunpack.c.l.b16 %v3093
      %v3114 = vunpack.c.l.b16 %v3094
      %v3115 = vpack.c.b16 %v3108, %v3107
      %v3116 = vpack.c.b16 %v3110, %v3109
      %v3117 = vpack.c.b16 %v3112, %v3111
      %v3118 = vpack.c.b16 %v3114, %v3113
      %v3124 = vsel %vm2324, %v3086, 0
      %3126 = vmatprep.subr.bf16.mxu0 0
      %3127 = vmatpush1.bf16.msra.mxu0 %v3115
      %3128 = vmatprep.subr.bf16.mxu0 0
      %3129 = vmatpush1.bf16.msra.mxu0 %v3116
      %3130 = vmatprep.subr.bf16.mxu0 0
      %3131 = vmatpush1.bf16.msra.mxu0 %v3117
      %3132 = vmatprep.subr.bf16.mxu0 0
      %3133 = vmatpush1.bf16.msra.mxu0 %v3118
      %3134 = vmatprep.subr.bf16.mxu0 0
      %3135 = vmatpush1.bf16.msra.mxu0 0
      %3136 = vmatprep.subr.bf16.mxu0 0
      %3137 = vmatpush1.bf16.msra.mxu0 0
      %3138 = vmatprep.subr.bf16.mxu0 0
      %3139 = vmatpush1.bf16.msra.mxu0 0
      %3140 = vmatprep.subr.bf16.mxu0 0
      %3141 = vmatpush1.bf16.msra.mxu0 0
      %3142 = vmatprep.subr.bf16.mxu0 0
      %3143 = vmatpush1.bf16.msra.mxu0 0
      %3144 = vmatprep.subr.bf16.mxu0 0
      %3145 = vmatpush1.bf16.msra.mxu0 0
      %3146 = vmatprep.subr.bf16.mxu0 0
      %3147 = vmatpush1.bf16.msra.mxu0 0
      %3148 = vmatprep.subr.bf16.mxu0 0
      %3149 = vmatpush1.bf16.msra.mxu0 0
      %3150 = vmatprep.subr.bf16.mxu0 0
      %3151 = vmatpush1.bf16.msra.mxu0 0
      %3152 = vmatprep.subr.bf16.mxu0 0
      %3153 = vmatpush1.bf16.msra.mxu0 0
      %3154 = vmatprep.subr.bf16.mxu0 0
      %3155 = vmatpush1.bf16.msra.mxu0 0
      %3156 = vmatprep.subr.bf16.mxu0 0
      %3157 = vmatpush1.bf16.msra.mxu0 0
      %3158 = vmatprep.mubr.bf16.mxu0 0
      %3159 = vmatmul.mubr.bf16.gmra.mrb[0].mxu0 %v3124
      %v3160 = vpop.f32.mrb[0].mxu0
      %v3161 = vadd.f32 %v3098, %v3160
      %v3162 = vpop.f32.mrb[0].mxu0
      %v3163 = vpop.f32.mrb[0].mxu0
      %v3164 = vpop.f32.mrb[0].mxu0
      %3165 = vdwg.mxu0
      %v3166 = vmax.f32 %v3161, 0.0
      %v3167 = vpack.c.bf16 %v3166, %v3166
      %v3168 = vld [vmem:[%s429] sm:$0xf]
      %v3169 = vld [vmem:[%s429 + $0x4] sm:$0xf]
      %v3170 = vld [vmem:[%s429 + $0x8] sm:$0xf]
      %v3171 = vld [vmem:[%s429 + $0xc] sm:$0xf]
      %v3172 = vlaneseq
      %v3173 = vshrl.u32 %v3172, 7
      %v3174 = vsub.s32 4, %v3173
      %v3175 = vrot.slane %v445, %v3174
      %v3180 = vunpack.c.l.b16 %v3168
      %v3181 = vunpack.c.l.b16 %v3169
      %v3182 = vunpack.c.l.b16 %v3170
      %v3183 = vunpack.c.l.b16 %v3171
      %v3184 = vpack.c.b16 %v3181, %v3180
      %v3185 = vpack.c.b16 %v3183, %v3182
      %v3189 = vsel %vm2322, %v3167, 0
      %3191 = vmatprep.subr.bf16.mxu0 0
      %3192 = vmatpush1.bf16.msra.mxu0 %v3184
      %3193 = vmatprep.subr.bf16.mxu0 0
      %3194 = vmatpush1.bf16.msra.mxu0 %v3185
      %3195 = vmatprep.subr.bf16.mxu0 0
      %3196 = vmatpush1.bf16.msra.mxu0 0
      %3197 = vmatprep.subr.bf16.mxu0 0
      %3198 = vmatpush1.bf16.msra.mxu0 0
      %3199 = vmatprep.subr.bf16.mxu0 0
      %3200 = vmatpush1.bf16.msra.mxu0 0
      %3201 = vmatprep.subr.bf16.mxu0 0
      %3202 = vmatpush1.bf16.msra.mxu0 0
      %3203 = vmatprep.subr.bf16.mxu0 0
      %3204 = vmatpush1.bf16.msra.mxu0 0
      %3205 = vmatprep.subr.bf16.mxu0 0
      %3206 = vmatpush1.bf16.msra.mxu0 0
      %3207 = vmatprep.subr.bf16.mxu0 0
      %3208 = vmatpush1.bf16.msra.mxu0 0
      %3209 = vmatprep.subr.bf16.mxu0 0
      %3210 = vmatpush1.bf16.msra.mxu0 0
      %3211 = vmatprep.subr.bf16.mxu0 0
      %3212 = vmatpush1.bf16.msra.mxu0 0
      %3213 = vmatprep.subr.bf16.mxu0 0
      %3214 = vmatpush1.bf16.msra.mxu0 0
      %3215 = vmatprep.subr.bf16.mxu0 0
      %3216 = vmatpush1.bf16.msra.mxu0 0
      %3217 = vmatprep.subr.bf16.mxu0 0
      %3218 = vmatpush1.bf16.msra.mxu0 0
      %3219 = vmatprep.subr.bf16.mxu0 0
      %3220 = vmatpush1.bf16.msra.mxu0 0
      %3221 = vmatprep.subr.bf16.mxu0 0
      %3222 = vmatpush1.bf16.msra.mxu0 0
      %3223 = vmatprep.mubr.bf16.mxu0 0
      %3224 = vmatmul.mubr.bf16.gmra.mrb[0].mxu0 %v3189
      %v3225 = vpop.f32.mrb[0].mxu0
      %v3226 = vadd.f32 %v3175, %v3225
      %v3227 = vpop.f32.mrb[0].mxu0
      %v3228 = vpop.f32.mrb[0].mxu0
      %v3229 = vpop.f32.mrb[0].mxu0
      %3230 = vdwg.mxu0
      %v3231 = vmax.f32 %v3226, 0.0
      %v3232 = vpack.c.bf16 %v3231, %v3231
      %v3233 = vld [vmem:[%s434] sm:$0xf]
      %v3234 = vld [vmem:[%s434 + $0x4] sm:$0xf]
      %v3235 = vlaneseq
      %v3236 = vshrl.u32 %v3235, 7
      %v3237 = vsub.s32 5, %v3236
      %v3238 = vrot.slane %v445, %v3237
      %v3241 = vunpack.c.l.b16 %v3233
      %v3242 = vunpack.c.l.b16 %v3234
      %v3243 = vpack.c.b16 %v3242, %v3241
      %vm3245 = vcmask 130048
      %v3247 = vsel %vm3245, %v3232, 0
      %3249 = vmatprep.subr.bf16.mxu0 0
      %3250 = vmatpush1.bf16.msra.mxu0 %v3243
      %3251 = vmatprep.subr.bf16.mxu0 0
      %3252 = vmatpush1.bf16.msra.mxu0 0
      %3253 = vmatprep.subr.bf16.mxu0 0
      %3254 = vmatpush1.bf16.msra.mxu0 0
      %3255 = vmatprep.subr.bf16.mxu0 0
      %3256 = vmatpush1.bf16.msra.mxu0 0
      %3257 = vmatprep.subr.bf16.mxu0 0
      %3258 = vmatpush1.bf16.msra.mxu0 0
      %3259 = vmatprep.subr.bf16.mxu0 0
      %3260 = vmatpush1.bf16.msra.mxu0 0
      %3261 = vmatprep.subr.bf16.mxu0 0
      %3262 = vmatpush1.bf16.msra.mxu0 0
      %3263 = vmatprep.subr.bf16.mxu0 0
      %3264 = vmatpush1.bf16.msra.mxu0 0
      %3265 = vmatprep.subr.bf16.mxu0 0
      %3266 = vmatpush1.bf16.msra.mxu0 0
      %3267 = vmatprep.subr.bf16.mxu0 0
      %3268 = vmatpush1.bf16.msra.mxu0 0
      %3269 = vmatprep.subr.bf16.mxu0 0
      %3270 = vmatpush1.bf16.msra.mxu0 0
      %3271 = vmatprep.subr.bf16.mxu0 0
      %3272 = vmatpush1.bf16.msra.mxu0 0
      %3273 = vmatprep.subr.bf16.mxu0 0
      %3274 = vmatpush1.bf16.msra.mxu0 0
      %3275 = vmatprep.subr.bf16.mxu0 0
      %3276 = vmatpush1.bf16.msra.mxu0 0
      %3277 = vmatprep.subr.bf16.mxu0 0
      %3278 = vmatpush1.bf16.msra.mxu0 0
      %3279 = vmatprep.subr.bf16.mxu0 0
      %3280 = vmatpush1.bf16.msra.mxu0 0
      %3281 = vmatprep.mubr.bf16.mxu0 0
      %3282 = vmatmul.mubr.bf16.gmra.mrb[0].mxu0 %v3247
      %v3283 = vpop.f32.mrb[0].mxu0
      %v3284 = vadd.f32 %v3238, %v3283
      %v3285 = vpop.f32.mrb[0].mxu0
      %v3286 = vpop.f32.mrb[0].mxu0
      %v3287 = vpop.f32.mrb[0].mxu0
      %3288 = vdwg.mxu0
      %3289 = vst [vmem:[%s443] sm:$0x3] %v3284
      %p3290 = scmp.lt.s32.totalorder %s19, 1
      %s3291 = scalar_select %p3290, %s19, 1
      %s3292 = smul.addr %s3291, 2
      %s3293 = scalar_lea.vmem %s8, %s3292
      // Predicated region
      $region53: #{two_lenet5_forward.2} parent=51 // pred_check
        %p3294 = pneg %p245
      $region54: #{two_lenet5_forward.2} parent=51 // pred_check_branch
        %3296 = sbr.rel (%p3294) target = $region56
      $region55: #{two_lenet5_forward.2} parent=51 // pred_region
        _
      $region56: #{two_lenet5_forward.2} parent=51 // pred_fallthru
        _
    $region52: #{two_lenet5_forward.2} parent=5 // pred_fallthru
      _
    %p3297 = scmp.le.s32.totalorder 2, %s14
    // Predicated region
    $region57: #{two_lenet5_forward.2} parent=5 // pred_check
      %p3298 = pneg %p3297
    $region58: #{two_lenet5_forward.2} parent=5 // pred_check_branch
      %3300 = sbr.rel (%p3298) target = $region60
    $region59: #{two_lenet5_forward.2} parent=5 // pred_region
      %s3301 = ssub.s32 %s14, 2
      // Predicated region
      $region61: #{two_lenet5_forward.2} parent=59 // pred_check
        %p3302 = pneg %p251
      $region62: #{two_lenet5_forward.2} parent=59 // pred_check_branch
        %3304 = sbr.rel (%p3302) target = $region64
      $region63: #{two_lenet5_forward.2} parent=59 // pred_region
        %p3305 = scmp.lt.s32.totalorder %s20, 1
        %s3306 = scalar_select %p3305, %s20, 1
        %s3307 = smul.addr %s3306, 2
        %s3308 = scalar_lea.vmem %s8, %s3307
      $region64: #{two_lenet5_forward.2} parent=59 // pred_fallthru
        _
    $region60: #{two_lenet5_forward.2} parent=5 // pred_fallthru
      _
  $region6: #{two_lenet5_forward.2} parent=0 // loop_footer
    %s18 = sadd.s32 1, %s14
  $region7: #{two_lenet5_forward.2} parent=0 // loop_footer_branch
    %13 = sbr.rel target = $region3
  $region8: #{two_lenet5_forward.2} parent=0 // loop_exit
    _

</llo_original>
